<compile_context>
chip_gen: v7x
topology: tpu7x:2x2x1
jax: 0.10.0
libtpu: 0.0.40
codegen_flags: <defaults>
</compile_context>

<pallas_src>
import math
from functools import partial

import jax
import jax.numpy as jnp
from jax import lax
from jax.experimental import pallas as pl
from jax.experimental.pallas import tpu as pltpu

# ----------------- small, self-consistent config -----------------
BLOCK_SIZE = 16
VOCAB_SIZE = 128
N_LAYER = 2
N_HEAD = 4
N_EMBD = 32
LN_EPS = 1e-5
NEG_BIG = -1e30  # finite mask sentinel (NaN-safe, exp underflows to 0)


# ----------------- in-kernel helpers -----------------
def _erf(x):
    # Abramowitz & Stegun 7.1.26 (max abs err ~1.5e-7); exp-only so it lowers on TPU.
    a1, a2, a3, a4, a5 = 0.254829592, -0.284496736, 1.421413741, -1.453152027, 1.061405429
    p = 0.3275911
    ax = jnp.abs(x)
    t = 1.0 / (1.0 + p * ax)
    poly = ((((a5 * t + a4) * t + a3) * t + a2) * t + a1) * t
    y = 1.0 - poly * jnp.exp(-ax * ax)
    return jnp.where(x >= 0, y, -y)


def _gelu_exact(x):
    # torch.nn.GELU() default (erf form); erf is the A&S approximation above.
    return 0.5 * x * (1.0 + _erf(x * (1.0 / math.sqrt(2.0))))


def _layernorm(x, w, b):
    mu = jnp.mean(x, axis=-1, keepdims=True)
    xc = x - mu
    var = jnp.mean(xc * xc, axis=-1, keepdims=True)
    return xc * lax.rsqrt(var + LN_EPS) * w + b


# ----------------- fused GPT forward kernel (whole batch in one step) -----------------
def gpt_kernel(x_ref, bias_ref,
               ln1_w_ref, ln1_b_ref,
               w_attn_ref, b_attn_ref,
               w_proj_ref, b_proj_ref,
               ln2_w_ref, ln2_b_ref,
               w_fc_ref, b_fc_ref,
               w_cproj_ref, b_cproj_ref,
               lnf_w_ref, lnf_b_ref, wte_t_ref,
               logits_ref, *, n_layer, n_head):
    x = x_ref[...]                                # (B*T, C) f32 residual stream
    BT, C = x.shape
    H = n_head
    HD = C // H
    scale = 1.0 / math.sqrt(HD)

    # Precomputed additive attention bias (0 where attend, -1e30 where masked),
    # shared across layers: rows/cols are head-major flattened (h*BT + b*T + t).
    attn_bias = bias_ref[...]                     # (H*BT, H*BT)

    for l in range(n_layer):                      # static unroll; weights VMEM-resident
        # ---- causal self-attention ----
        h = _layernorm(x, ln1_w_ref[l], ln1_b_ref[l])
        # q/k/v via static leading-dim weight slices; fold 1/sqrt(HD) into q
        # (cheaper than scaling the (H*BT, H*BT) score matrix).
        q = (jnp.dot(h, w_attn_ref[l, 0], preferred_element_type=jnp.float32)
             + b_attn_ref[l, 0]) * scale
        k = jnp.dot(h, w_attn_ref[l, 1], preferred_element_type=jnp.float32) + b_attn_ref[l, 1]
        v = jnp.dot(h, w_attn_ref[l, 2], preferred_element_type=jnp.float32) + b_attn_ref[l, 2]

        # Head-major flatten: row hh*BT + r holds head hh of (batch,token) row r.
        qf = jnp.concatenate([q[:, i * HD:(i + 1) * HD] for i in range(H)], axis=0)
        kf = jnp.concatenate([k[:, i * HD:(i + 1) * HD] for i in range(H)], axis=0)
        vf = jnp.concatenate([v[:, i * HD:(i + 1) * HD] for i in range(H)], axis=0)

        # Single score matmul + single softmax + single att@v for all heads & batch.
        s = lax.dot_general(qf, kf, (((1,), (1,)), ((), ())),
                            preferred_element_type=jnp.float32) + attn_bias
        s = s - jnp.max(s, axis=-1, keepdims=True)
        e = jnp.exp(s)
        p = e / jnp.sum(e, axis=-1, keepdims=True)
        yf = jnp.dot(p, vf, preferred_element_type=jnp.float32)      # (H*BT, HD)

        # Un-flatten back to (BT, C): head hh occupies columns hh*HD:(hh+1)*HD.
        y = jnp.concatenate([yf[i * BT:(i + 1) * BT, :] for i in range(H)], axis=1)
        y = jnp.dot(y, w_proj_ref[l], preferred_element_type=jnp.float32) + b_proj_ref[l]
        x = x + y

        # ---- MLP ----
        h2 = _layernorm(x, ln2_w_ref[l], ln2_b_ref[l])
        m = jnp.dot(h2, w_fc_ref[l], preferred_element_type=jnp.float32) + b_fc_ref[l]
        m = _gelu_exact(m)
        m = jnp.dot(m, w_cproj_ref[l], preferred_element_type=jnp.float32) + b_cproj_ref[l]
        x = x + m

    # ---- final LN + tied lm_head (wte pre-transposed to (C, V) in wrapper) ----
    hf = _layernorm(x, lnf_w_ref[...], lnf_b_ref[...])
    logits_ref[...] = jnp.dot(hf, wte_t_ref[...], preferred_element_type=jnp.float32)


def gpt_forward(params, idx):
    B, T = idx.shape
    C, V, H = N_EMBD, VOCAB_SIZE, N_HEAD
    # torch code asserts T < block_size; T == block_size is also valid, allow it.
    assert T <= BLOCK_SIZE
    BT = B * T

    # Embedding gathers stay in JAX glue; fold batch into the row dimension.
    tok_emb = jnp.take(params['wte'], idx, axis=0)              # (B, T, C)
    pos_emb = params['wpe'][:T][None]                           # (1, T, C)
    x = (tok_emb + pos_emb).reshape(BT, C)                      # (B*T, C)

    # Precompute (head,batch)-block-diagonal + causal additive bias for the
    # flattened (H*BT, H*BT) attention layout used inside the kernel.
    # Each (head, batch) pair owns a contiguous run of T rows -> same block
    # iff row//T == col//T; causal iff row%T >= col%T.
    R = H * BT
    row = jnp.arange(R)[:, None]
    col = jnp.arange(R)[None, :]
    allowed = (row // T == col // T) & (row % T >= col % T)
    attn_bias = jnp.where(allowed, 0.0, NEG_BIG).astype(jnp.float32)

    # Tied lm_head weight, pre-transposed once -> natural (BT,C)x(C,V) MXU dot.
    # TODO(synk): when scaling to realistic vocab sizes (V~50K), tile V with an
    # extra grid axis instead of loading the full table into VMEM.
    wte_t = params['wte'].T                                     # (C, V)

    args = (x, attn_bias,
            params['ln1_w'], params['ln1_b'],
            params['w_attn'], params['b_attn'],
            params['w_proj'], params['b_proj'],
            params['ln2_w'], params['ln2_b'],
            params['w_fc'], params['b_fc'],
            params['w_cproj'], params['b_cproj'],
            params['lnf_w'], params['lnf_b'], wte_t)

    def full_spec(a):
        nd = a.ndim
        return pl.BlockSpec(a.shape, lambda i, _nd=nd: (0,) * _nd)

    logits = pl.pallas_call(
        partial(gpt_kernel, n_layer=N_LAYER, n_head=N_HEAD),
        out_shape=jax.ShapeDtypeStruct((BT, V), jnp.float32),
        grid=(1,),
        in_specs=[full_spec(a) for a in args],
        out_specs=pl.BlockSpec((BT, V), lambda i: (0, 0)),
        compiler_params=pltpu.CompilerParams(dimension_semantics=("arbitrary",)),
    )(*args)
    return logits.reshape(B, T, V)


# ----------------- parameters (deterministic init, matches torch shapes/init) -----------------
def init_params(key):
    ks = jax.random.split(key, 6)
    L, C, V = N_LAYER, N_EMBD, VOCAB_SIZE

    def normal(k, shape):
        return 0.02 * jax.random.normal(k, shape, jnp.float32)

    return {
        'wte': normal(ks[0], (V, C)),                 # tied with lm_head
        'wpe': normal(ks[1], (BLOCK_SIZE, C)),
        'ln1_w': jnp.ones((L, 1, C), jnp.float32),
        'ln1_b': jnp.zeros((L, 1, C), jnp.float32),
        'w_attn': normal(ks[2], (L, 3, C, C)),        # [layer, (q,k,v), in, out]
        'b_attn': jnp.zeros((L, 3, 1, C), jnp.float32),
        'w_proj': normal(ks[3], (L, C, C)),
        'b_proj': jnp.zeros((L, 1, C), jnp.float32),
        'ln2_w': jnp.ones((L, 1, C), jnp.float32),
        'ln2_b': jnp.zeros((L, 1, C), jnp.float32),
        'w_fc': normal(ks[4], (L, C, 4 * C)),
        'b_fc': jnp.zeros((L, 1, 4 * C), jnp.float32),
        'w_cproj': normal(ks[5], (L, 4 * C, C)),
        'b_cproj': jnp.zeros((L, 1, C), jnp.float32),
        'lnf_w': jnp.ones((1, C), jnp.float32),
        'lnf_b': jnp.zeros((1, C), jnp.float32),
    }


# ----------------- pure-JAX reference (for sanity check) -----------------
def _ref_ln(x, w, b):
    mu = jnp.mean(x, -1, keepdims=True)
    var = jnp.mean((x - mu) ** 2, -1, keepdims=True)
    return (x - mu) / jnp.sqrt(var + LN_EPS) * w + b


def gpt_forward_ref(params, idx):
    B, T = idx.shape
    HD = N_EMBD // N_HEAD
    x = jnp.take(params['wte'], idx, axis=0) + params['wpe'][:T][None]
    mask = jnp.tril(jnp.ones((T, T), bool))
    for l in range(N_LAYER):
        h = _ref_ln(x, params['ln1_w'][l], params['ln1_b'][l])
        q = h @ params['w_attn'][l, 0] + params['b_attn'][l, 0]
        k = h @ params['w_attn'][l, 1] + params['b_attn'][l, 1]
        v = h @ params['w_attn'][l, 2] + params['b_attn'][l, 2]
        q = q.reshape(B, T, N_HEAD, HD).transpose(0, 2, 1, 3)
        k = k.reshape(B, T, N_HEAD, HD).transpose(0, 2, 1, 3)
        v = v.reshape(B, T, N_HEAD, HD).transpose(0, 2, 1, 3)
        att = (q @ k.transpose(0, 1, 3, 2)) / math.sqrt(HD)
        att = jnp.where(mask, att, -jnp.inf)
        att = jax.nn.softmax(att, axis=-1)
        y = (att @ v).transpose(0, 2, 1, 3).reshape(B, T, N_EMBD)
        x = x + (y @ params['w_proj'][l] + params['b_proj'][l])
        h2 = _ref_ln(x, params['ln2_w'][l], params['ln2_b'][l])
        m = jax.nn.gelu(h2 @ params['w_fc'][l] + params['b_fc'][l], approximate=False)
        x = x + (m @ params['w_cproj'][l] + params['b_cproj'][l])
    x = _ref_ln(x, params['lnf_w'], params['lnf_b'])
    return x @ params['wte'].T


if __name__ == "__main__":
    key = jax.random.PRNGKey(0)
    pkey, ikey = jax.random.split(key)
    params = init_params(pkey)

    B, T = 2, 8
    idx = jax.random.randint(ikey, (B, T), 0, VOCAB_SIZE, dtype=jnp.int32)

    logits = jax.block_until_ready(jax.jit(gpt_forward)(params, idx))
    assert logits.shape == (B, T, VOCAB_SIZE)

    ref = gpt_forward_ref(params, idx)
    assert jnp.allclose(logits, ref, rtol=1e-2, atol=1e-3), \
        f"max abs diff {float(jnp.max(jnp.abs(logits - ref)))}"

    print("KERNEL_OK")
</pallas_src>

<mosaic_0001>
module attributes {stable_mosaic.version = 11 : i64} {
  func.func @gpt_kernel(%arg0: i32, %arg1: memref<16x32xf32, #tpu.memory_space<vmem>>, %arg2: memref<64x64xf32, #tpu.memory_space<vmem>>, %arg3: memref<2x1x32xf32, #tpu.memory_space<vmem>>, %arg4: memref<2x1x32xf32, #tpu.memory_space<vmem>>, %arg5: memref<2x3x32x32xf32, #tpu.memory_space<vmem>>, %arg6: memref<2x3x1x32xf32, #tpu.memory_space<vmem>>, %arg7: memref<2x32x32xf32, #tpu.memory_space<vmem>>, %arg8: memref<2x1x32xf32, #tpu.memory_space<vmem>>, %arg9: memref<2x1x32xf32, #tpu.memory_space<vmem>>, %arg10: memref<2x1x32xf32, #tpu.memory_space<vmem>>, %arg11: memref<2x32x128xf32, #tpu.memory_space<vmem>>, %arg12: memref<2x1x128xf32, #tpu.memory_space<vmem>>, %arg13: memref<2x128x32xf32, #tpu.memory_space<vmem>>, %arg14: memref<2x1x32xf32, #tpu.memory_space<vmem>>, %arg15: memref<1x32xf32, #tpu.memory_space<vmem>>, %arg16: memref<1x32xf32, #tpu.memory_space<vmem>>, %arg17: memref<32x128xf32, #tpu.memory_space<vmem>>, %arg18: memref<16x128xf32, #tpu.memory_space<vmem>>) attributes {dimension_semantics = [#tpu.dimension_semantics<arbitrary>], iteration_bounds = array<i64: 1>, scalar_prefetch = 0 : i64, scratch_operands = 0 : i64, tpu.core_type = #tpu.core_type<tc>, window_params = [{pipeline_mode = #tpu.pipeline_mode<synchronous>, transform_indices = @transform_0, window_bounds = array<i64: 16, 32>}, {pipeline_mode = #tpu.pipeline_mode<synchronous>, transform_indices = @transform_1, window_bounds = array<i64: 64, 64>}, {pipeline_mode = #tpu.pipeline_mode<synchronous>, transform_indices = @transform_2, window_bounds = array<i64: 2, 1, 32>}, {pipeline_mode = #tpu.pipeline_mode<synchronous>, transform_indices = @transform_3, window_bounds = array<i64: 2, 1, 32>}, {pipeline_mode = #tpu.pipeline_mode<synchronous>, transform_indices = @transform_4, window_bounds = array<i64: 2, 3, 32, 32>}, {pipeline_mode = #tpu.pipeline_mode<synchronous>, transform_indices = @transform_5, window_bounds = array<i64: 2, 3, 1, 32>}, {pipeline_mode = #tpu.pipeline_mode<synchronous>, transform_indices = @transform_6, window_bounds = array<i64: 2, 32, 32>}, {pipeline_mode = #tpu.pipeline_mode<synchronous>, transform_indices = @transform_7, window_bounds = array<i64: 2, 1, 32>}, {pipeline_mode = #tpu.pipeline_mode<synchronous>, transform_indices = @transform_8, window_bounds = array<i64: 2, 1, 32>}, {pipeline_mode = #tpu.pipeline_mode<synchronous>, transform_indices = @transform_9, window_bounds = array<i64: 2, 1, 32>}, {pipeline_mode = #tpu.pipeline_mode<synchronous>, transform_indices = @transform_10, window_bounds = array<i64: 2, 32, 128>}, {pipeline_mode = #tpu.pipeline_mode<synchronous>, transform_indices = @transform_11, window_bounds = array<i64: 2, 1, 128>}, {pipeline_mode = #tpu.pipeline_mode<synchronous>, transform_indices = @transform_12, window_bounds = array<i64: 2, 128, 32>}, {pipeline_mode = #tpu.pipeline_mode<synchronous>, transform_indices = @transform_13, window_bounds = array<i64: 2, 1, 32>}, {pipeline_mode = #tpu.pipeline_mode<synchronous>, transform_indices = @transform_14, window_bounds = array<i64: 1, 32>}, {pipeline_mode = #tpu.pipeline_mode<synchronous>, transform_indices = @transform_15, window_bounds = array<i64: 1, 32>}, {pipeline_mode = #tpu.pipeline_mode<synchronous>, transform_indices = @transform_16, window_bounds = array<i64: 32, 128>}, {pipeline_mode = #tpu.pipeline_mode<synchronous>, transform_indices = @transform_17, window_bounds = array<i64: 16, 128>}]} {
    %c0 = arith.constant 0 : index
    %c0_0 = arith.constant 0 : index
    %0 = vector.load %arg1[%c0, %c0_0] : memref<16x32xf32, #tpu.memory_space<vmem>>, vector<16x32xf32>
    %c0_1 = arith.constant 0 : index
    %c0_2 = arith.constant 0 : index
    %1 = vector.load %arg2[%c0_1, %c0_2] : memref<64x64xf32, #tpu.memory_space<vmem>>, vector<64x64xf32>
    %c0_3 = arith.constant 0 : index
    %c0_4 = arith.constant 0 : index
    %c0_5 = arith.constant 0 : index
    %2 = vector.load %arg3[%c0_3, %c0_4, %c0_5] : memref<2x1x32xf32, #tpu.memory_space<vmem>>, vector<1x1x32xf32>
    %3 = vector.shape_cast %2 : vector<1x1x32xf32> to vector<1x32xf32>
    %c0_6 = arith.constant 0 : index
    %c0_7 = arith.constant 0 : index
    %c0_8 = arith.constant 0 : index
    %4 = vector.load %arg4[%c0_6, %c0_7, %c0_8] : memref<2x1x32xf32, #tpu.memory_space<vmem>>, vector<1x1x32xf32>
    %5 = vector.shape_cast %4 : vector<1x1x32xf32> to vector<1x32xf32>
    %cst = arith.constant dense<0.000000e+00> : vector<16xf32>
    %6 = vector.multi_reduction <add>, %0, %cst [1] : vector<16x32xf32> to vector<16xf32>
    %7 = vector.shape_cast %6 : vector<16xf32> to vector<16x1xf32>
    %cst_9 = arith.constant 3.200000e+01 : f32
    %8 = vector.broadcast %cst_9 : f32 to vector<16x1xf32>
    %9 = arith.divf %7, %8 : vector<16x1xf32>
    %10 = vector.broadcast %9 : vector<16x1xf32> to vector<16x32xf32>
    %11 = arith.subf %0, %10 : vector<16x32xf32>
    %12 = arith.mulf %11, %11 : vector<16x32xf32>
    %cst_10 = arith.constant dense<0.000000e+00> : vector<16xf32>
    %13 = vector.multi_reduction <add>, %12, %cst_10 [1] : vector<16x32xf32> to vector<16xf32>
    %14 = vector.shape_cast %13 : vector<16xf32> to vector<16x1xf32>
    %cst_11 = arith.constant 3.200000e+01 : f32
    %15 = vector.broadcast %cst_11 : f32 to vector<16x1xf32>
    %16 = arith.divf %14, %15 : vector<16x1xf32>
    %cst_12 = arith.constant 9.99999974E-6 : f32
    %17 = vector.broadcast %cst_12 : f32 to vector<16x1xf32>
    %18 = arith.addf %16, %17 : vector<16x1xf32>
    %19 = math.rsqrt %18 : vector<16x1xf32>
    %20 = vector.broadcast %19 : vector<16x1xf32> to vector<16x32xf32>
    %21 = arith.mulf %11, %20 : vector<16x32xf32>
    %22 = vector.broadcast %3 : vector<1x32xf32> to vector<16x32xf32>
    %23 = arith.mulf %21, %22 : vector<16x32xf32>
    %24 = vector.broadcast %5 : vector<1x32xf32> to vector<16x32xf32>
    %25 = arith.addf %23, %24 : vector<16x32xf32>
    %c0_13 = arith.constant 0 : index
    %c0_14 = arith.constant 0 : index
    %c0_15 = arith.constant 0 : index
    %c0_16 = arith.constant 0 : index
    %26 = vector.load %arg5[%c0_13, %c0_14, %c0_15, %c0_16] : memref<2x3x32x32xf32, #tpu.memory_space<vmem>>, vector<1x1x32x32xf32>
    %27 = vector.shape_cast %26 : vector<1x1x32x32xf32> to vector<32x32xf32>
    %cst_17 = arith.constant dense<0.000000e+00> : vector<16x32xf32>
    %28 = tpu.matmul %25, %27, %cst_17 {dimension_numbers = #tpu.dot_dimension_numbers<[1], [0], [0], [1], [0, 0, 1, 1], [], []>} : vector<16x32xf32>, vector<32x32xf32>, vector<16x32xf32> -> vector<16x32xf32>
    %c0_18 = arith.constant 0 : index
    %c0_19 = arith.constant 0 : index
    %c0_20 = arith.constant 0 : index
    %c0_21 = arith.constant 0 : index
    %29 = vector.load %arg6[%c0_18, %c0_19, %c0_20, %c0_21] : memref<2x3x1x32xf32, #tpu.memory_space<vmem>>, vector<1x1x1x32xf32>
    %30 = vector.shape_cast %29 : vector<1x1x1x32xf32> to vector<1x32xf32>
    %31 = vector.broadcast %30 : vector<1x32xf32> to vector<16x32xf32>
    %32 = arith.addf %28, %31 : vector<16x32xf32>
    %cst_22 = arith.constant 0.353553385 : f32
    %33 = vector.broadcast %cst_22 : f32 to vector<16x32xf32>
    %34 = arith.mulf %32, %33 : vector<16x32xf32>
    %c0_23 = arith.constant 0 : index
    %c1 = arith.constant 1 : index
    %c0_24 = arith.constant 0 : index
    %c0_25 = arith.constant 0 : index
    %35 = vector.load %arg5[%c0_23, %c1, %c0_24, %c0_25] : memref<2x3x32x32xf32, #tpu.memory_space<vmem>>, vector<1x1x32x32xf32>
    %36 = vector.shape_cast %35 : vector<1x1x32x32xf32> to vector<32x32xf32>
    %cst_26 = arith.constant dense<0.000000e+00> : vector<16x32xf32>
    %37 = tpu.matmul %25, %36, %cst_26 {dimension_numbers = #tpu.dot_dimension_numbers<[1], [0], [0], [1], [0, 0, 1, 1], [], []>} : vector<16x32xf32>, vector<32x32xf32>, vector<16x32xf32> -> vector<16x32xf32>
    %c0_27 = arith.constant 0 : index
    %c1_28 = arith.constant 1 : index
    %c0_29 = arith.constant 0 : index
    %c0_30 = arith.constant 0 : index
    %38 = vector.load %arg6[%c0_27, %c1_28, %c0_29, %c0_30] : memref<2x3x1x32xf32, #tpu.memory_space<vmem>>, vector<1x1x1x32xf32>
    %39 = vector.shape_cast %38 : vector<1x1x1x32xf32> to vector<1x32xf32>
    %40 = vector.broadcast %39 : vector<1x32xf32> to vector<16x32xf32>
    %41 = arith.addf %37, %40 : vector<16x32xf32>
    %c0_31 = arith.constant 0 : index
    %c2 = arith.constant 2 : index
    %c0_32 = arith.constant 0 : index
    %c0_33 = arith.constant 0 : index
    %42 = vector.load %arg5[%c0_31, %c2, %c0_32, %c0_33] : memref<2x3x32x32xf32, #tpu.memory_space<vmem>>, vector<1x1x32x32xf32>
    %43 = vector.shape_cast %42 : vector<1x1x32x32xf32> to vector<32x32xf32>
    %cst_34 = arith.constant dense<0.000000e+00> : vector<16x32xf32>
    %44 = tpu.matmul %25, %43, %cst_34 {dimension_numbers = #tpu.dot_dimension_numbers<[1], [0], [0], [1], [0, 0, 1, 1], [], []>} : vector<16x32xf32>, vector<32x32xf32>, vector<16x32xf32> -> vector<16x32xf32>
    %c0_35 = arith.constant 0 : index
    %c2_36 = arith.constant 2 : index
    %c0_37 = arith.constant 0 : index
    %c0_38 = arith.constant 0 : index
    %45 = vector.load %arg6[%c0_35, %c2_36, %c0_37, %c0_38] : memref<2x3x1x32xf32, #tpu.memory_space<vmem>>, vector<1x1x1x32xf32>
    %46 = vector.shape_cast %45 : vector<1x1x1x32xf32> to vector<1x32xf32>
    %47 = vector.broadcast %46 : vector<1x32xf32> to vector<16x32xf32>
    %48 = arith.addf %44, %47 : vector<16x32xf32>
    %49 = vector.extract_strided_slice %34 {offsets = [0, 0], sizes = [16, 8], strides = [1, 1]} : vector<16x32xf32> to vector<16x8xf32>
    %50 = vector.extract_strided_slice %34 {offsets = [0, 8], sizes = [16, 8], strides = [1, 1]} : vector<16x32xf32> to vector<16x8xf32>
    %51 = vector.extract_strided_slice %34 {offsets = [0, 16], sizes = [16, 8], strides = [1, 1]} : vector<16x32xf32> to vector<16x8xf32>
    %52 = vector.extract_strided_slice %34 {offsets = [0, 24], sizes = [16, 8], strides = [1, 1]} : vector<16x32xf32> to vector<16x8xf32>
    %53 = tpu.concatenate %49, %50, %51, %52 in 0 : vector<16x8xf32>, vector<16x8xf32>, vector<16x8xf32>, vector<16x8xf32> -> vector<64x8xf32>
    %54 = vector.extract_strided_slice %41 {offsets = [0, 0], sizes = [16, 8], strides = [1, 1]} : vector<16x32xf32> to vector<16x8xf32>
    %55 = vector.extract_strided_slice %41 {offsets = [0, 8], sizes = [16, 8], strides = [1, 1]} : vector<16x32xf32> to vector<16x8xf32>
    %56 = vector.extract_strided_slice %41 {offsets = [0, 16], sizes = [16, 8], strides = [1, 1]} : vector<16x32xf32> to vector<16x8xf32>
    %57 = vector.extract_strided_slice %41 {offsets = [0, 24], sizes = [16, 8], strides = [1, 1]} : vector<16x32xf32> to vector<16x8xf32>
    %58 = tpu.concatenate %54, %55, %56, %57 in 0 : vector<16x8xf32>, vector<16x8xf32>, vector<16x8xf32>, vector<16x8xf32> -> vector<64x8xf32>
    %59 = vector.extract_strided_slice %48 {offsets = [0, 0], sizes = [16, 8], strides = [1, 1]} : vector<16x32xf32> to vector<16x8xf32>
    %60 = vector.extract_strided_slice %48 {offsets = [0, 8], sizes = [16, 8], strides = [1, 1]} : vector<16x32xf32> to vector<16x8xf32>
    %61 = vector.extract_strided_slice %48 {offsets = [0, 16], sizes = [16, 8], strides = [1, 1]} : vector<16x32xf32> to vector<16x8xf32>
    %62 = vector.extract_strided_slice %48 {offsets = [0, 24], sizes = [16, 8], strides = [1, 1]} : vector<16x32xf32> to vector<16x8xf32>
    %63 = tpu.concatenate %59, %60, %61, %62 in 0 : vector<16x8xf32>, vector<16x8xf32>, vector<16x8xf32>, vector<16x8xf32> -> vector<64x8xf32>
    %cst_39 = arith.constant dense<0.000000e+00> : vector<64x64xf32>
    %64 = tpu.matmul %53, %58, %cst_39 {dimension_numbers = #tpu.dot_dimension_numbers<[1], [1], [0], [0], [0, 0, 1, 0], [], []>} : vector<64x8xf32>, vector<64x8xf32>, vector<64x64xf32> -> vector<64x64xf32>
    %65 = arith.addf %64, %1 : vector<64x64xf32>
    %cst_40 = arith.constant dense<0xFF800000> : vector<64xf32>
    %66 = vector.multi_reduction <maximumf>, %65, %cst_40 [1] : vector<64x64xf32> to vector<64xf32>
    %67 = vector.shape_cast %66 : vector<64xf32> to vector<64x1xf32>
    %68 = vector.broadcast %67 : vector<64x1xf32> to vector<64x64xf32>
    %69 = arith.subf %65, %68 : vector<64x64xf32>
    %70 = math.exp %69 : vector<64x64xf32>
    %cst_41 = arith.constant dense<0.000000e+00> : vector<64xf32>
    %71 = vector.multi_reduction <add>, %70, %cst_41 [1] : vector<64x64xf32> to vector<64xf32>
    %72 = vector.shape_cast %71 : vector<64xf32> to vector<64x1xf32>
    %73 = vector.broadcast %72 : vector<64x1xf32> to vector<64x64xf32>
    %74 = arith.divf %70, %73 : vector<64x64xf32>
    %cst_42 = arith.constant dense<0.000000e+00> : vector<64x8xf32>
    %75 = tpu.matmul %74, %63, %cst_42 {dimension_numbers = #tpu.dot_dimension_numbers<[1], [0], [0], [1], [0, 0, 1, 1], [], []>} : vector<64x64xf32>, vector<64x8xf32>, vector<64x8xf32> -> vector<64x8xf32>
    %76 = vector.extract_strided_slice %75 {offsets = [0, 0], sizes = [16, 8], strides = [1, 1]} : vector<64x8xf32> to vector<16x8xf32>
    %77 = vector.extract_strided_slice %75 {offsets = [16, 0], sizes = [16, 8], strides = [1, 1]} : vector<64x8xf32> to vector<16x8xf32>
    %78 = vector.extract_strided_slice %75 {offsets = [32, 0], sizes = [16, 8], strides = [1, 1]} : vector<64x8xf32> to vector<16x8xf32>
    %79 = vector.extract_strided_slice %75 {offsets = [48, 0], sizes = [16, 8], strides = [1, 1]} : vector<64x8xf32> to vector<16x8xf32>
    %80 = tpu.concatenate %76, %77, %78, %79 in 1 : vector<16x8xf32>, vector<16x8xf32>, vector<16x8xf32>, vector<16x8xf32> -> vector<16x32xf32>
    %c0_43 = arith.constant 0 : index
    %c0_44 = arith.constant 0 : index
    %c0_45 = arith.constant 0 : index
    %81 = vector.load %arg7[%c0_43, %c0_44, %c0_45] : memref<2x32x32xf32, #tpu.memory_space<vmem>>, vector<1x32x32xf32>
    %82 = vector.shape_cast %81 : vector<1x32x32xf32> to vector<32x32xf32>
    %cst_46 = arith.constant dense<0.000000e+00> : vector<16x32xf32>
    %83 = tpu.matmul %80, %82, %cst_46 {dimension_numbers = #tpu.dot_dimension_numbers<[1], [0], [0], [1], [0, 0, 1, 1], [], []>} : vector<16x32xf32>, vector<32x32xf32>, vector<16x32xf32> -> vector<16x32xf32>
    %c0_47 = arith.constant 0 : index
    %c0_48 = arith.constant 0 : index
    %c0_49 = arith.constant 0 : index
    %84 = vector.load %arg8[%c0_47, %c0_48, %c0_49] : memref<2x1x32xf32, #tpu.memory_space<vmem>>, vector<1x1x32xf32>
    %85 = vector.shape_cast %84 : vector<1x1x32xf32> to vector<1x32xf32>
    %86 = vector.broadcast %85 : vector<1x32xf32> to vector<16x32xf32>
    %87 = arith.addf %83, %86 : vector<16x32xf32>
    %88 = arith.addf %0, %87 : vector<16x32xf32>
    %c0_50 = arith.constant 0 : index
    %c0_51 = arith.constant 0 : index
    %c0_52 = arith.constant 0 : index
    %89 = vector.load %arg9[%c0_50, %c0_51, %c0_52] : memref<2x1x32xf32, #tpu.memory_space<vmem>>, vector<1x1x32xf32>
    %90 = vector.shape_cast %89 : vector<1x1x32xf32> to vector<1x32xf32>
    %c0_53 = arith.constant 0 : index
    %c0_54 = arith.constant 0 : index
    %c0_55 = arith.constant 0 : index
    %91 = vector.load %arg10[%c0_53, %c0_54, %c0_55] : memref<2x1x32xf32, #tpu.memory_space<vmem>>, vector<1x1x32xf32>
    %92 = vector.shape_cast %91 : vector<1x1x32xf32> to vector<1x32xf32>
    %cst_56 = arith.constant dense<0.000000e+00> : vector<16xf32>
    %93 = vector.multi_reduction <add>, %88, %cst_56 [1] : vector<16x32xf32> to vector<16xf32>
    %94 = vector.shape_cast %93 : vector<16xf32> to vector<16x1xf32>
    %cst_57 = arith.constant 3.200000e+01 : f32
    %95 = vector.broadcast %cst_57 : f32 to vector<16x1xf32>
    %96 = arith.divf %94, %95 : vector<16x1xf32>
    %97 = vector.broadcast %96 : vector<16x1xf32> to vector<16x32xf32>
    %98 = arith.subf %88, %97 : vector<16x32xf32>
    %99 = arith.mulf %98, %98 : vector<16x32xf32>
    %cst_58 = arith.constant dense<0.000000e+00> : vector<16xf32>
    %100 = vector.multi_reduction <add>, %99, %cst_58 [1] : vector<16x32xf32> to vector<16xf32>
    %101 = vector.shape_cast %100 : vector<16xf32> to vector<16x1xf32>
    %cst_59 = arith.constant 3.200000e+01 : f32
    %102 = vector.broadcast %cst_59 : f32 to vector<16x1xf32>
    %103 = arith.divf %101, %102 : vector<16x1xf32>
    %cst_60 = arith.constant 9.99999974E-6 : f32
    %104 = vector.broadcast %cst_60 : f32 to vector<16x1xf32>
    %105 = arith.addf %103, %104 : vector<16x1xf32>
    %106 = math.rsqrt %105 : vector<16x1xf32>
    %107 = vector.broadcast %106 : vector<16x1xf32> to vector<16x32xf32>
    %108 = arith.mulf %98, %107 : vector<16x32xf32>
    %109 = vector.broadcast %90 : vector<1x32xf32> to vector<16x32xf32>
    %110 = arith.mulf %108, %109 : vector<16x32xf32>
    %111 = vector.broadcast %92 : vector<1x32xf32> to vector<16x32xf32>
    %112 = arith.addf %110, %111 : vector<16x32xf32>
    %c0_61 = arith.constant 0 : index
    %c0_62 = arith.constant 0 : index
    %c0_63 = arith.constant 0 : index
    %113 = vector.load %arg11[%c0_61, %c0_62, %c0_63] : memref<2x32x128xf32, #tpu.memory_space<vmem>>, vector<1x32x128xf32>
    %114 = vector.shape_cast %113 : vector<1x32x128xf32> to vector<32x128xf32>
    %cst_64 = arith.constant dense<0.000000e+00> : vector<16x128xf32>
    %115 = tpu.matmul %112, %114, %cst_64 {dimension_numbers = #tpu.dot_dimension_numbers<[1], [0], [0], [1], [0, 0, 1, 1], [], []>} : vector<16x32xf32>, vector<32x128xf32>, vector<16x128xf32> -> vector<16x128xf32>
    %c0_65 = arith.constant 0 : index
    %c0_66 = arith.constant 0 : index
    %c0_67 = arith.constant 0 : index
    %116 = vector.load %arg12[%c0_65, %c0_66, %c0_67] : memref<2x1x128xf32, #tpu.memory_space<vmem>>, vector<1x1x128xf32>
    %117 = vector.shape_cast %116 : vector<1x1x128xf32> to vector<1x128xf32>
    %118 = vector.broadcast %117 : vector<1x128xf32> to vector<16x128xf32>
    %119 = arith.addf %115, %118 : vector<16x128xf32>
    %cst_68 = arith.constant 5.000000e-01 : f32
    %120 = vector.broadcast %cst_68 : f32 to vector<16x128xf32>
    %121 = arith.mulf %120, %119 : vector<16x128xf32>
    %cst_69 = arith.constant 0.707106769 : f32
    %122 = vector.broadcast %cst_69 : f32 to vector<16x128xf32>
    %123 = arith.mulf %119, %122 : vector<16x128xf32>
    %124 = math.absf %123 : vector<16x128xf32>
    %cst_70 = arith.constant 0.327591091 : f32
    %125 = vector.broadcast %cst_70 : f32 to vector<16x128xf32>
    %126 = arith.mulf %125, %124 : vector<16x128xf32>
    %cst_71 = arith.constant 1.000000e+00 : f32
    %127 = vector.broadcast %cst_71 : f32 to vector<16x128xf32>
    %128 = arith.addf %127, %126 : vector<16x128xf32>
    %cst_72 = arith.constant 1.000000e+00 : f32
    %129 = vector.broadcast %cst_72 : f32 to vector<16x128xf32>
    %130 = arith.divf %129, %128 : vector<16x128xf32>
    %cst_73 = arith.constant 1.06140542 : f32
    %131 = vector.broadcast %cst_73 : f32 to vector<16x128xf32>
    %132 = arith.mulf %131, %130 : vector<16x128xf32>
    %cst_74 = arith.constant -1.45315206 : f32
    %133 = vector.broadcast %cst_74 : f32 to vector<16x128xf32>
    %134 = arith.addf %132, %133 : vector<16x128xf32>
    %135 = arith.mulf %134, %130 : vector<16x128xf32>
    %cst_75 = arith.constant 1.42141378 : f32
    %136 = vector.broadcast %cst_75 : f32 to vector<16x128xf32>
    %137 = arith.addf %135, %136 : vector<16x128xf32>
    %138 = arith.mulf %137, %130 : vector<16x128xf32>
    %cst_76 = arith.constant -0.284496725 : f32
    %139 = vector.broadcast %cst_76 : f32 to vector<16x128xf32>
    %140 = arith.addf %138, %139 : vector<16x128xf32>
    %141 = arith.mulf %140, %130 : vector<16x128xf32>
    %cst_77 = arith.constant 0.254829586 : f32
    %142 = vector.broadcast %cst_77 : f32 to vector<16x128xf32>
    %143 = arith.addf %141, %142 : vector<16x128xf32>
    %144 = arith.mulf %143, %130 : vector<16x128xf32>
    %cst_78 = arith.constant 0.000000e+00 : f32
    %145 = vector.broadcast %cst_78 : f32 to vector<16x128xf32>
    %146 = arith.subf %145, %124 : vector<16x128xf32>
    %147 = arith.mulf %146, %124 : vector<16x128xf32>
    %148 = math.exp %147 : vector<16x128xf32>
    %149 = arith.mulf %144, %148 : vector<16x128xf32>
    %cst_79 = arith.constant 1.000000e+00 : f32
    %150 = vector.broadcast %cst_79 : f32 to vector<16x128xf32>
    %151 = arith.subf %150, %149 : vector<16x128xf32>
    %cst_80 = arith.constant 0.000000e+00 : f32
    %152 = vector.broadcast %cst_80 : f32 to vector<16x128xf32>
    %153 = arith.cmpf oge, %123, %152 : vector<16x128xf32>
    %cst_81 = arith.constant 0.000000e+00 : f32
    %154 = vector.broadcast %cst_81 : f32 to vector<16x128xf32>
    %155 = arith.subf %154, %151 : vector<16x128xf32>
    %156 = arith.select %153, %151, %155 : vector<16x128xi1>, vector<16x128xf32>
    %cst_82 = arith.constant 1.000000e+00 : f32
    %157 = vector.broadcast %cst_82 : f32 to vector<16x128xf32>
    %158 = arith.addf %157, %156 : vector<16x128xf32>
    %159 = arith.mulf %121, %158 : vector<16x128xf32>
    %c0_83 = arith.constant 0 : index
    %c0_84 = arith.constant 0 : index
    %c0_85 = arith.constant 0 : index
    %160 = vector.load %arg13[%c0_83, %c0_84, %c0_85] : memref<2x128x32xf32, #tpu.memory_space<vmem>>, vector<1x128x32xf32>
    %161 = vector.shape_cast %160 : vector<1x128x32xf32> to vector<128x32xf32>
    %cst_86 = arith.constant dense<0.000000e+00> : vector<16x32xf32>
    %162 = tpu.matmul %159, %161, %cst_86 {dimension_numbers = #tpu.dot_dimension_numbers<[1], [0], [0], [1], [0, 0, 1, 1], [], []>} : vector<16x128xf32>, vector<128x32xf32>, vector<16x32xf32> -> vector<16x32xf32>
    %c0_87 = arith.constant 0 : index
    %c0_88 = arith.constant 0 : index
    %c0_89 = arith.constant 0 : index
    %163 = vector.load %arg14[%c0_87, %c0_88, %c0_89] : memref<2x1x32xf32, #tpu.memory_space<vmem>>, vector<1x1x32xf32>
    %164 = vector.shape_cast %163 : vector<1x1x32xf32> to vector<1x32xf32>
    %165 = vector.broadcast %164 : vector<1x32xf32> to vector<16x32xf32>
    %166 = arith.addf %162, %165 : vector<16x32xf32>
    %167 = arith.addf %88, %166 : vector<16x32xf32>
    %c1_90 = arith.constant 1 : index
    %c0_91 = arith.constant 0 : index
    %c0_92 = arith.constant 0 : index
    %168 = vector.load %arg3[%c1_90, %c0_91, %c0_92] : memref<2x1x32xf32, #tpu.memory_space<vmem>>, vector<1x1x32xf32>
    %169 = vector.shape_cast %168 : vector<1x1x32xf32> to vector<1x32xf32>
    %c1_93 = arith.constant 1 : index
    %c0_94 = arith.constant 0 : index
    %c0_95 = arith.constant 0 : index
    %170 = vector.load %arg4[%c1_93, %c0_94, %c0_95] : memref<2x1x32xf32, #tpu.memory_space<vmem>>, vector<1x1x32xf32>
    %171 = vector.shape_cast %170 : vector<1x1x32xf32> to vector<1x32xf32>
    %cst_96 = arith.constant dense<0.000000e+00> : vector<16xf32>
    %172 = vector.multi_reduction <add>, %167, %cst_96 [1] : vector<16x32xf32> to vector<16xf32>
    %173 = vector.shape_cast %172 : vector<16xf32> to vector<16x1xf32>
    %cst_97 = arith.constant 3.200000e+01 : f32
    %174 = vector.broadcast %cst_97 : f32 to vector<16x1xf32>
    %175 = arith.divf %173, %174 : vector<16x1xf32>
    %176 = vector.broadcast %175 : vector<16x1xf32> to vector<16x32xf32>
    %177 = arith.subf %167, %176 : vector<16x32xf32>
    %178 = arith.mulf %177, %177 : vector<16x32xf32>
    %cst_98 = arith.constant dense<0.000000e+00> : vector<16xf32>
    %179 = vector.multi_reduction <add>, %178, %cst_98 [1] : vector<16x32xf32> to vector<16xf32>
    %180 = vector.shape_cast %179 : vector<16xf32> to vector<16x1xf32>
    %cst_99 = arith.constant 3.200000e+01 : f32
    %181 = vector.broadcast %cst_99 : f32 to vector<16x1xf32>
    %182 = arith.divf %180, %181 : vector<16x1xf32>
    %cst_100 = arith.constant 9.99999974E-6 : f32
    %183 = vector.broadcast %cst_100 : f32 to vector<16x1xf32>
    %184 = arith.addf %182, %183 : vector<16x1xf32>
    %185 = math.rsqrt %184 : vector<16x1xf32>
    %186 = vector.broadcast %185 : vector<16x1xf32> to vector<16x32xf32>
    %187 = arith.mulf %177, %186 : vector<16x32xf32>
    %188 = vector.broadcast %169 : vector<1x32xf32> to vector<16x32xf32>
    %189 = arith.mulf %187, %188 : vector<16x32xf32>
    %190 = vector.broadcast %171 : vector<1x32xf32> to vector<16x32xf32>
    %191 = arith.addf %189, %190 : vector<16x32xf32>
    %c1_101 = arith.constant 1 : index
    %c0_102 = arith.constant 0 : index
    %c0_103 = arith.constant 0 : index
    %c0_104 = arith.constant 0 : index
    %192 = vector.load %arg5[%c1_101, %c0_102, %c0_103, %c0_104] : memref<2x3x32x32xf32, #tpu.memory_space<vmem>>, vector<1x1x32x32xf32>
    %193 = vector.shape_cast %192 : vector<1x1x32x32xf32> to vector<32x32xf32>
    %cst_105 = arith.constant dense<0.000000e+00> : vector<16x32xf32>
    %194 = tpu.matmul %191, %193, %cst_105 {dimension_numbers = #tpu.dot_dimension_numbers<[1], [0], [0], [1], [0, 0, 1, 1], [], []>} : vector<16x32xf32>, vector<32x32xf32>, vector<16x32xf32> -> vector<16x32xf32>
    %c1_106 = arith.constant 1 : index
    %c0_107 = arith.constant 0 : index
    %c0_108 = arith.constant 0 : index
    %c0_109 = arith.constant 0 : index
    %195 = vector.load %arg6[%c1_106, %c0_107, %c0_108, %c0_109] : memref<2x3x1x32xf32, #tpu.memory_space<vmem>>, vector<1x1x1x32xf32>
    %196 = vector.shape_cast %195 : vector<1x1x1x32xf32> to vector<1x32xf32>
    %197 = vector.broadcast %196 : vector<1x32xf32> to vector<16x32xf32>
    %198 = arith.addf %194, %197 : vector<16x32xf32>
    %cst_110 = arith.constant 0.353553385 : f32
    %199 = vector.broadcast %cst_110 : f32 to vector<16x32xf32>
    %200 = arith.mulf %198, %199 : vector<16x32xf32>
    %c1_111 = arith.constant 1 : index
    %c1_112 = arith.constant 1 : index
    %c0_113 = arith.constant 0 : index
    %c0_114 = arith.constant 0 : index
    %201 = vector.load %arg5[%c1_111, %c1_112, %c0_113, %c0_114] : memref<2x3x32x32xf32, #tpu.memory_space<vmem>>, vector<1x1x32x32xf32>
    %202 = vector.shape_cast %201 : vector<1x1x32x32xf32> to vector<32x32xf32>
    %cst_115 = arith.constant dense<0.000000e+00> : vector<16x32xf32>
    %203 = tpu.matmul %191, %202, %cst_115 {dimension_numbers = #tpu.dot_dimension_numbers<[1], [0], [0], [1], [0, 0, 1, 1], [], []>} : vector<16x32xf32>, vector<32x32xf32>, vector<16x32xf32> -> vector<16x32xf32>
    %c1_116 = arith.constant 1 : index
    %c1_117 = arith.constant 1 : index
    %c0_118 = arith.constant 0 : index
    %c0_119 = arith.constant 0 : index
    %204 = vector.load %arg6[%c1_116, %c1_117, %c0_118, %c0_119] : memref<2x3x1x32xf32, #tpu.memory_space<vmem>>, vector<1x1x1x32xf32>
    %205 = vector.shape_cast %204 : vector<1x1x1x32xf32> to vector<1x32xf32>
    %206 = vector.broadcast %205 : vector<1x32xf32> to vector<16x32xf32>
    %207 = arith.addf %203, %206 : vector<16x32xf32>
    %c1_120 = arith.constant 1 : index
    %c2_121 = arith.constant 2 : index
    %c0_122 = arith.constant 0 : index
    %c0_123 = arith.constant 0 : index
    %208 = vector.load %arg5[%c1_120, %c2_121, %c0_122, %c0_123] : memref<2x3x32x32xf32, #tpu.memory_space<vmem>>, vector<1x1x32x32xf32>
    %209 = vector.shape_cast %208 : vector<1x1x32x32xf32> to vector<32x32xf32>
    %cst_124 = arith.constant dense<0.000000e+00> : vector<16x32xf32>
    %210 = tpu.matmul %191, %209, %cst_124 {dimension_numbers = #tpu.dot_dimension_numbers<[1], [0], [0], [1], [0, 0, 1, 1], [], []>} : vector<16x32xf32>, vector<32x32xf32>, vector<16x32xf32> -> vector<16x32xf32>
    %c1_125 = arith.constant 1 : index
    %c2_126 = arith.constant 2 : index
    %c0_127 = arith.constant 0 : index
    %c0_128 = arith.constant 0 : index
    %211 = vector.load %arg6[%c1_125, %c2_126, %c0_127, %c0_128] : memref<2x3x1x32xf32, #tpu.memory_space<vmem>>, vector<1x1x1x32xf32>
    %212 = vector.shape_cast %211 : vector<1x1x1x32xf32> to vector<1x32xf32>
    %213 = vector.broadcast %212 : vector<1x32xf32> to vector<16x32xf32>
    %214 = arith.addf %210, %213 : vector<16x32xf32>
    %215 = vector.extract_strided_slice %200 {offsets = [0, 0], sizes = [16, 8], strides = [1, 1]} : vector<16x32xf32> to vector<16x8xf32>
    %216 = vector.extract_strided_slice %200 {offsets = [0, 8], sizes = [16, 8], strides = [1, 1]} : vector<16x32xf32> to vector<16x8xf32>
    %217 = vector.extract_strided_slice %200 {offsets = [0, 16], sizes = [16, 8], strides = [1, 1]} : vector<16x32xf32> to vector<16x8xf32>
    %218 = vector.extract_strided_slice %200 {offsets = [0, 24], sizes = [16, 8], strides = [1, 1]} : vector<16x32xf32> to vector<16x8xf32>
    %219 = tpu.concatenate %215, %216, %217, %218 in 0 : vector<16x8xf32>, vector<16x8xf32>, vector<16x8xf32>, vector<16x8xf32> -> vector<64x8xf32>
    %220 = vector.extract_strided_slice %207 {offsets = [0, 0], sizes = [16, 8], strides = [1, 1]} : vector<16x32xf32> to vector<16x8xf32>
    %221 = vector.extract_strided_slice %207 {offsets = [0, 8], sizes = [16, 8], strides = [1, 1]} : vector<16x32xf32> to vector<16x8xf32>
    %222 = vector.extract_strided_slice %207 {offsets = [0, 16], sizes = [16, 8], strides = [1, 1]} : vector<16x32xf32> to vector<16x8xf32>
    %223 = vector.extract_strided_slice %207 {offsets = [0, 24], sizes = [16, 8], strides = [1, 1]} : vector<16x32xf32> to vector<16x8xf32>
    %224 = tpu.concatenate %220, %221, %222, %223 in 0 : vector<16x8xf32>, vector<16x8xf32>, vector<16x8xf32>, vector<16x8xf32> -> vector<64x8xf32>
    %225 = vector.extract_strided_slice %214 {offsets = [0, 0], sizes = [16, 8], strides = [1, 1]} : vector<16x32xf32> to vector<16x8xf32>
    %226 = vector.extract_strided_slice %214 {offsets = [0, 8], sizes = [16, 8], strides = [1, 1]} : vector<16x32xf32> to vector<16x8xf32>
    %227 = vector.extract_strided_slice %214 {offsets = [0, 16], sizes = [16, 8], strides = [1, 1]} : vector<16x32xf32> to vector<16x8xf32>
    %228 = vector.extract_strided_slice %214 {offsets = [0, 24], sizes = [16, 8], strides = [1, 1]} : vector<16x32xf32> to vector<16x8xf32>
    %229 = tpu.concatenate %225, %226, %227, %228 in 0 : vector<16x8xf32>, vector<16x8xf32>, vector<16x8xf32>, vector<16x8xf32> -> vector<64x8xf32>
    %cst_129 = arith.constant dense<0.000000e+00> : vector<64x64xf32>
    %230 = tpu.matmul %219, %224, %cst_129 {dimension_numbers = #tpu.dot_dimension_numbers<[1], [1], [0], [0], [0, 0, 1, 0], [], []>} : vector<64x8xf32>, vector<64x8xf32>, vector<64x64xf32> -> vector<64x64xf32>
    %231 = arith.addf %230, %1 : vector<64x64xf32>
    %cst_130 = arith.constant dense<0xFF800000> : vector<64xf32>
    %232 = vector.multi_reduction <maximumf>, %231, %cst_130 [1] : vector<64x64xf32> to vector<64xf32>
    %233 = vector.shape_cast %232 : vector<64xf32> to vector<64x1xf32>
    %234 = vector.broadcast %233 : vector<64x1xf32> to vector<64x64xf32>
    %235 = arith.subf %231, %234 : vector<64x64xf32>
    %236 = math.exp %235 : vector<64x64xf32>
    %cst_131 = arith.constant dense<0.000000e+00> : vector<64xf32>
    %237 = vector.multi_reduction <add>, %236, %cst_131 [1] : vector<64x64xf32> to vector<64xf32>
    %238 = vector.shape_cast %237 : vector<64xf32> to vector<64x1xf32>
    %239 = vector.broadcast %238 : vector<64x1xf32> to vector<64x64xf32>
    %240 = arith.divf %236, %239 : vector<64x64xf32>
    %cst_132 = arith.constant dense<0.000000e+00> : vector<64x8xf32>
    %241 = tpu.matmul %240, %229, %cst_132 {dimension_numbers = #tpu.dot_dimension_numbers<[1], [0], [0], [1], [0, 0, 1, 1], [], []>} : vector<64x64xf32>, vector<64x8xf32>, vector<64x8xf32> -> vector<64x8xf32>
    %242 = vector.extract_strided_slice %241 {offsets = [0, 0], sizes = [16, 8], strides = [1, 1]} : vector<64x8xf32> to vector<16x8xf32>
    %243 = vector.extract_strided_slice %241 {offsets = [16, 0], sizes = [16, 8], strides = [1, 1]} : vector<64x8xf32> to vector<16x8xf32>
    %244 = vector.extract_strided_slice %241 {offsets = [32, 0], sizes = [16, 8], strides = [1, 1]} : vector<64x8xf32> to vector<16x8xf32>
    %245 = vector.extract_strided_slice %241 {offsets = [48, 0], sizes = [16, 8], strides = [1, 1]} : vector<64x8xf32> to vector<16x8xf32>
    %246 = tpu.concatenate %242, %243, %244, %245 in 1 : vector<16x8xf32>, vector<16x8xf32>, vector<16x8xf32>, vector<16x8xf32> -> vector<16x32xf32>
    %c1_133 = arith.constant 1 : index
    %c0_134 = arith.constant 0 : index
    %c0_135 = arith.constant 0 : index
    %247 = vector.load %arg7[%c1_133, %c0_134, %c0_135] : memref<2x32x32xf32, #tpu.memory_space<vmem>>, vector<1x32x32xf32>
    %248 = vector.shape_cast %247 : vector<1x32x32xf32> to vector<32x32xf32>
    %cst_136 = arith.constant dense<0.000000e+00> : vector<16x32xf32>
    %249 = tpu.matmul %246, %248, %cst_136 {dimension_numbers = #tpu.dot_dimension_numbers<[1], [0], [0], [1], [0, 0, 1, 1], [], []>} : vector<16x32xf32>, vector<32x32xf32>, vector<16x32xf32> -> vector<16x32xf32>
    %c1_137 = arith.constant 1 : index
    %c0_138 = arith.constant 0 : index
    %c0_139 = arith.constant 0 : index
    %250 = vector.load %arg8[%c1_137, %c0_138, %c0_139] : memref<2x1x32xf32, #tpu.memory_space<vmem>>, vector<1x1x32xf32>
    %251 = vector.shape_cast %250 : vector<1x1x32xf32> to vector<1x32xf32>
    %252 = vector.broadcast %251 : vector<1x32xf32> to vector<16x32xf32>
    %253 = arith.addf %249, %252 : vector<16x32xf32>
    %254 = arith.addf %167, %253 : vector<16x32xf32>
    %c1_140 = arith.constant 1 : index
    %c0_141 = arith.constant 0 : index
    %c0_142 = arith.constant 0 : index
    %255 = vector.load %arg9[%c1_140, %c0_141, %c0_142] : memref<2x1x32xf32, #tpu.memory_space<vmem>>, vector<1x1x32xf32>
    %256 = vector.shape_cast %255 : vector<1x1x32xf32> to vector<1x32xf32>
    %c1_143 = arith.constant 1 : index
    %c0_144 = arith.constant 0 : index
    %c0_145 = arith.constant 0 : index
    %257 = vector.load %arg10[%c1_143, %c0_144, %c0_145] : memref<2x1x32xf32, #tpu.memory_space<vmem>>, vector<1x1x32xf32>
    %258 = vector.shape_cast %257 : vector<1x1x32xf32> to vector<1x32xf32>
    %cst_146 = arith.constant dense<0.000000e+00> : vector<16xf32>
    %259 = vector.multi_reduction <add>, %254, %cst_146 [1] : vector<16x32xf32> to vector<16xf32>
    %260 = vector.shape_cast %259 : vector<16xf32> to vector<16x1xf32>
    %cst_147 = arith.constant 3.200000e+01 : f32
    %261 = vector.broadcast %cst_147 : f32 to vector<16x1xf32>
    %262 = arith.divf %260, %261 : vector<16x1xf32>
    %263 = vector.broadcast %262 : vector<16x1xf32> to vector<16x32xf32>
    %264 = arith.subf %254, %263 : vector<16x32xf32>
    %265 = arith.mulf %264, %264 : vector<16x32xf32>
    %cst_148 = arith.constant dense<0.000000e+00> : vector<16xf32>
    %266 = vector.multi_reduction <add>, %265, %cst_148 [1] : vector<16x32xf32> to vector<16xf32>
    %267 = vector.shape_cast %266 : vector<16xf32> to vector<16x1xf32>
    %cst_149 = arith.constant 3.200000e+01 : f32
    %268 = vector.broadcast %cst_149 : f32 to vector<16x1xf32>
    %269 = arith.divf %267, %268 : vector<16x1xf32>
    %cst_150 = arith.constant 9.99999974E-6 : f32
    %270 = vector.broadcast %cst_150 : f32 to vector<16x1xf32>
    %271 = arith.addf %269, %270 : vector<16x1xf32>
    %272 = math.rsqrt %271 : vector<16x1xf32>
    %273 = vector.broadcast %272 : vector<16x1xf32> to vector<16x32xf32>
    %274 = arith.mulf %264, %273 : vector<16x32xf32>
    %275 = vector.broadcast %256 : vector<1x32xf32> to vector<16x32xf32>
    %276 = arith.mulf %274, %275 : vector<16x32xf32>
    %277 = vector.broadcast %258 : vector<1x32xf32> to vector<16x32xf32>
    %278 = arith.addf %276, %277 : vector<16x32xf32>
    %c1_151 = arith.constant 1 : index
    %c0_152 = arith.constant 0 : index
    %c0_153 = arith.constant 0 : index
    %279 = vector.load %arg11[%c1_151, %c0_152, %c0_153] : memref<2x32x128xf32, #tpu.memory_space<vmem>>, vector<1x32x128xf32>
    %280 = vector.shape_cast %279 : vector<1x32x128xf32> to vector<32x128xf32>
    %cst_154 = arith.constant dense<0.000000e+00> : vector<16x128xf32>
    %281 = tpu.matmul %278, %280, %cst_154 {dimension_numbers = #tpu.dot_dimension_numbers<[1], [0], [0], [1], [0, 0, 1, 1], [], []>} : vector<16x32xf32>, vector<32x128xf32>, vector<16x128xf32> -> vector<16x128xf32>
    %c1_155 = arith.constant 1 : index
    %c0_156 = arith.constant 0 : index
    %c0_157 = arith.constant 0 : index
    %282 = vector.load %arg12[%c1_155, %c0_156, %c0_157] : memref<2x1x128xf32, #tpu.memory_space<vmem>>, vector<1x1x128xf32>
    %283 = vector.shape_cast %282 : vector<1x1x128xf32> to vector<1x128xf32>
    %284 = vector.broadcast %283 : vector<1x128xf32> to vector<16x128xf32>
    %285 = arith.addf %281, %284 : vector<16x128xf32>
    %cst_158 = arith.constant 5.000000e-01 : f32
    %286 = vector.broadcast %cst_158 : f32 to vector<16x128xf32>
    %287 = arith.mulf %286, %285 : vector<16x128xf32>
    %cst_159 = arith.constant 0.707106769 : f32
    %288 = vector.broadcast %cst_159 : f32 to vector<16x128xf32>
    %289 = arith.mulf %285, %288 : vector<16x128xf32>
    %290 = math.absf %289 : vector<16x128xf32>
    %cst_160 = arith.constant 0.327591091 : f32
    %291 = vector.broadcast %cst_160 : f32 to vector<16x128xf32>
    %292 = arith.mulf %291, %290 : vector<16x128xf32>
    %cst_161 = arith.constant 1.000000e+00 : f32
    %293 = vector.broadcast %cst_161 : f32 to vector<16x128xf32>
    %294 = arith.addf %293, %292 : vector<16x128xf32>
    %cst_162 = arith.constant 1.000000e+00 : f32
    %295 = vector.broadcast %cst_162 : f32 to vector<16x128xf32>
    %296 = arith.divf %295, %294 : vector<16x128xf32>
    %cst_163 = arith.constant 1.06140542 : f32
    %297 = vector.broadcast %cst_163 : f32 to vector<16x128xf32>
    %298 = arith.mulf %297, %296 : vector<16x128xf32>
    %cst_164 = arith.constant -1.45315206 : f32
    %299 = vector.broadcast %cst_164 : f32 to vector<16x128xf32>
    %300 = arith.addf %298, %299 : vector<16x128xf32>
    %301 = arith.mulf %300, %296 : vector<16x128xf32>
    %cst_165 = arith.constant 1.42141378 : f32
    %302 = vector.broadcast %cst_165 : f32 to vector<16x128xf32>
    %303 = arith.addf %301, %302 : vector<16x128xf32>
    %304 = arith.mulf %303, %296 : vector<16x128xf32>
    %cst_166 = arith.constant -0.284496725 : f32
    %305 = vector.broadcast %cst_166 : f32 to vector<16x128xf32>
    %306 = arith.addf %304, %305 : vector<16x128xf32>
    %307 = arith.mulf %306, %296 : vector<16x128xf32>
    %cst_167 = arith.constant 0.254829586 : f32
    %308 = vector.broadcast %cst_167 : f32 to vector<16x128xf32>
    %309 = arith.addf %307, %308 : vector<16x128xf32>
    %310 = arith.mulf %309, %296 : vector<16x128xf32>
    %cst_168 = arith.constant 0.000000e+00 : f32
    %311 = vector.broadcast %cst_168 : f32 to vector<16x128xf32>
    %312 = arith.subf %311, %290 : vector<16x128xf32>
    %313 = arith.mulf %312, %290 : vector<16x128xf32>
    %314 = math.exp %313 : vector<16x128xf32>
    %315 = arith.mulf %310, %314 : vector<16x128xf32>
    %cst_169 = arith.constant 1.000000e+00 : f32
    %316 = vector.broadcast %cst_169 : f32 to vector<16x128xf32>
    %317 = arith.subf %316, %315 : vector<16x128xf32>
    %cst_170 = arith.constant 0.000000e+00 : f32
    %318 = vector.broadcast %cst_170 : f32 to vector<16x128xf32>
    %319 = arith.cmpf oge, %289, %318 : vector<16x128xf32>
    %cst_171 = arith.constant 0.000000e+00 : f32
    %320 = vector.broadcast %cst_171 : f32 to vector<16x128xf32>
    %321 = arith.subf %320, %317 : vector<16x128xf32>
    %322 = arith.select %319, %317, %321 : vector<16x128xi1>, vector<16x128xf32>
    %cst_172 = arith.constant 1.000000e+00 : f32
    %323 = vector.broadcast %cst_172 : f32 to vector<16x128xf32>
    %324 = arith.addf %323, %322 : vector<16x128xf32>
    %325 = arith.mulf %287, %324 : vector<16x128xf32>
    %c1_173 = arith.constant 1 : index
    %c0_174 = arith.constant 0 : index
    %c0_175 = arith.constant 0 : index
    %326 = vector.load %arg13[%c1_173, %c0_174, %c0_175] : memref<2x128x32xf32, #tpu.memory_space<vmem>>, vector<1x128x32xf32>
    %327 = vector.shape_cast %326 : vector<1x128x32xf32> to vector<128x32xf32>
    %cst_176 = arith.constant dense<0.000000e+00> : vector<16x32xf32>
    %328 = tpu.matmul %325, %327, %cst_176 {dimension_numbers = #tpu.dot_dimension_numbers<[1], [0], [0], [1], [0, 0, 1, 1], [], []>} : vector<16x128xf32>, vector<128x32xf32>, vector<16x32xf32> -> vector<16x32xf32>
    %c1_177 = arith.constant 1 : index
    %c0_178 = arith.constant 0 : index
    %c0_179 = arith.constant 0 : index
    %329 = vector.load %arg14[%c1_177, %c0_178, %c0_179] : memref<2x1x32xf32, #tpu.memory_space<vmem>>, vector<1x1x32xf32>
    %330 = vector.shape_cast %329 : vector<1x1x32xf32> to vector<1x32xf32>
    %331 = vector.broadcast %330 : vector<1x32xf32> to vector<16x32xf32>
    %332 = arith.addf %328, %331 : vector<16x32xf32>
    %333 = arith.addf %254, %332 : vector<16x32xf32>
    %c0_180 = arith.constant 0 : index
    %c0_181 = arith.constant 0 : index
    %334 = vector.load %arg15[%c0_180, %c0_181] : memref<1x32xf32, #tpu.memory_space<vmem>>, vector<1x32xf32>
    %c0_182 = arith.constant 0 : index
    %c0_183 = arith.constant 0 : index
    %335 = vector.load %arg16[%c0_182, %c0_183] : memref<1x32xf32, #tpu.memory_space<vmem>>, vector<1x32xf32>
    %cst_184 = arith.constant dense<0.000000e+00> : vector<16xf32>
    %336 = vector.multi_reduction <add>, %333, %cst_184 [1] : vector<16x32xf32> to vector<16xf32>
    %337 = vector.shape_cast %336 : vector<16xf32> to vector<16x1xf32>
    %cst_185 = arith.constant 3.200000e+01 : f32
    %338 = vector.broadcast %cst_185 : f32 to vector<16x1xf32>
    %339 = arith.divf %337, %338 : vector<16x1xf32>
    %340 = vector.broadcast %339 : vector<16x1xf32> to vector<16x32xf32>
    %341 = arith.subf %333, %340 : vector<16x32xf32>
    %342 = arith.mulf %341, %341 : vector<16x32xf32>
    %cst_186 = arith.constant dense<0.000000e+00> : vector<16xf32>
    %343 = vector.multi_reduction <add>, %342, %cst_186 [1] : vector<16x32xf32> to vector<16xf32>
    %344 = vector.shape_cast %343 : vector<16xf32> to vector<16x1xf32>
    %cst_187 = arith.constant 3.200000e+01 : f32
    %345 = vector.broadcast %cst_187 : f32 to vector<16x1xf32>
    %346 = arith.divf %344, %345 : vector<16x1xf32>
    %cst_188 = arith.constant 9.99999974E-6 : f32
    %347 = vector.broadcast %cst_188 : f32 to vector<16x1xf32>
    %348 = arith.addf %346, %347 : vector<16x1xf32>
    %349 = math.rsqrt %348 : vector<16x1xf32>
    %350 = vector.broadcast %349 : vector<16x1xf32> to vector<16x32xf32>
    %351 = arith.mulf %341, %350 : vector<16x32xf32>
    %352 = vector.broadcast %334 : vector<1x32xf32> to vector<16x32xf32>
    %353 = arith.mulf %351, %352 : vector<16x32xf32>
    %354 = vector.broadcast %335 : vector<1x32xf32> to vector<16x32xf32>
    %355 = arith.addf %353, %354 : vector<16x32xf32>
    %c0_189 = arith.constant 0 : index
    %c0_190 = arith.constant 0 : index
    %356 = vector.load %arg17[%c0_189, %c0_190] : memref<32x128xf32, #tpu.memory_space<vmem>>, vector<32x128xf32>
    %cst_191 = arith.constant dense<0.000000e+00> : vector<16x128xf32>
    %357 = tpu.matmul %355, %356, %cst_191 {dimension_numbers = #tpu.dot_dimension_numbers<[1], [0], [0], [1], [0, 0, 1, 1], [], []>} : vector<16x32xf32>, vector<32x128xf32>, vector<16x128xf32> -> vector<16x128xf32>
    %c0_192 = arith.constant 0 : index
    %c0_193 = arith.constant 0 : index
    %358 = vector.load %arg18[%c0_192, %c0_193] : memref<16x128xf32, #tpu.memory_space<vmem>>, vector<16x128xf32>
    tpu.vector_store %arg18[%c0_192, %c0_193], %357 {strides = array<i32>} : memref<16x128xf32, #tpu.memory_space<vmem>>, vector<16x128xf32>,
    return
  }
  func.func @transform_0(%arg0: i32) -> (i32, i32) {
    %c0_i32 = arith.constant 0 : i32
    %c0_i32_0 = arith.constant 0 : i32
    %c0_i32_1 = arith.constant 0 : i32
    return %c0_i32, %c0_i32_0 : i32, i32
  }
  func.func @transform_1(%arg0: i32) -> (i32, i32) {
    %c0_i32 = arith.constant 0 : i32
    %c0_i32_0 = arith.constant 0 : i32
    %c0_i32_1 = arith.constant 0 : i32
    return %c0_i32, %c0_i32_0 : i32, i32
  }
  func.func @transform_2(%arg0: i32) -> (i32, i32, i32) {
    %c0_i32 = arith.constant 0 : i32
    %c0_i32_0 = arith.constant 0 : i32
    %c0_i32_1 = arith.constant 0 : i32
    %c0_i32_2 = arith.constant 0 : i32
    return %c0_i32, %c0_i32_0, %c0_i32_1 : i32, i32, i32
  }
  func.func @transform_3(%arg0: i32) -> (i32, i32, i32) {
    %c0_i32 = arith.constant 0 : i32
    %c0_i32_0 = arith.constant 0 : i32
    %c0_i32_1 = arith.constant 0 : i32
    %c0_i32_2 = arith.constant 0 : i32
    return %c0_i32, %c0_i32_0, %c0_i32_1 : i32, i32, i32
  }
  func.func @transform_4(%arg0: i32) -> (i32, i32, i32, i32) {
    %c0_i32 = arith.constant 0 : i32
    %c0_i32_0 = arith.constant 0 : i32
    %c0_i32_1 = arith.constant 0 : i32
    %c0_i32_2 = arith.constant 0 : i32
    %c0_i32_3 = arith.constant 0 : i32
    return %c0_i32, %c0_i32_0, %c0_i32_1, %c0_i32_2 : i32, i32, i32, i32
  }
  func.func @transform_5(%arg0: i32) -> (i32, i32, i32, i32) {
    %c0_i32 = arith.constant 0 : i32
    %c0_i32_0 = arith.constant 0 : i32
    %c0_i32_1 = arith.constant 0 : i32
    %c0_i32_2 = arith.constant 0 : i32
    %c0_i32_3 = arith.constant 0 : i32
    return %c0_i32, %c0_i32_0, %c0_i32_1, %c0_i32_2 : i32, i32, i32, i32
  }
  func.func @transform_6(%arg0: i32) -> (i32, i32, i32) {
    %c0_i32 = arith.constant 0 : i32
    %c0_i32_0 = arith.constant 0 : i32
    %c0_i32_1 = arith.constant 0 : i32
    %c0_i32_2 = arith.constant 0 : i32
    return %c0_i32, %c0_i32_0, %c0_i32_1 : i32, i32, i32
  }
  func.func @transform_7(%arg0: i32) -> (i32, i32, i32) {
    %c0_i32 = arith.constant 0 : i32
    %c0_i32_0 = arith.constant 0 : i32
    %c0_i32_1 = arith.constant 0 : i32
    %c0_i32_2 = arith.constant 0 : i32
    return %c0_i32, %c0_i32_0, %c0_i32_1 : i32, i32, i32
  }
  func.func @transform_8(%arg0: i32) -> (i32, i32, i32) {
    %c0_i32 = arith.constant 0 : i32
    %c0_i32_0 = arith.constant 0 : i32
    %c0_i32_1 = arith.constant 0 : i32
    %c0_i32_2 = arith.constant 0 : i32
    return %c0_i32, %c0_i32_0, %c0_i32_1 : i32, i32, i32
  }
  func.func @transform_9(%arg0: i32) -> (i32, i32, i32) {
    %c0_i32 = arith.constant 0 : i32
    %c0_i32_0 = arith.constant 0 : i32
    %c0_i32_1 = arith.constant 0 : i32
    %c0_i32_2 = arith.constant 0 : i32
    return %c0_i32, %c0_i32_0, %c0_i32_1 : i32, i32, i32
  }
  func.func @transform_10(%arg0: i32) -> (i32, i32, i32) {
    %c0_i32 = arith.constant 0 : i32
    %c0_i32_0 = arith.constant 0 : i32
    %c0_i32_1 = arith.constant 0 : i32
    %c0_i32_2 = arith.constant 0 : i32
    return %c0_i32, %c0_i32_0, %c0_i32_1 : i32, i32, i32
  }
  func.func @transform_11(%arg0: i32) -> (i32, i32, i32) {
    %c0_i32 = arith.constant 0 : i32
    %c0_i32_0 = arith.constant 0 : i32
    %c0_i32_1 = arith.constant 0 : i32
    %c0_i32_2 = arith.constant 0 : i32
    return %c0_i32, %c0_i32_0, %c0_i32_1 : i32, i32, i32
  }
  func.func @transform_12(%arg0: i32) -> (i32, i32, i32) {
    %c0_i32 = arith.constant 0 : i32
    %c0_i32_0 = arith.constant 0 : i32
    %c0_i32_1 = arith.constant 0 : i32
    %c0_i32_2 = arith.constant 0 : i32
    return %c0_i32, %c0_i32_0, %c0_i32_1 : i32, i32, i32
  }
  func.func @transform_13(%arg0: i32) -> (i32, i32, i32) {
    %c0_i32 = arith.constant 0 : i32
    %c0_i32_0 = arith.constant 0 : i32
    %c0_i32_1 = arith.constant 0 : i32
    %c0_i32_2 = arith.constant 0 : i32
    return %c0_i32, %c0_i32_0, %c0_i32_1 : i32, i32, i32
  }
  func.func @transform_14(%arg0: i32) -> (i32, i32) {
    %c0_i32 = arith.constant 0 : i32
    %c0_i32_0 = arith.constant 0 : i32
    %c0_i32_1 = arith.constant 0 : i32
    return %c0_i32, %c0_i32_0 : i32, i32
  }
  func.func @transform_15(%arg0: i32) -> (i32, i32) {
    %c0_i32 = arith.constant 0 : i32
    %c0_i32_0 = arith.constant 0 : i32
    %c0_i32_1 = arith.constant 0 : i32
    return %c0_i32, %c0_i32_0 : i32, i32
  }
  func.func @transform_16(%arg0: i32) -> (i32, i32) {
    %c0_i32 = arith.constant 0 : i32
    %c0_i32_0 = arith.constant 0 : i32
    %c0_i32_1 = arith.constant 0 : i32
    return %c0_i32, %c0_i32_0 : i32, i32
  }
  func.func @transform_17(%arg0: i32) -> (i32, i32) {
    %c0_i32 = arith.constant 0 : i32
    %c0_i32_0 = arith.constant 0 : i32
    %c0_i32_1 = arith.constant 0 : i32
    return %c0_i32, %c0_i32_0 : i32, i32
  }
}

</mosaic_0001>

<llo_original>
// kernel: gpt_forward.1
$region0: #{gpt_forward.1}
  #allocation0 [shape = 'u32[]', space=smem, size = 0x4, offset = 0x4, fixed_abs, tag = 'smem constant byte address 0x4 - core index']
  #allocation1 [shape = 'u32[144,128]{1,0:T(1,128)}', space=vmem, size = 0x12000, scoped, tag = 'internal scratch']
  %s0 = inlined_call_operand.vmem [shape: f32[16,32], index: 0, kind: input, shape index: {}]
  %s1 = inlined_call_operand.vmem [shape: f32[64,64], index: 1, kind: input, shape index: {}]
  %s2 = inlined_call_operand.vmem [shape: f32[2,1,32], index: 2, kind: input, shape index: {}]
  %s3 = inlined_call_operand.vmem [shape: f32[2,1,32], index: 3, kind: input, shape index: {}]
  %s4 = inlined_call_operand.vmem [shape: f32[2,3,32,32], index: 4, kind: input, shape index: {}]
  %s5 = inlined_call_operand.vmem [shape: f32[2,3,1,32], index: 5, kind: input, shape index: {}]
  %s6 = inlined_call_operand.vmem [shape: f32[2,32,32], index: 6, kind: input, shape index: {}]
  %s7 = inlined_call_operand.vmem [shape: f32[2,1,32], index: 7, kind: input, shape index: {}]
  %s8 = inlined_call_operand.vmem [shape: f32[2,1,32], index: 8, kind: input, shape index: {}]
  %s9 = inlined_call_operand.vmem [shape: f32[2,1,32], index: 9, kind: input, shape index: {}]
  %s10 = inlined_call_operand.vmem [shape: f32[2,32,128], index: 10, kind: input, shape index: {}]
  %s11 = inlined_call_operand.vmem [shape: f32[2,1,128], index: 11, kind: input, shape index: {}]
  %s12 = inlined_call_operand.vmem [shape: f32[2,128,32], index: 12, kind: input, shape index: {}]
  %s13 = inlined_call_operand.vmem [shape: f32[2,1,32], index: 13, kind: input, shape index: {}]
  %s14 = inlined_call_operand.vmem [shape: f32[1,32], index: 14, kind: input, shape index: {}]
  %s15 = inlined_call_operand.vmem [shape: f32[1,32], index: 15, kind: input, shape index: {}]
  %s16 = inlined_call_operand.vmem [shape: f32[32,128], index: 16, kind: input, shape index: {}]
  %s17 = inlined_call_operand.hbm [shape: f32[16,128], index: 17, kind: output, shape index: {}]
  %s18 = sld [smem:[#allocation0]]
  $region78: #{gpt_forward.1} parent=0
    _
  %s20 = ssub.s32 1, %s18
  %s21 = scalar_select 0, %s20, %s18
  $region1: #{gpt_forward.1} parent=0
    #allocation2 [shape = 'u8[8192]{0}', space=vmem, size = 0x2000, scoped, tag = 'output window, operand 0, single buffered']
    #allocation3 [shape = 's32[1]{0}', space=sflag, size = 0x4, scoped, tag = 'scoped memory for gpt_forward.1']
    %22 = vsyncpa [#allocation3], 0
    // Predicated region
    $region2: #{gpt_forward.1} parent=1 // pred_check
      _
    $region3: #{gpt_forward.1} parent=1 // pred_check_branch
      %24 = sbr.rel (0) target = $region5
    $region4: #{gpt_forward.1} parent=1 // pred_region
      _
    $region5: #{gpt_forward.1} parent=1 // pred_fallthru
      _
    // Predicated region
    $region6: #{gpt_forward.1} parent=1 // pred_check
      _
    $region7: #{gpt_forward.1} parent=1 // pred_check_branch
      %26 = sbr.rel (0) target = $region9
    $region8: #{gpt_forward.1} parent=1 // pred_region
      _
    $region9: #{gpt_forward.1} parent=1 // pred_fallthru
      _
    // Predicated region
    $region10: #{gpt_forward.1} parent=1 // pred_check
      _
    $region11: #{gpt_forward.1} parent=1 // pred_check_branch
      %28 = sbr.rel (0) target = $region13
    $region12: #{gpt_forward.1} parent=1 // pred_region
      _
    $region13: #{gpt_forward.1} parent=1 // pred_fallthru
      _
    // Predicated region
    $region14: #{gpt_forward.1} parent=1 // pred_check
      _
    $region15: #{gpt_forward.1} parent=1 // pred_check_branch
      %30 = sbr.rel (0) target = $region17
    $region16: #{gpt_forward.1} parent=1 // pred_region
      _
    $region17: #{gpt_forward.1} parent=1 // pred_fallthru
      _
    // Predicated region
    $region18: #{gpt_forward.1} parent=1 // pred_check
      _
    $region19: #{gpt_forward.1} parent=1 // pred_check_branch
      %32 = sbr.rel (0) target = $region21
    $region20: #{gpt_forward.1} parent=1 // pred_region
      _
    $region21: #{gpt_forward.1} parent=1 // pred_fallthru
      _
    // Predicated region
    $region22: #{gpt_forward.1} parent=1 // pred_check
      _
    $region23: #{gpt_forward.1} parent=1 // pred_check_branch
      %34 = sbr.rel (0) target = $region25
    $region24: #{gpt_forward.1} parent=1 // pred_region
      _
    $region25: #{gpt_forward.1} parent=1 // pred_fallthru
      _
    // Predicated region
    $region26: #{gpt_forward.1} parent=1 // pred_check
      _
    $region27: #{gpt_forward.1} parent=1 // pred_check_branch
      %36 = sbr.rel (0) target = $region29
    $region28: #{gpt_forward.1} parent=1 // pred_region
      _
    $region29: #{gpt_forward.1} parent=1 // pred_fallthru
      _
    // Predicated region
    $region30: #{gpt_forward.1} parent=1 // pred_check
      _
    $region31: #{gpt_forward.1} parent=1 // pred_check_branch
      %38 = sbr.rel (0) target = $region33
    $region32: #{gpt_forward.1} parent=1 // pred_region
      _
    $region33: #{gpt_forward.1} parent=1 // pred_fallthru
      _
    // Predicated region
    $region34: #{gpt_forward.1} parent=1 // pred_check
      _
    $region35: #{gpt_forward.1} parent=1 // pred_check_branch
      %40 = sbr.rel (0) target = $region37
    $region36: #{gpt_forward.1} parent=1 // pred_region
      _
    $region37: #{gpt_forward.1} parent=1 // pred_fallthru
      _
    // Predicated region
    $region38: #{gpt_forward.1} parent=1 // pred_check
      _
    $region39: #{gpt_forward.1} parent=1 // pred_check_branch
      %42 = sbr.rel (0) target = $region41
    $region40: #{gpt_forward.1} parent=1 // pred_region
      _
    $region41: #{gpt_forward.1} parent=1 // pred_fallthru
      _
    // Predicated region
    $region42: #{gpt_forward.1} parent=1 // pred_check
      _
    $region43: #{gpt_forward.1} parent=1 // pred_check_branch
      %44 = sbr.rel (0) target = $region45
    $region44: #{gpt_forward.1} parent=1 // pred_region
      _
    $region45: #{gpt_forward.1} parent=1 // pred_fallthru
      _
    // Predicated region
    $region46: #{gpt_forward.1} parent=1 // pred_check
      _
    $region47: #{gpt_forward.1} parent=1 // pred_check_branch
      %46 = sbr.rel (0) target = $region49
    $region48: #{gpt_forward.1} parent=1 // pred_region
      _
    $region49: #{gpt_forward.1} parent=1 // pred_fallthru
      _
    // Predicated region
    $region50: #{gpt_forward.1} parent=1 // pred_check
      _
    $region51: #{gpt_forward.1} parent=1 // pred_check_branch
      %48 = sbr.rel (0) target = $region53
    $region52: #{gpt_forward.1} parent=1 // pred_region
      _
    $region53: #{gpt_forward.1} parent=1 // pred_fallthru
      _
    // Predicated region
    $region54: #{gpt_forward.1} parent=1 // pred_check
      _
    $region55: #{gpt_forward.1} parent=1 // pred_check_branch
      %50 = sbr.rel (0) target = $region57
    $region56: #{gpt_forward.1} parent=1 // pred_region
      _
    $region57: #{gpt_forward.1} parent=1 // pred_fallthru
      _
    // Predicated region
    $region58: #{gpt_forward.1} parent=1 // pred_check
      _
    $region59: #{gpt_forward.1} parent=1 // pred_check_branch
      %52 = sbr.rel (0) target = $region61
    $region60: #{gpt_forward.1} parent=1 // pred_region
      _
    $region61: #{gpt_forward.1} parent=1 // pred_fallthru
      _
    // Predicated region
    $region62: #{gpt_forward.1} parent=1 // pred_check
      _
    $region63: #{gpt_forward.1} parent=1 // pred_check_branch
      %54 = sbr.rel (0) target = $region65
    $region64: #{gpt_forward.1} parent=1 // pred_region
      _
    $region65: #{gpt_forward.1} parent=1 // pred_fallthru
      _
    // Predicated region
    $region66: #{gpt_forward.1} parent=1 // pred_check
      _
    $region67: #{gpt_forward.1} parent=1 // pred_check_branch
      %56 = sbr.rel (0) target = $region69
    $region68: #{gpt_forward.1} parent=1 // pred_region
      _
    $region69: #{gpt_forward.1} parent=1 // pred_fallthru
      _
    %v57 = vld [vmem:[%s0] sm:$0xff]
    %v58 = vld [vmem:[%s0 + $0x8] sm:$0xff]
    %v59 = vld [vmem:[%s1] sm:$0xff]
    %v60 = vld [vmem:[%s1 + $0x8] sm:$0xff]
    %v61 = vld [vmem:[%s1 + $0x10] sm:$0xff]
    %v62 = vld [vmem:[%s1 + $0x18] sm:$0xff]
    %v63 = vld [vmem:[%s1 + $0x20] sm:$0xff]
    %v64 = vld [vmem:[%s1 + $0x28] sm:$0xff]
    %v65 = vld [vmem:[%s1 + $0x30] sm:$0xff]
    %v66 = vld [vmem:[%s1 + $0x38] sm:$0xff]
    %v67 = vld [vmem:[%s2] sm:$0x1]
    %v68 = vld [vmem:[%s3] sm:$0x1]
    %vm69 = vcmask 261120
    %v70 = vsel %vm69, %v57, 0.0
    %71 = vadd.xlane.f32.xlu0 %v70
    %v72 = vpop.xlane.xlu0 %71
    %v73 = vsel %vm69, %v58, 0.0
    %74 = vadd.xlane.f32.xlu0 %v73
    %v75 = vpop.xlane.xlu0 %74
    %v76 = vrcp.pop 32.0
    %v77 = vmul.f32 %v72, %v76
    %v78 = vmul.f32 %v75, %v76
    %v79 = vsub.f32 %v57, %v77
    %v80 = vsub.f32 %v58, %v78
    %v81 = vmul.f32 %v79, %v79
    %v82 = vmul.f32 %v80, %v80
    %v83 = vsel %vm69, %v81, 0.0
    %84 = vadd.xlane.f32.xlu0 %v83
    %v85 = vpop.xlane.xlu0 %84
    %v86 = vsel %vm69, %v82, 0.0
    %87 = vadd.xlane.f32.xlu0 %v86
    %v88 = vpop.xlane.xlu0 %87
    %v89 = vmul.f32 %v85, %v76
    %v90 = vmul.f32 %v88, %v76
    %v91 = vadd.f32 %v89, 1e-05
    %v92 = vadd.f32 %v90, 1e-05
    %v93 = vrsqrt.pop %v91
    %v94 = vrsqrt.pop %v92
    %v95 = vmul.f32 %v79, %v93
    %v96 = vmul.f32 %v80, %v94
    %v98 = vlaneseq
    %v99 = vshrl.u32 %v98, 7
    %v100 = vsub.s32 0, %v99
    %v101 = vrot.slane %v67, %v100
    %v103 = vmul.f32 %v95, %v101
    %v104 = vmul.f32 %v96, %v101
    %v106 = vlaneseq
    %v107 = vshrl.u32 %v106, 7
    %v108 = vsub.s32 0, %v107
    %v109 = vrot.slane %v68, %v108
    %v111 = vadd.f32 %v103, %v109
    %v112 = vadd.f32 %v104, %v109
    %v113 = vld [vmem:[%s4] sm:$0xff]
    %v114 = vld [vmem:[%s4 + $0x8] sm:$0xff]
    %v115 = vld [vmem:[%s4 + $0x10] sm:$0xff]
    %v116 = vld [vmem:[%s4 + $0x18] sm:$0xff]
    %v117 = vld [vmem:[%s5] sm:$0x1]
    %v119 = vlaneseq
    %v120 = vshrl.u32 %v119, 7
    %v121 = vsub.s32 0, %v120
    %v122 = vrot.slane %v117, %v121
    %v125 = vsel %vm69, %v111, 0
    %v128 = vsel %vm69, %v112, 0
    %130 = vmatprep.subr.mxu0 0.0
    %131 = vmatpush1.msra.mxu0 %v113
    %132 = vmatprep.subr.mxu0 0.0
    %133 = vmatpush1.msra.mxu0 %v114
    %134 = vmatprep.subr.mxu0 0.0
    %135 = vmatpush1.msra.mxu0 %v115
    %136 = vmatprep.subr.mxu0 0.0
    %137 = vmatpush1.msra.mxu0 %v116
    %138 = vmatprep.subr.mxu0 0.0
    %139 = vmatpush1.msra.mxu0 0.0
    %140 = vmatprep.subr.mxu0 0.0
    %141 = vmatpush1.msra.mxu0 0.0
    %142 = vmatprep.subr.mxu0 0.0
    %143 = vmatpush1.msra.mxu0 0.0
    %144 = vmatprep.subr.mxu0 0.0
    %145 = vmatpush1.msra.mxu0 0.0
    %146 = vmatprep.subr.mxu0 0.0
    %147 = vmatpush1.msra.mxu0 0.0
    %148 = vmatprep.subr.mxu0 0.0
    %149 = vmatpush1.msra.mxu0 0.0
    %150 = vmatprep.subr.mxu0 0.0
    %151 = vmatpush1.msra.mxu0 0.0
    %152 = vmatprep.subr.mxu0 0.0
    %153 = vmatpush1.msra.mxu0 0.0
    %154 = vmatprep.subr.mxu0 0.0
    %155 = vmatpush1.msra.mxu0 0.0
    %156 = vmatprep.subr.mxu0 0.0
    %157 = vmatpush1.msra.mxu0 0.0
    %158 = vmatprep.subr.mxu0 0.0
    %159 = vmatpush1.msra.mxu0 0.0
    %160 = vmatprep.subr.mxu0 0.0
    %161 = vmatpush1.msra.mxu0 0.0
    %162 = vmatprep.subr.mxu0 0.0
    %163 = vmatpush1.msra.mxu0 0.0
    %164 = vmatprep.subr.mxu0 0.0
    %165 = vmatpush1.msra.mxu0 0.0
    %166 = vmatprep.subr.mxu0 0.0
    %167 = vmatpush1.msra.mxu0 0.0
    %168 = vmatprep.subr.mxu0 0.0
    %169 = vmatpush1.msra.mxu0 0.0
    %170 = vmatprep.subr.mxu0 0.0
    %171 = vmatpush1.msra.mxu0 0.0
    %172 = vmatprep.subr.mxu0 0.0
    %173 = vmatpush1.msra.mxu0 0.0
    %174 = vmatprep.subr.mxu0 0.0
    %175 = vmatpush1.msra.mxu0 0.0
    %176 = vmatprep.subr.mxu0 0.0
    %177 = vmatpush1.msra.mxu0 0.0
    %178 = vmatprep.subr.mxu0 0.0
    %179 = vmatpush1.msra.mxu0 0.0
    %180 = vmatprep.subr.mxu0 0.0
    %181 = vmatpush1.msra.mxu0 0.0
    %182 = vmatprep.subr.mxu0 0.0
    %183 = vmatpush1.msra.mxu0 0.0
    %184 = vmatprep.subr.mxu0 0.0
    %185 = vmatpush1.msra.mxu0 0.0
    %186 = vmatprep.subr.mxu0 0.0
    %187 = vmatpush1.msra.mxu0 0.0
    %188 = vmatprep.subr.mxu0 0.0
    %189 = vmatpush1.msra.mxu0 0.0
    %190 = vmatprep.subr.mxu0 0.0
    %191 = vmatpush1.msra.mxu0 0.0
    %192 = vmatprep.subr.mxu0 0.0
    %193 = vmatpush1.msra.mxu0 0.0
    %194 = vmatprep.mubr.f32.mxu0 0.0
    %195 = vmatmul.mubr.f32.gmra.mrb[0].mxu0 %v125
    %v196 = vpop.f32.mrb[0].mxu0
    %v197 = vadd.f32 %v122, %v196
    %v198 = vpop.f32.mrb[0].mxu0
    %199 = vmatprep.mubr.f32.mxu0 0.0
    %200 = vmatmul.mubr.f32.gmra.mrb[0].mxu0 %v128
    %v201 = vpop.f32.mrb[0].mxu0
    %v202 = vadd.f32 %v122, %v201
    %v203 = vpop.f32.mrb[0].mxu0
    %204 = vdwg.mxu0
    %v205 = vmul.f32 %v197, 0.35355338
    %v206 = vmul.f32 %v202, 0.35355338
    %s207 = scalar_lea.vmem %s4, 32
    %v208 = vld [vmem:[%s207] sm:$0xff]
    %v209 = vld [vmem:[%s207 + $0x8] sm:$0xff]
    %v210 = vld [vmem:[%s207 + $0x10] sm:$0xff]
    %v211 = vld [vmem:[%s207 + $0x18] sm:$0xff]
    %s212 = scalar_lea.vmem %s5, 1
    %v213 = vld [vmem:[%s212] sm:$0x1]
    %v215 = vlaneseq
    %v216 = vshrl.u32 %v215, 7
    %v217 = vsub.s32 0, %v216
    %v218 = vrot.slane %v213, %v217
    %220 = vmatprep.subr.mxu0 0.0
    %221 = vmatpush1.msra.mxu0 %v208
    %222 = vmatprep.subr.mxu0 0.0
    %223 = vmatpush1.msra.mxu0 %v209
    %224 = vmatprep.subr.mxu0 0.0
    %225 = vmatpush1.msra.mxu0 %v210
    %226 = vmatprep.subr.mxu0 0.0
    %227 = vmatpush1.msra.mxu0 %v211
    %228 = vmatprep.subr.mxu0 0.0
    %229 = vmatpush1.msra.mxu0 0.0
    %230 = vmatprep.subr.mxu0 0.0
    %231 = vmatpush1.msra.mxu0 0.0
    %232 = vmatprep.subr.mxu0 0.0
    %233 = vmatpush1.msra.mxu0 0.0
    %234 = vmatprep.subr.mxu0 0.0
    %235 = vmatpush1.msra.mxu0 0.0
    %236 = vmatprep.subr.mxu0 0.0
    %237 = vmatpush1.msra.mxu0 0.0
    %238 = vmatprep.subr.mxu0 0.0
    %239 = vmatpush1.msra.mxu0 0.0
    %240 = vmatprep.subr.mxu0 0.0
    %241 = vmatpush1.msra.mxu0 0.0
    %242 = vmatprep.subr.mxu0 0.0
    %243 = vmatpush1.msra.mxu0 0.0
    %244 = vmatprep.subr.mxu0 0.0
    %245 = vmatpush1.msra.mxu0 0.0
    %246 = vmatprep.subr.mxu0 0.0
    %247 = vmatpush1.msra.mxu0 0.0
    %248 = vmatprep.subr.mxu0 0.0
    %249 = vmatpush1.msra.mxu0 0.0
    %250 = vmatprep.subr.mxu0 0.0
    %251 = vmatpush1.msra.mxu0 0.0
    %252 = vmatprep.subr.mxu0 0.0
    %253 = vmatpush1.msra.mxu0 0.0
    %254 = vmatprep.subr.mxu0 0.0
    %255 = vmatpush1.msra.mxu0 0.0
    %256 = vmatprep.subr.mxu0 0.0
    %257 = vmatpush1.msra.mxu0 0.0
    %258 = vmatprep.subr.mxu0 0.0
    %259 = vmatpush1.msra.mxu0 0.0
    %260 = vmatprep.subr.mxu0 0.0
    %261 = vmatpush1.msra.mxu0 0.0
    %262 = vmatprep.subr.mxu0 0.0
    %263 = vmatpush1.msra.mxu0 0.0
    %264 = vmatprep.subr.mxu0 0.0
    %265 = vmatpush1.msra.mxu0 0.0
    %266 = vmatprep.subr.mxu0 0.0
    %267 = vmatpush1.msra.mxu0 0.0
    %268 = vmatprep.subr.mxu0 0.0
    %269 = vmatpush1.msra.mxu0 0.0
    %270 = vmatprep.subr.mxu0 0.0
    %271 = vmatpush1.msra.mxu0 0.0
    %272 = vmatprep.subr.mxu0 0.0
    %273 = vmatpush1.msra.mxu0 0.0
    %274 = vmatprep.subr.mxu0 0.0
    %275 = vmatpush1.msra.mxu0 0.0
    %276 = vmatprep.subr.mxu0 0.0
    %277 = vmatpush1.msra.mxu0 0.0
    %278 = vmatprep.subr.mxu0 0.0
    %279 = vmatpush1.msra.mxu0 0.0
    %280 = vmatprep.subr.mxu0 0.0
    %281 = vmatpush1.msra.mxu0 0.0
    %282 = vmatprep.subr.mxu0 0.0
    %283 = vmatpush1.msra.mxu0 0.0
    %284 = vmatprep.mubr.f32.mxu0 0.0
    %285 = vmatmul.mubr.f32.gmra.mrb[0].mxu0 %v125
    %v286 = vpop.f32.mrb[0].mxu0
    %v287 = vadd.f32 %v218, %v286
    %v288 = vpop.f32.mrb[0].mxu0
    %289 = vmatprep.mubr.f32.mxu0 0.0
    %290 = vmatmul.mubr.f32.gmra.mrb[0].mxu0 %v128
    %v291 = vpop.f32.mrb[0].mxu0
    %v292 = vadd.f32 %v218, %v291
    %v293 = vpop.f32.mrb[0].mxu0
    %294 = vdwg.mxu0
    %s295 = scalar_lea.vmem %s4, 64
    %v296 = vld [vmem:[%s295] sm:$0xff]
    %v297 = vld [vmem:[%s295 + $0x8] sm:$0xff]
    %v298 = vld [vmem:[%s295 + $0x10] sm:$0xff]
    %v299 = vld [vmem:[%s295 + $0x18] sm:$0xff]
    %s300 = scalar_lea.vmem %s5, 2
    %v301 = vld [vmem:[%s300] sm:$0x1]
    %v303 = vlaneseq
    %v304 = vshrl.u32 %v303, 7
    %v305 = vsub.s32 0, %v304
    %v306 = vrot.slane %v301, %v305
    %308 = vmatprep.subr.mxu0 0.0
    %309 = vmatpush1.msra.mxu0 %v296
    %310 = vmatprep.subr.mxu0 0.0
    %311 = vmatpush1.msra.mxu0 %v297
    %312 = vmatprep.subr.mxu0 0.0
    %313 = vmatpush1.msra.mxu0 %v298
    %314 = vmatprep.subr.mxu0 0.0
    %315 = vmatpush1.msra.mxu0 %v299
    %316 = vmatprep.subr.mxu0 0.0
    %317 = vmatpush1.msra.mxu0 0.0
    %318 = vmatprep.subr.mxu0 0.0
    %319 = vmatpush1.msra.mxu0 0.0
    %320 = vmatprep.subr.mxu0 0.0
    %321 = vmatpush1.msra.mxu0 0.0
    %322 = vmatprep.subr.mxu0 0.0
    %323 = vmatpush1.msra.mxu0 0.0
    %324 = vmatprep.subr.mxu0 0.0
    %325 = vmatpush1.msra.mxu0 0.0
    %326 = vmatprep.subr.mxu0 0.0
    %327 = vmatpush1.msra.mxu0 0.0
    %328 = vmatprep.subr.mxu0 0.0
    %329 = vmatpush1.msra.mxu0 0.0
    %330 = vmatprep.subr.mxu0 0.0
    %331 = vmatpush1.msra.mxu0 0.0
    %332 = vmatprep.subr.mxu0 0.0
    %333 = vmatpush1.msra.mxu0 0.0
    %334 = vmatprep.subr.mxu0 0.0
    %335 = vmatpush1.msra.mxu0 0.0
    %336 = vmatprep.subr.mxu0 0.0
    %337 = vmatpush1.msra.mxu0 0.0
    %338 = vmatprep.subr.mxu0 0.0
    %339 = vmatpush1.msra.mxu0 0.0
    %340 = vmatprep.subr.mxu0 0.0
    %341 = vmatpush1.msra.mxu0 0.0
    %342 = vmatprep.subr.mxu0 0.0
    %343 = vmatpush1.msra.mxu0 0.0
    %344 = vmatprep.subr.mxu0 0.0
    %345 = vmatpush1.msra.mxu0 0.0
    %346 = vmatprep.subr.mxu0 0.0
    %347 = vmatpush1.msra.mxu0 0.0
    %348 = vmatprep.subr.mxu0 0.0
    %349 = vmatpush1.msra.mxu0 0.0
    %350 = vmatprep.subr.mxu0 0.0
    %351 = vmatpush1.msra.mxu0 0.0
    %352 = vmatprep.subr.mxu0 0.0
    %353 = vmatpush1.msra.mxu0 0.0
    %354 = vmatprep.subr.mxu0 0.0
    %355 = vmatpush1.msra.mxu0 0.0
    %356 = vmatprep.subr.mxu0 0.0
    %357 = vmatpush1.msra.mxu0 0.0
    %358 = vmatprep.subr.mxu0 0.0
    %359 = vmatpush1.msra.mxu0 0.0
    %360 = vmatprep.subr.mxu0 0.0
    %361 = vmatpush1.msra.mxu0 0.0
    %362 = vmatprep.subr.mxu0 0.0
    %363 = vmatpush1.msra.mxu0 0.0
    %364 = vmatprep.subr.mxu0 0.0
    %365 = vmatpush1.msra.mxu0 0.0
    %366 = vmatprep.subr.mxu0 0.0
    %367 = vmatpush1.msra.mxu0 0.0
    %368 = vmatprep.subr.mxu0 0.0
    %369 = vmatpush1.msra.mxu0 0.0
    %370 = vmatprep.subr.mxu0 0.0
    %371 = vmatpush1.msra.mxu0 0.0
    %372 = vmatprep.mubr.f32.mxu0 0.0
    %373 = vmatmul.mubr.f32.gmra.mrb[0].mxu0 %v125
    %v374 = vpop.f32.mrb[0].mxu0
    %v375 = vadd.f32 %v306, %v374
    %v376 = vpop.f32.mrb[0].mxu0
    %377 = vmatprep.mubr.f32.mxu0 0.0
    %378 = vmatmul.mubr.f32.gmra.mrb[0].mxu0 %v128
    %v379 = vpop.f32.mrb[0].mxu0
    %v380 = vadd.f32 %v306, %v379
    %v381 = vpop.f32.mrb[0].mxu0
    %382 = vdwg.mxu0
    %385 = vrot.lane.b32.xlu0 %v205, 120
    %v386 = vpop.permute.xlu0 %385
    %387 = vrot.lane.b32.xlu0 %v206, 120
    %v388 = vpop.permute.xlu0 %387
    %389 = vrot.lane.b32.xlu0 %v205, 112
    %v390 = vpop.permute.xlu0 %389
    %391 = vrot.lane.b32.xlu0 %v206, 112
    %v392 = vpop.permute.xlu0 %391
    %393 = vrot.lane.b32.xlu0 %v205, 104
    %v394 = vpop.permute.xlu0 %393
    %395 = vrot.lane.b32.xlu0 %v206, 104
    %v396 = vpop.permute.xlu0 %395
    %399 = vrot.lane.b32.xlu0 %v287, 120
    %v400 = vpop.permute.xlu0 %399
    %401 = vrot.lane.b32.xlu0 %v292, 120
    %v402 = vpop.permute.xlu0 %401
    %403 = vrot.lane.b32.xlu0 %v287, 112
    %v404 = vpop.permute.xlu0 %403
    %405 = vrot.lane.b32.xlu0 %v292, 112
    %v406 = vpop.permute.xlu0 %405
    %407 = vrot.lane.b32.xlu0 %v287, 104
    %v408 = vpop.permute.xlu0 %407
    %409 = vrot.lane.b32.xlu0 %v292, 104
    %v410 = vpop.permute.xlu0 %409
    %413 = vrot.lane.b32.xlu0 %v375, 120
    %v414 = vpop.permute.xlu0 %413
    %415 = vrot.lane.b32.xlu0 %v380, 120
    %v416 = vpop.permute.xlu0 %415
    %419 = vrot.lane.b32.xlu0 %v375, 112
    %v420 = vpop.permute.xlu0 %419
    %421 = vrot.lane.b32.xlu0 %v380, 112
    %v422 = vpop.permute.xlu0 %421
    %425 = vrot.lane.b32.xlu0 %v375, 104
    %v426 = vpop.permute.xlu0 %425
    %427 = vrot.lane.b32.xlu0 %v380, 104
    %v428 = vpop.permute.xlu0 %427
    %vm431 = vcmask 64512
    %v432 = vsel %vm431, %v205, 0
    %v434 = vsel %vm431, %v206, 0
    %v436 = vsel %vm431, %v386, 0
    %v438 = vsel %vm431, %v388, 0
    %v440 = vsel %vm431, %v390, 0
    %v442 = vsel %vm431, %v392, 0
    %v444 = vsel %vm431, %v394, 0
    %v446 = vsel %vm431, %v396, 0
    %v448 = vsel %vm431, %v287, 0
    %v450 = vsel %vm431, %v292, 0
    %v452 = vsel %vm431, %v400, 0
    %v454 = vsel %vm431, %v402, 0
    %v456 = vsel %vm431, %v404, 0
    %v458 = vsel %vm431, %v406, 0
    %v460 = vsel %vm431, %v408, 0
    %v462 = vsel %vm431, %v410, 0
    %464 = vmatprep.subr.mxu0 0.0
    %465 = vmatpush1.xpose.msra.mxu0 %v448
    %466 = vmatprep.subr.mxu0 0.0
    %467 = vmatpush1.xpose.msra.mxu0 %v450
    %468 = vmatprep.subr.mxu0 0.0
    %469 = vmatpush1.xpose.msra.mxu0 %v452
    %470 = vmatprep.subr.mxu0 0.0
    %471 = vmatpush1.xpose.msra.mxu0 %v454
    %472 = vmatprep.subr.mxu0 0.0
    %473 = vmatpush1.xpose.msra.mxu0 %v456
    %474 = vmatprep.subr.mxu0 0.0
    %475 = vmatpush1.xpose.msra.mxu0 %v458
    %476 = vmatprep.subr.mxu0 0.0
    %477 = vmatpush1.xpose.msra.mxu0 %v460
    %478 = vmatprep.subr.mxu0 0.0
    %479 = vmatpush1.xpose.msra.mxu0 %v462
    %480 = vmatprep.subr.mxu0 0.0
    %481 = vmatpush1.xpose.msra.mxu0 0.0
    %482 = vmatprep.subr.mxu0 0.0
    %483 = vmatpush1.xpose.msra.mxu0 0.0
    %484 = vmatprep.subr.mxu0 0.0
    %485 = vmatpush1.xpose.msra.mxu0 0.0
    %486 = vmatprep.subr.mxu0 0.0
    %487 = vmatpush1.xpose.msra.mxu0 0.0
    %488 = vmatprep.subr.mxu0 0.0
    %489 = vmatpush1.xpose.msra.mxu0 0.0
    %490 = vmatprep.subr.mxu0 0.0
    %491 = vmatpush1.xpose.msra.mxu0 0.0
    %492 = vmatprep.subr.mxu0 0.0
    %493 = vmatpush1.xpose.msra.mxu0 0.0
    %494 = vmatprep.subr.mxu0 0.0
    %495 = vmatpush1.xpose.msra.mxu0 0.0
    %496 = vmatprep.subr.mxu0 0.0
    %497 = vmatpush1.xpose.msra.mxu0 0.0
    %498 = vmatprep.subr.mxu0 0.0
    %499 = vmatpush1.xpose.msra.mxu0 0.0
    %500 = vmatprep.subr.mxu0 0.0
    %501 = vmatpush1.xpose.msra.mxu0 0.0
    %502 = vmatprep.subr.mxu0 0.0
    %503 = vmatpush1.xpose.msra.mxu0 0.0
    %504 = vmatprep.subr.mxu0 0.0
    %505 = vmatpush1.xpose.msra.mxu0 0.0
    %506 = vmatprep.subr.mxu0 0.0
    %507 = vmatpush1.xpose.msra.mxu0 0.0
    %508 = vmatprep.subr.mxu0 0.0
    %509 = vmatpush1.xpose.msra.mxu0 0.0
    %510 = vmatprep.subr.mxu0 0.0
    %511 = vmatpush1.xpose.msra.mxu0 0.0
    %512 = vmatprep.subr.mxu0 0.0
    %513 = vmatpush1.xpose.msra.mxu0 0.0
    %514 = vmatprep.subr.mxu0 0.0
    %515 = vmatpush1.xpose.msra.mxu0 0.0
    %516 = vmatprep.subr.mxu0 0.0
    %517 = vmatpush1.xpose.msra.mxu0 0.0
    %518 = vmatprep.subr.mxu0 0.0
    %519 = vmatpush1.xpose.msra.mxu0 0.0
    %520 = vmatprep.subr.mxu0 0.0
    %521 = vmatpush1.xpose.msra.mxu0 0.0
    %522 = vmatprep.subr.mxu0 0.0
    %523 = vmatpush1.xpose.msra.mxu0 0.0
    %524 = vmatprep.subr.mxu0 0.0
    %525 = vmatpush1.xpose.msra.mxu0 0.0
    %526 = vmatprep.subr.mxu0 0.0
    %527 = vmatpush1.xpose.msra.mxu0 0.0
    %528 = vmatprep.mubr.f32.mxu0 0.0
    %529 = vmatmul.mubr.f32.gmra.mrb[0].mxu0 %v432
    %v530 = vpop.f32.mrb[0].mxu0
    %v531 = vadd.f32 %v59, %v530
    %v532 = vpop.f32.mrb[0].mxu0
    %533 = vmatprep.mubr.f32.mxu0 0.0
    %534 = vmatmul.mubr.f32.gmra.mrb[0].mxu0 %v434
    %v535 = vpop.f32.mrb[0].mxu0
    %v536 = vadd.f32 %v60, %v535
    %v537 = vpop.f32.mrb[0].mxu0
    %538 = vmatprep.mubr.f32.mxu0 0.0
    %539 = vmatmul.mubr.f32.gmra.mrb[0].mxu0 %v436
    %v540 = vpop.f32.mrb[0].mxu0
    %v541 = vadd.f32 %v61, %v540
    %v542 = vpop.f32.mrb[0].mxu0
    %543 = vmatprep.mubr.f32.mxu0 0.0
    %544 = vmatmul.mubr.f32.gmra.mrb[0].mxu0 %v438
    %v545 = vpop.f32.mrb[0].mxu0
    %v546 = vadd.f32 %v62, %v545
    %v547 = vpop.f32.mrb[0].mxu0
    %548 = vmatprep.mubr.f32.mxu0 0.0
    %549 = vmatmul.mubr.f32.gmra.mrb[0].mxu0 %v440
    %v550 = vpop.f32.mrb[0].mxu0
    %v551 = vadd.f32 %v63, %v550
    %v552 = vpop.f32.mrb[0].mxu0
    %553 = vmatprep.mubr.f32.mxu0 0.0
    %554 = vmatmul.mubr.f32.gmra.mrb[0].mxu0 %v442
    %v555 = vpop.f32.mrb[0].mxu0
    %v556 = vadd.f32 %v64, %v555
    %v557 = vpop.f32.mrb[0].mxu0
    %558 = vmatprep.mubr.f32.mxu0 0.0
    %559 = vmatmul.mubr.f32.gmra.mrb[0].mxu0 %v444
    %v560 = vpop.f32.mrb[0].mxu0
    %v561 = vadd.f32 %v65, %v560
    %v562 = vpop.f32.mrb[0].mxu0
    %563 = vmatprep.mubr.f32.mxu0 0.0
    %564 = vmatmul.mubr.f32.gmra.mrb[0].mxu0 %v446
    %v565 = vpop.f32.mrb[0].mxu0
    %v566 = vadd.f32 %v66, %v565
    %v567 = vpop.f32.mrb[0].mxu0
    %568 = vdwg.mxu0
    %vm569 = vcmask 523264
    %v570 = vsel %vm569, %v531, -inf
    %571 = vmax.xlane.f32.xlu0 %v570
    %v572 = vpop.xlane.xlu0 %571
    %v573 = vsel %vm569, %v536, -inf
    %574 = vmax.xlane.f32.xlu0 %v573
    %v575 = vpop.xlane.xlu0 %574
    %v576 = vsel %vm569, %v541, -inf
    %577 = vmax.xlane.f32.xlu0 %v576
    %v578 = vpop.xlane.xlu0 %577
    %v579 = vsel %vm569, %v546, -inf
    %580 = vmax.xlane.f32.xlu0 %v579
    %v581 = vpop.xlane.xlu0 %580
    %v582 = vsel %vm569, %v551, -inf
    %583 = vmax.xlane.f32.xlu0 %v582
    %v584 = vpop.xlane.xlu0 %583
    %v585 = vsel %vm569, %v556, -inf
    %586 = vmax.xlane.f32.xlu0 %v585
    %v587 = vpop.xlane.xlu0 %586
    %v588 = vsel %vm569, %v561, -inf
    %589 = vmax.xlane.f32.xlu0 %v588
    %v590 = vpop.xlane.xlu0 %589
    %v591 = vsel %vm569, %v566, -inf
    %592 = vmax.xlane.f32.xlu0 %v591
    %v593 = vpop.xlane.xlu0 %592
    %v594 = vsub.f32 %v531, %v572
    %v595 = vsub.f32 %v536, %v575
    %v596 = vsub.f32 %v541, %v578
    %v597 = vsub.f32 %v546, %v581
    %v598 = vsub.f32 %v551, %v584
    %v599 = vsub.f32 %v556, %v587
    %v600 = vsub.f32 %v561, %v590
    %v601 = vsub.f32 %v566, %v593
    %v602 = vmul.f32 %v594, 1.442695
    %v603 = vpow.pop %v602
    %v604 = vmul.f32 %v595, 1.442695
    %v605 = vpow.pop %v604
    %v606 = vmul.f32 %v596, 1.442695
    %v607 = vpow.pop %v606
    %v608 = vmul.f32 %v597, 1.442695
    %v609 = vpow.pop %v608
    %v610 = vmul.f32 %v598, 1.442695
    %v611 = vpow.pop %v610
    %v612 = vmul.f32 %v599, 1.442695
    %v613 = vpow.pop %v612
    %v614 = vmul.f32 %v600, 1.442695
    %v615 = vpow.pop %v614
    %v616 = vmul.f32 %v601, 1.442695
    %v617 = vpow.pop %v616
    %v618 = vsel %vm569, %v603, 0.0
    %619 = vadd.xlane.f32.xlu0 %v618
    %v620 = vpop.xlane.xlu0 %619
    %v621 = vsel %vm569, %v605, 0.0
    %622 = vadd.xlane.f32.xlu0 %v621
    %v623 = vpop.xlane.xlu0 %622
    %v624 = vsel %vm569, %v607, 0.0
    %625 = vadd.xlane.f32.xlu0 %v624
    %v626 = vpop.xlane.xlu0 %625
    %v627 = vsel %vm569, %v609, 0.0
    %628 = vadd.xlane.f32.xlu0 %v627
    %v629 = vpop.xlane.xlu0 %628
    %v630 = vsel %vm569, %v611, 0.0
    %631 = vadd.xlane.f32.xlu0 %v630
    %v632 = vpop.xlane.xlu0 %631
    %v633 = vsel %vm569, %v613, 0.0
    %634 = vadd.xlane.f32.xlu0 %v633
    %v635 = vpop.xlane.xlu0 %634
    %v636 = vsel %vm569, %v615, 0.0
    %637 = vadd.xlane.f32.xlu0 %v636
    %v638 = vpop.xlane.xlu0 %637
    %v639 = vsel %vm569, %v617, 0.0
    %640 = vadd.xlane.f32.xlu0 %v639
    %v641 = vpop.xlane.xlu0 %640
    %v642 = vrcp.pop %v620
    %v643 = vmul.f32 %v603, %v642
    %v644 = vrcp.pop %v623
    %v645 = vmul.f32 %v605, %v644
    %v646 = vrcp.pop %v626
    %v647 = vmul.f32 %v607, %v646
    %v648 = vrcp.pop %v629
    %v649 = vmul.f32 %v609, %v648
    %v650 = vrcp.pop %v632
    %v651 = vmul.f32 %v611, %v650
    %v652 = vrcp.pop %v635
    %v653 = vmul.f32 %v613, %v652
    %v654 = vrcp.pop %v638
    %v655 = vmul.f32 %v615, %v654
    %v656 = vrcp.pop %v641
    %v657 = vmul.f32 %v617, %v656
    %v659 = vsel %vm569, %v643, 0
    %v662 = vsel %vm569, %v645, 0
    %v665 = vsel %vm569, %v647, 0
    %v668 = vsel %vm569, %v649, 0
    %v671 = vsel %vm569, %v651, 0
    %v674 = vsel %vm569, %v653, 0
    %v677 = vsel %vm569, %v655, 0
    %v680 = vsel %vm569, %v657, 0
    %682 = vmatprep.subr.mxu0 0.0
    %683 = vmatpush1.msra.mxu0 %v375
    %684 = vmatprep.subr.mxu0 0.0
    %685 = vmatpush1.msra.mxu0 %v380
    %686 = vmatprep.subr.mxu0 0.0
    %687 = vmatpush1.msra.mxu0 %v414
    %688 = vmatprep.subr.mxu0 0.0
    %689 = vmatpush1.msra.mxu0 %v416
    %690 = vmatprep.subr.mxu0 0.0
    %691 = vmatpush1.msra.mxu0 %v420
    %692 = vmatprep.subr.mxu0 0.0
    %693 = vmatpush1.msra.mxu0 %v422
    %694 = vmatprep.subr.mxu0 0.0
    %695 = vmatpush1.msra.mxu0 %v426
    %696 = vmatprep.subr.mxu0 0.0
    %697 = vmatpush1.msra.mxu0 %v428
    %698 = vmatprep.subr.mxu0 0.0
    %699 = vmatpush1.msra.mxu0 0.0
    %700 = vmatprep.subr.mxu0 0.0
    %701 = vmatpush1.msra.mxu0 0.0
    %702 = vmatprep.subr.mxu0 0.0
    %703 = vmatpush1.msra.mxu0 0.0
    %704 = vmatprep.subr.mxu0 0.0
    %705 = vmatpush1.msra.mxu0 0.0
    %706 = vmatprep.subr.mxu0 0.0
    %707 = vmatpush1.msra.mxu0 0.0
    %708 = vmatprep.subr.mxu0 0.0
    %709 = vmatpush1.msra.mxu0 0.0
    %710 = vmatprep.subr.mxu0 0.0
    %711 = vmatpush1.msra.mxu0 0.0
    %712 = vmatprep.subr.mxu0 0.0
    %713 = vmatpush1.msra.mxu0 0.0
    %714 = vmatprep.subr.mxu0 0.0
    %715 = vmatpush1.msra.mxu0 0.0
    %716 = vmatprep.subr.mxu0 0.0
    %717 = vmatpush1.msra.mxu0 0.0
    %718 = vmatprep.subr.mxu0 0.0
    %719 = vmatpush1.msra.mxu0 0.0
    %720 = vmatprep.subr.mxu0 0.0
    %721 = vmatpush1.msra.mxu0 0.0
    %722 = vmatprep.subr.mxu0 0.0
    %723 = vmatpush1.msra.mxu0 0.0
    %724 = vmatprep.subr.mxu0 0.0
    %725 = vmatpush1.msra.mxu0 0.0
    %726 = vmatprep.subr.mxu0 0.0
    %727 = vmatpush1.msra.mxu0 0.0
    %728 = vmatprep.subr.mxu0 0.0
    %729 = vmatpush1.msra.mxu0 0.0
    %730 = vmatprep.subr.mxu0 0.0
    %731 = vmatpush1.msra.mxu0 0.0
    %732 = vmatprep.subr.mxu0 0.0
    %733 = vmatpush1.msra.mxu0 0.0
    %734 = vmatprep.subr.mxu0 0.0
    %735 = vmatpush1.msra.mxu0 0.0
    %736 = vmatprep.subr.mxu0 0.0
    %737 = vmatpush1.msra.mxu0 0.0
    %738 = vmatprep.subr.mxu0 0.0
    %739 = vmatpush1.msra.mxu0 0.0
    %740 = vmatprep.subr.mxu0 0.0
    %741 = vmatpush1.msra.mxu0 0.0
    %742 = vmatprep.subr.mxu0 0.0
    %743 = vmatpush1.msra.mxu0 0.0
    %744 = vmatprep.subr.mxu0 0.0
    %745 = vmatpush1.msra.mxu0 0.0
    %746 = vmatprep.mubr.f32.mxu0 0.0
    %747 = vmatmul.mubr.f32.gmra.mrb[0].mxu0 %v659
    %v748 = vpop.f32.mrb[0].mxu0
    %v749 = vadd.f32 0.0, %v748
    %v750 = vpop.f32.mrb[0].mxu0
    %751 = vmatprep.mubr.f32.mxu0 0.0
    %752 = vmatmul.mubr.f32.gmra.mrb[0].mxu0 %v662
    %v753 = vpop.f32.mrb[0].mxu0
    %v754 = vadd.f32 0.0, %v753
    %v755 = vpop.f32.mrb[0].mxu0
    %756 = vmatprep.mubr.f32.mxu0 0.0
    %757 = vmatmul.mubr.f32.gmra.mrb[0].mxu0 %v665
    %v758 = vpop.f32.mrb[0].mxu0
    %v759 = vadd.f32 0.0, %v758
    %v760 = vpop.f32.mrb[0].mxu0
    %761 = vmatprep.mubr.f32.mxu0 0.0
    %762 = vmatmul.mubr.f32.gmra.mrb[0].mxu0 %v668
    %v763 = vpop.f32.mrb[0].mxu0
    %v764 = vadd.f32 0.0, %v763
    %v765 = vpop.f32.mrb[0].mxu0
    %766 = vmatprep.mubr.f32.mxu0 0.0
    %767 = vmatmul.mubr.f32.gmra.mrb[0].mxu0 %v671
    %v768 = vpop.f32.mrb[0].mxu0
    %v769 = vadd.f32 0.0, %v768
    %v770 = vpop.f32.mrb[0].mxu0
    %771 = vmatprep.mubr.f32.mxu0 0.0
    %772 = vmatmul.mubr.f32.gmra.mrb[0].mxu0 %v674
    %v773 = vpop.f32.mrb[0].mxu0
    %v774 = vadd.f32 0.0, %v773
    %v775 = vpop.f32.mrb[0].mxu0
    %776 = vmatprep.mubr.f32.mxu0 0.0
    %777 = vmatmul.mubr.f32.gmra.mrb[0].mxu0 %v677
    %v778 = vpop.f32.mrb[0].mxu0
    %v779 = vadd.f32 0.0, %v778
    %v780 = vpop.f32.mrb[0].mxu0
    %781 = vmatprep.mubr.f32.mxu0 0.0
    %782 = vmatmul.mubr.f32.gmra.mrb[0].mxu0 %v680
    %v783 = vpop.f32.mrb[0].mxu0
    %v784 = vadd.f32 0.0, %v783
    %v785 = vpop.f32.mrb[0].mxu0
    %786 = vdwg.mxu0
    %789 = vrot.lane.b32.xlu0 %v759, 8
    %v790 = vpop.permute.xlu0 %789
    %791 = vrot.lane.b32.xlu0 %v764, 8
    %v792 = vpop.permute.xlu0 %791
    %797 = vrot.lane.b32.xlu0 %v769, 16
    %v798 = vpop.permute.xlu0 %797
    %799 = vrot.lane.b32.xlu0 %v774, 16
    %v800 = vpop.permute.xlu0 %799
    %805 = vrot.lane.b32.xlu0 %v779, 24
    %v806 = vpop.permute.xlu0 %805
    %807 = vrot.lane.b32.xlu0 %v784, 24
    %v808 = vpop.permute.xlu0 %807
    %v811 = vsel %vm431, %v749, %v790
    %v812 = vsel %vm431, %v754, %v792
    %vm813 = vcmask 130048
    %v814 = vsel %vm813, %v811, %v798
    %v815 = vsel %vm813, %v812, %v800
    %vm816 = vcmask 195584
    %v817 = vsel %vm816, %v814, %v806
    %v818 = vsel %vm816, %v815, %v808
    %v819 = vld [vmem:[%s6] sm:$0xff]
    %v820 = vld [vmem:[%s6 + $0x8] sm:$0xff]
    %v821 = vld [vmem:[%s6 + $0x10] sm:$0xff]
    %v822 = vld [vmem:[%s6 + $0x18] sm:$0xff]
    %v823 = vld [vmem:[%s7] sm:$0x1]
    %v825 = vlaneseq
    %v826 = vshrl.u32 %v825, 7
    %v827 = vsub.s32 0, %v826
    %v828 = vrot.slane %v823, %v827
    %v831 = vsel %vm69, %v817, 0
    %v834 = vsel %vm69, %v818, 0
    %836 = vmatprep.subr.mxu0 0.0
    %837 = vmatpush1.msra.mxu0 %v819
    %838 = vmatprep.subr.mxu0 0.0
    %839 = vmatpush1.msra.mxu0 %v820
    %840 = vmatprep.subr.mxu0 0.0
    %841 = vmatpush1.msra.mxu0 %v821
    %842 = vmatprep.subr.mxu0 0.0
    %843 = vmatpush1.msra.mxu0 %v822
    %844 = vmatprep.subr.mxu0 0.0
    %845 = vmatpush1.msra.mxu0 0.0
    %846 = vmatprep.subr.mxu0 0.0
    %847 = vmatpush1.msra.mxu0 0.0
    %848 = vmatprep.subr.mxu0 0.0
    %849 = vmatpush1.msra.mxu0 0.0
    %850 = vmatprep.subr.mxu0 0.0
    %851 = vmatpush1.msra.mxu0 0.0
    %852 = vmatprep.subr.mxu0 0.0
    %853 = vmatpush1.msra.mxu0 0.0
    %854 = vmatprep.subr.mxu0 0.0
    %855 = vmatpush1.msra.mxu0 0.0
    %856 = vmatprep.subr.mxu0 0.0
    %857 = vmatpush1.msra.mxu0 0.0
    %858 = vmatprep.subr.mxu0 0.0
    %859 = vmatpush1.msra.mxu0 0.0
    %860 = vmatprep.subr.mxu0 0.0
    %861 = vmatpush1.msra.mxu0 0.0
    %862 = vmatprep.subr.mxu0 0.0
    %863 = vmatpush1.msra.mxu0 0.0
    %864 = vmatprep.subr.mxu0 0.0
    %865 = vmatpush1.msra.mxu0 0.0
    %866 = vmatprep.subr.mxu0 0.0
    %867 = vmatpush1.msra.mxu0 0.0
    %868 = vmatprep.subr.mxu0 0.0
    %869 = vmatpush1.msra.mxu0 0.0
    %870 = vmatprep.subr.mxu0 0.0
    %871 = vmatpush1.msra.mxu0 0.0
    %872 = vmatprep.subr.mxu0 0.0
    %873 = vmatpush1.msra.mxu0 0.0
    %874 = vmatprep.subr.mxu0 0.0
    %875 = vmatpush1.msra.mxu0 0.0
    %876 = vmatprep.subr.mxu0 0.0
    %877 = vmatpush1.msra.mxu0 0.0
    %878 = vmatprep.subr.mxu0 0.0
    %879 = vmatpush1.msra.mxu0 0.0
    %880 = vmatprep.subr.mxu0 0.0
    %881 = vmatpush1.msra.mxu0 0.0
    %882 = vmatprep.subr.mxu0 0.0
    %883 = vmatpush1.msra.mxu0 0.0
    %884 = vmatprep.subr.mxu0 0.0
    %885 = vmatpush1.msra.mxu0 0.0
    %886 = vmatprep.subr.mxu0 0.0
    %887 = vmatpush1.msra.mxu0 0.0
    %888 = vmatprep.subr.mxu0 0.0
    %889 = vmatpush1.msra.mxu0 0.0
    %890 = vmatprep.subr.mxu0 0.0
    %891 = vmatpush1.msra.mxu0 0.0
    %892 = vmatprep.subr.mxu0 0.0
    %893 = vmatpush1.msra.mxu0 0.0
    %894 = vmatprep.subr.mxu0 0.0
    %895 = vmatpush1.msra.mxu0 0.0
    %896 = vmatprep.subr.mxu0 0.0
    %897 = vmatpush1.msra.mxu0 0.0
    %898 = vmatprep.subr.mxu0 0.0
    %899 = vmatpush1.msra.mxu0 0.0
    %900 = vmatprep.mubr.f32.mxu0 0.0
    %901 = vmatmul.mubr.f32.gmra.mrb[0].mxu0 %v831
    %v902 = vpop.f32.mrb[0].mxu0
    %v903 = vadd.f32 %v828, %v902
    %v904 = vpop.f32.mrb[0].mxu0
    %905 = vmatprep.mubr.f32.mxu0 0.0
    %906 = vmatmul.mubr.f32.gmra.mrb[0].mxu0 %v834
    %v907 = vpop.f32.mrb[0].mxu0
    %v908 = vadd.f32 %v828, %v907
    %v909 = vpop.f32.mrb[0].mxu0
    %910 = vdwg.mxu0
    %v911 = vadd.f32 %v57, %v903
    %v912 = vadd.f32 %v58, %v908
    %v913 = vld [vmem:[%s8] sm:$0x1]
    %v914 = vld [vmem:[%s9] sm:$0x1]
    %v915 = vsel %vm69, %v911, 0.0
    %916 = vadd.xlane.f32.xlu0 %v915
    %v917 = vpop.xlane.xlu0 %916
    %v918 = vsel %vm69, %v912, 0.0
    %919 = vadd.xlane.f32.xlu0 %v918
    %v920 = vpop.xlane.xlu0 %919
    %v921 = vmul.f32 %v917, %v76
    %v922 = vmul.f32 %v920, %v76
    %v923 = vsub.f32 %v911, %v921
    %v924 = vsub.f32 %v912, %v922
    %v925 = vmul.f32 %v923, %v923
    %v926 = vmul.f32 %v924, %v924
    %v927 = vsel %vm69, %v925, 0.0
    %928 = vadd.xlane.f32.xlu0 %v927
    %v929 = vpop.xlane.xlu0 %928
    %v930 = vsel %vm69, %v926, 0.0
    %931 = vadd.xlane.f32.xlu0 %v930
    %v932 = vpop.xlane.xlu0 %931
    %v933 = vmul.f32 %v929, %v76
    %v934 = vmul.f32 %v932, %v76
    %v935 = vadd.f32 %v933, 1e-05
    %v936 = vadd.f32 %v934, 1e-05
    %v937 = vrsqrt.pop %v935
    %v938 = vrsqrt.pop %v936
    %v939 = vmul.f32 %v923, %v937
    %v940 = vmul.f32 %v924, %v938
    %v942 = vlaneseq
    %v943 = vshrl.u32 %v942, 7
    %v944 = vsub.s32 0, %v943
    %v945 = vrot.slane %v913, %v944
    %v947 = vmul.f32 %v939, %v945
    %v948 = vmul.f32 %v940, %v945
    %v950 = vlaneseq
    %v951 = vshrl.u32 %v950, 7
    %v952 = vsub.s32 0, %v951
    %v953 = vrot.slane %v914, %v952
    %v955 = vadd.f32 %v947, %v953
    %v956 = vadd.f32 %v948, %v953
    %v957 = vld [vmem:[%s10] sm:$0xff]
    %v958 = vld [vmem:[%s10 + $0x8] sm:$0xff]
    %v959 = vld [vmem:[%s10 + $0x10] sm:$0xff]
    %v960 = vld [vmem:[%s10 + $0x18] sm:$0xff]
    %v961 = vld [vmem:[%s11] sm:$0x1]
    %v963 = vlaneseq
    %v964 = vshrl.u32 %v963, 7
    %v965 = vsub.s32 0, %v964
    %v966 = vrot.slane %v961, %v965
    %v969 = vsel %vm69, %v955, 0
    %v972 = vsel %vm69, %v956, 0
    %974 = vmatprep.subr.mxu0 0.0
    %975 = vmatpush1.msra.mxu0 %v957
    %976 = vmatprep.subr.mxu0 0.0
    %977 = vmatpush1.msra.mxu0 %v958
    %978 = vmatprep.subr.mxu0 0.0
    %979 = vmatpush1.msra.mxu0 %v959
    %980 = vmatprep.subr.mxu0 0.0
    %981 = vmatpush1.msra.mxu0 %v960
    %982 = vmatprep.subr.mxu0 0.0
    %983 = vmatpush1.msra.mxu0 0.0
    %984 = vmatprep.subr.mxu0 0.0
    %985 = vmatpush1.msra.mxu0 0.0
    %986 = vmatprep.subr.mxu0 0.0
    %987 = vmatpush1.msra.mxu0 0.0
    %988 = vmatprep.subr.mxu0 0.0
    %989 = vmatpush1.msra.mxu0 0.0
    %990 = vmatprep.subr.mxu0 0.0
    %991 = vmatpush1.msra.mxu0 0.0
    %992 = vmatprep.subr.mxu0 0.0
    %993 = vmatpush1.msra.mxu0 0.0
    %994 = vmatprep.subr.mxu0 0.0
    %995 = vmatpush1.msra.mxu0 0.0
    %996 = vmatprep.subr.mxu0 0.0
    %997 = vmatpush1.msra.mxu0 0.0
    %998 = vmatprep.subr.mxu0 0.0
    %999 = vmatpush1.msra.mxu0 0.0
    %1000 = vmatprep.subr.mxu0 0.0
    %1001 = vmatpush1.msra.mxu0 0.0
    %1002 = vmatprep.subr.mxu0 0.0
    %1003 = vmatpush1.msra.mxu0 0.0
    %1004 = vmatprep.subr.mxu0 0.0
    %1005 = vmatpush1.msra.mxu0 0.0
    %1006 = vmatprep.subr.mxu0 0.0
    %1007 = vmatpush1.msra.mxu0 0.0
    %1008 = vmatprep.subr.mxu0 0.0
    %1009 = vmatpush1.msra.mxu0 0.0
    %1010 = vmatprep.subr.mxu0 0.0
    %1011 = vmatpush1.msra.mxu0 0.0
    %1012 = vmatprep.subr.mxu0 0.0
    %1013 = vmatpush1.msra.mxu0 0.0
    %1014 = vmatprep.subr.mxu0 0.0
    %1015 = vmatpush1.msra.mxu0 0.0
    %1016 = vmatprep.subr.mxu0 0.0
    %1017 = vmatpush1.msra.mxu0 0.0
    %1018 = vmatprep.subr.mxu0 0.0
    %1019 = vmatpush1.msra.mxu0 0.0
    %1020 = vmatprep.subr.mxu0 0.0
    %1021 = vmatpush1.msra.mxu0 0.0
    %1022 = vmatprep.subr.mxu0 0.0
    %1023 = vmatpush1.msra.mxu0 0.0
    %1024 = vmatprep.subr.mxu0 0.0
    %1025 = vmatpush1.msra.mxu0 0.0
    %1026 = vmatprep.subr.mxu0 0.0
    %1027 = vmatpush1.msra.mxu0 0.0
    %1028 = vmatprep.subr.mxu0 0.0
    %1029 = vmatpush1.msra.mxu0 0.0
    %1030 = vmatprep.subr.mxu0 0.0
    %1031 = vmatpush1.msra.mxu0 0.0
    %1032 = vmatprep.subr.mxu0 0.0
    %1033 = vmatpush1.msra.mxu0 0.0
    %1034 = vmatprep.subr.mxu0 0.0
    %1035 = vmatpush1.msra.mxu0 0.0
    %1036 = vmatprep.subr.mxu0 0.0
    %1037 = vmatpush1.msra.mxu0 0.0
    %1038 = vmatprep.mubr.f32.mxu0 0.0
    %1039 = vmatmul.mubr.f32.gmra.mrb[0].mxu0 %v969
    %v1040 = vpop.f32.mrb[0].mxu0
    %v1041 = vadd.f32 %v966, %v1040
    %v1042 = vpop.f32.mrb[0].mxu0
    %1043 = vmatprep.mubr.f32.mxu0 0.0
    %1044 = vmatmul.mubr.f32.gmra.mrb[0].mxu0 %v972
    %v1045 = vpop.f32.mrb[0].mxu0
    %v1046 = vadd.f32 %v966, %v1045
    %v1047 = vpop.f32.mrb[0].mxu0
    %1048 = vdwg.mxu0
    %v1049 = vmul.f32 %v1041, 0.5
    %v1050 = vmul.f32 %v1046, 0.5
    %v1051 = vmul.f32 %v1041, 0.70710677
    %v1052 = vmul.f32 %v1046, 0.70710677
    %v1053 = vand.u32 2147483647, %v1051
    %v1054 = vand.u32 2147483647, %v1052
    %v1055 = vmul.f32 %v1053, 0.3275911
    %v1056 = vmul.f32 %v1054, 0.3275911
    %v1057 = vadd.f32 %v1055, 1.0
    %v1058 = vadd.f32 %v1056, 1.0
    %v1059 = vrcp.pop %v1057
    %v1060 = vmul.f32 1.0, %v1059
    %v1061 = vrcp.pop %v1058
    %v1062 = vmul.f32 1.0, %v1061
    %v1063 = vmul.f32 %v1060, 1.0614054
    %v1064 = vmul.f32 %v1062, 1.0614054
    %v1065 = vadd.f32 %v1063, -1.4531521
    %v1066 = vadd.f32 %v1064, -1.4531521
    %v1067 = vmul.f32 %v1065, %v1060
    %v1068 = vmul.f32 %v1066, %v1062
    %v1069 = vadd.f32 %v1067, 1.4214138
    %v1070 = vadd.f32 %v1068, 1.4214138
    %v1071 = vmul.f32 %v1069, %v1060
    %v1072 = vmul.f32 %v1070, %v1062
    %v1073 = vadd.f32 %v1071, -0.28449672
    %v1074 = vadd.f32 %v1072, -0.28449672
    %v1075 = vmul.f32 %v1073, %v1060
    %v1076 = vmul.f32 %v1074, %v1062
    %v1077 = vadd.f32 %v1075, 0.2548296
    %v1078 = vadd.f32 %v1076, 0.2548296
    %v1079 = vmul.f32 %v1077, %v1060
    %v1080 = vmul.f32 %v1078, %v1062
    %v1081 = vsub.f32 0.0, %v1053
    %v1082 = vsub.f32 0.0, %v1054
    %v1083 = vmul.f32 %v1081, %v1053
    %v1084 = vmul.f32 %v1082, %v1054
    %v1085 = vmul.f32 %v1083, 1.442695
    %v1086 = vpow.pop %v1085
    %v1087 = vmul.f32 %v1084, 1.442695
    %v1088 = vpow.pop %v1087
    %v1089 = vmul.f32 %v1079, %v1086
    %v1090 = vmul.f32 %v1080, %v1088
    %v1091 = vsub.f32 1.0, %v1089
    %v1092 = vsub.f32 1.0, %v1090
    %vm1093 = vcmp.ge.f32.partialorder %v1051, 0.0
    %vm1094 = vcmp.ge.f32.partialorder %v1052, 0.0
    %v1095 = vsub.f32 0.0, %v1091
    %v1096 = vsub.f32 0.0, %v1092
    %v1097 = vsel %vm1093, %v1091, %v1095
    %v1098 = vsel %vm1094, %v1092, %v1096
    %v1099 = vadd.f32 %v1097, 1.0
    %v1100 = vadd.f32 %v1098, 1.0
    %v1101 = vmul.f32 %v1049, %v1099
    %v1102 = vmul.f32 %v1050, %v1100
    %v1103 = vld [vmem:[%s12] sm:$0xff]
    %v1104 = vld [vmem:[%s12 + $0x8] sm:$0xff]
    %v1105 = vld [vmem:[%s12 + $0x10] sm:$0xff]
    %v1106 = vld [vmem:[%s12 + $0x18] sm:$0xff]
    %v1107 = vld [vmem:[%s12 + $0x20] sm:$0xff]
    %v1108 = vld [vmem:[%s12 + $0x28] sm:$0xff]
    %v1109 = vld [vmem:[%s12 + $0x30] sm:$0xff]
    %v1110 = vld [vmem:[%s12 + $0x38] sm:$0xff]
    %v1111 = vld [vmem:[%s12 + $0x40] sm:$0xff]
    %v1112 = vld [vmem:[%s12 + $0x48] sm:$0xff]
    %v1113 = vld [vmem:[%s12 + $0x50] sm:$0xff]
    %v1114 = vld [vmem:[%s12 + $0x58] sm:$0xff]
    %v1115 = vld [vmem:[%s12 + $0x60] sm:$0xff]
    %v1116 = vld [vmem:[%s12 + $0x68] sm:$0xff]
    %v1117 = vld [vmem:[%s12 + $0x70] sm:$0xff]
    %v1118 = vld [vmem:[%s12 + $0x78] sm:$0xff]
    %v1119 = vld [vmem:[%s13] sm:$0x1]
    %v1121 = vlaneseq
    %v1122 = vshrl.u32 %v1121, 7
    %v1123 = vsub.s32 0, %v1122
    %v1124 = vrot.slane %v1119, %v1123
    %1126 = vmatprep.subr.mxu0 0.0
    %1127 = vmatpush1.msra.mxu0 %v1103
    %1128 = vmatprep.subr.mxu0 0.0
    %1129 = vmatpush1.msra.mxu0 %v1104
    %1130 = vmatprep.subr.mxu0 0.0
    %1131 = vmatpush1.msra.mxu0 %v1105
    %1132 = vmatprep.subr.mxu0 0.0
    %1133 = vmatpush1.msra.mxu0 %v1106
    %1134 = vmatprep.subr.mxu0 0.0
    %1135 = vmatpush1.msra.mxu0 %v1107
    %1136 = vmatprep.subr.mxu0 0.0
    %1137 = vmatpush1.msra.mxu0 %v1108
    %1138 = vmatprep.subr.mxu0 0.0
    %1139 = vmatpush1.msra.mxu0 %v1109
    %1140 = vmatprep.subr.mxu0 0.0
    %1141 = vmatpush1.msra.mxu0 %v1110
    %1142 = vmatprep.subr.mxu0 0.0
    %1143 = vmatpush1.msra.mxu0 %v1111
    %1144 = vmatprep.subr.mxu0 0.0
    %1145 = vmatpush1.msra.mxu0 %v1112
    %1146 = vmatprep.subr.mxu0 0.0
    %1147 = vmatpush1.msra.mxu0 %v1113
    %1148 = vmatprep.subr.mxu0 0.0
    %1149 = vmatpush1.msra.mxu0 %v1114
    %1150 = vmatprep.subr.mxu0 0.0
    %1151 = vmatpush1.msra.mxu0 %v1115
    %1152 = vmatprep.subr.mxu0 0.0
    %1153 = vmatpush1.msra.mxu0 %v1116
    %1154 = vmatprep.subr.mxu0 0.0
    %1155 = vmatpush1.msra.mxu0 %v1117
    %1156 = vmatprep.subr.mxu0 0.0
    %1157 = vmatpush1.msra.mxu0 %v1118
    %1158 = vmatprep.subr.mxu0 0.0
    %1159 = vmatpush1.msra.mxu0 0.0
    %1160 = vmatprep.subr.mxu0 0.0
    %1161 = vmatpush1.msra.mxu0 0.0
    %1162 = vmatprep.subr.mxu0 0.0
    %1163 = vmatpush1.msra.mxu0 0.0
    %1164 = vmatprep.subr.mxu0 0.0
    %1165 = vmatpush1.msra.mxu0 0.0
    %1166 = vmatprep.subr.mxu0 0.0
    %1167 = vmatpush1.msra.mxu0 0.0
    %1168 = vmatprep.subr.mxu0 0.0
    %1169 = vmatpush1.msra.mxu0 0.0
    %1170 = vmatprep.subr.mxu0 0.0
    %1171 = vmatpush1.msra.mxu0 0.0
    %1172 = vmatprep.subr.mxu0 0.0
    %1173 = vmatpush1.msra.mxu0 0.0
    %1174 = vmatprep.subr.mxu0 0.0
    %1175 = vmatpush1.msra.mxu0 0.0
    %1176 = vmatprep.subr.mxu0 0.0
    %1177 = vmatpush1.msra.mxu0 0.0
    %1178 = vmatprep.subr.mxu0 0.0
    %1179 = vmatpush1.msra.mxu0 0.0
    %1180 = vmatprep.subr.mxu0 0.0
    %1181 = vmatpush1.msra.mxu0 0.0
    %1182 = vmatprep.subr.mxu0 0.0
    %1183 = vmatpush1.msra.mxu0 0.0
    %1184 = vmatprep.subr.mxu0 0.0
    %1185 = vmatpush1.msra.mxu0 0.0
    %1186 = vmatprep.subr.mxu0 0.0
    %1187 = vmatpush1.msra.mxu0 0.0
    %1188 = vmatprep.subr.mxu0 0.0
    %1189 = vmatpush1.msra.mxu0 0.0
    %1190 = vmatprep.mubr.f32.mxu0 0.0
    %1191 = vmatmul.mubr.f32.gmra.mrb[0].mxu0 %v1101
    %v1192 = vpop.f32.mrb[0].mxu0
    %v1193 = vadd.f32 %v1124, %v1192
    %v1194 = vpop.f32.mrb[0].mxu0
    %1195 = vmatprep.mubr.f32.mxu0 0.0
    %1196 = vmatmul.mubr.f32.gmra.mrb[0].mxu0 %v1102
    %v1197 = vpop.f32.mrb[0].mxu0
    %v1198 = vadd.f32 %v1124, %v1197
    %v1199 = vpop.f32.mrb[0].mxu0
    %1200 = vdwg.mxu0
    %v1201 = vadd.f32 %v911, %v1193
    %v1202 = vadd.f32 %v912, %v1198
    %s1203 = scalar_lea.vmem %s2, 1
    %v1204 = vld [vmem:[%s1203] sm:$0x1]
    %s1205 = scalar_lea.vmem %s3, 1
    %v1206 = vld [vmem:[%s1205] sm:$0x1]
    %v1207 = vsel %vm69, %v1201, 0.0
    %1208 = vadd.xlane.f32.xlu0 %v1207
    %v1209 = vpop.xlane.xlu0 %1208
    %v1210 = vsel %vm69, %v1202, 0.0
    %1211 = vadd.xlane.f32.xlu0 %v1210
    %v1212 = vpop.xlane.xlu0 %1211
    %v1213 = vmul.f32 %v1209, %v76
    %v1214 = vmul.f32 %v1212, %v76
    %v1215 = vsub.f32 %v1201, %v1213
    %v1216 = vsub.f32 %v1202, %v1214
    %v1217 = vmul.f32 %v1215, %v1215
    %v1218 = vmul.f32 %v1216, %v1216
    %v1219 = vsel %vm69, %v1217, 0.0
    %1220 = vadd.xlane.f32.xlu0 %v1219
    %v1221 = vpop.xlane.xlu0 %1220
    %v1222 = vsel %vm69, %v1218, 0.0
    %1223 = vadd.xlane.f32.xlu0 %v1222
    %v1224 = vpop.xlane.xlu0 %1223
    %v1225 = vmul.f32 %v1221, %v76
    %v1226 = vmul.f32 %v1224, %v76
    %v1227 = vadd.f32 %v1225, 1e-05
    %v1228 = vadd.f32 %v1226, 1e-05
    %v1229 = vrsqrt.pop %v1227
    %v1230 = vrsqrt.pop %v1228
    %v1231 = vmul.f32 %v1215, %v1229
    %v1232 = vmul.f32 %v1216, %v1230
    %v1234 = vlaneseq
    %v1235 = vshrl.u32 %v1234, 7
    %v1236 = vsub.s32 0, %v1235
    %v1237 = vrot.slane %v1204, %v1236
    %v1239 = vmul.f32 %v1231, %v1237
    %v1240 = vmul.f32 %v1232, %v1237
    %v1242 = vlaneseq
    %v1243 = vshrl.u32 %v1242, 7
    %v1244 = vsub.s32 0, %v1243
    %v1245 = vrot.slane %v1206, %v1244
    %v1247 = vadd.f32 %v1239, %v1245
    %v1248 = vadd.f32 %v1240, %v1245
    %s1249 = scalar_lea.vmem %s4, 96
    %v1250 = vld [vmem:[%s1249] sm:$0xff]
    %v1251 = vld [vmem:[%s1249 + $0x8] sm:$0xff]
    %v1252 = vld [vmem:[%s1249 + $0x10] sm:$0xff]
    %v1253 = vld [vmem:[%s1249 + $0x18] sm:$0xff]
    %s1254 = scalar_lea.vmem %s5, 3
    %v1255 = vld [vmem:[%s1254] sm:$0x1]
    %v1257 = vlaneseq
    %v1258 = vshrl.u32 %v1257, 7
    %v1259 = vsub.s32 0, %v1258
    %v1260 = vrot.slane %v1255, %v1259
    %v1263 = vsel %vm69, %v1247, 0
    %v1266 = vsel %vm69, %v1248, 0
    %1268 = vmatprep.subr.mxu0 0.0
    %1269 = vmatpush1.msra.mxu0 %v1250
    %1270 = vmatprep.subr.mxu0 0.0
    %1271 = vmatpush1.msra.mxu0 %v1251
    %1272 = vmatprep.subr.mxu0 0.0
    %1273 = vmatpush1.msra.mxu0 %v1252
    %1274 = vmatprep.subr.mxu0 0.0
    %1275 = vmatpush1.msra.mxu0 %v1253
    %1276 = vmatprep.subr.mxu0 0.0
    %1277 = vmatpush1.msra.mxu0 0.0
    %1278 = vmatprep.subr.mxu0 0.0
    %1279 = vmatpush1.msra.mxu0 0.0
    %1280 = vmatprep.subr.mxu0 0.0
    %1281 = vmatpush1.msra.mxu0 0.0
    %1282 = vmatprep.subr.mxu0 0.0
    %1283 = vmatpush1.msra.mxu0 0.0
    %1284 = vmatprep.subr.mxu0 0.0
    %1285 = vmatpush1.msra.mxu0 0.0
    %1286 = vmatprep.subr.mxu0 0.0
    %1287 = vmatpush1.msra.mxu0 0.0
    %1288 = vmatprep.subr.mxu0 0.0
    %1289 = vmatpush1.msra.mxu0 0.0
    %1290 = vmatprep.subr.mxu0 0.0
    %1291 = vmatpush1.msra.mxu0 0.0
    %1292 = vmatprep.subr.mxu0 0.0
    %1293 = vmatpush1.msra.mxu0 0.0
    %1294 = vmatprep.subr.mxu0 0.0
    %1295 = vmatpush1.msra.mxu0 0.0
    %1296 = vmatprep.subr.mxu0 0.0
    %1297 = vmatpush1.msra.mxu0 0.0
    %1298 = vmatprep.subr.mxu0 0.0
    %1299 = vmatpush1.msra.mxu0 0.0
    %1300 = vmatprep.subr.mxu0 0.0
    %1301 = vmatpush1.msra.mxu0 0.0
    %1302 = vmatprep.subr.mxu0 0.0
    %1303 = vmatpush1.msra.mxu0 0.0
    %1304 = vmatprep.subr.mxu0 0.0
    %1305 = vmatpush1.msra.mxu0 0.0
    %1306 = vmatprep.subr.mxu0 0.0
    %1307 = vmatpush1.msra.mxu0 0.0
    %1308 = vmatprep.subr.mxu0 0.0
    %1309 = vmatpush1.msra.mxu0 0.0
    %1310 = vmatprep.subr.mxu0 0.0
    %1311 = vmatpush1.msra.mxu0 0.0
    %1312 = vmatprep.subr.mxu0 0.0
    %1313 = vmatpush1.msra.mxu0 0.0
    %1314 = vmatprep.subr.mxu0 0.0
    %1315 = vmatpush1.msra.mxu0 0.0
    %1316 = vmatprep.subr.mxu0 0.0
    %1317 = vmatpush1.msra.mxu0 0.0
    %1318 = vmatprep.subr.mxu0 0.0
    %1319 = vmatpush1.msra.mxu0 0.0
    %1320 = vmatprep.subr.mxu0 0.0
    %1321 = vmatpush1.msra.mxu0 0.0
    %1322 = vmatprep.subr.mxu0 0.0
    %1323 = vmatpush1.msra.mxu0 0.0
    %1324 = vmatprep.subr.mxu0 0.0
    %1325 = vmatpush1.msra.mxu0 0.0
    %1326 = vmatprep.subr.mxu0 0.0
    %1327 = vmatpush1.msra.mxu0 0.0
    %1328 = vmatprep.subr.mxu0 0.0
    %1329 = vmatpush1.msra.mxu0 0.0
    %1330 = vmatprep.subr.mxu0 0.0
    %1331 = vmatpush1.msra.mxu0 0.0
    %1332 = vmatprep.mubr.f32.mxu0 0.0
    %1333 = vmatmul.mubr.f32.gmra.mrb[0].mxu0 %v1263
    %v1334 = vpop.f32.mrb[0].mxu0
    %v1335 = vadd.f32 %v1260, %v1334
    %v1336 = vpop.f32.mrb[0].mxu0
    %1337 = vmatprep.mubr.f32.mxu0 0.0
    %1338 = vmatmul.mubr.f32.gmra.mrb[0].mxu0 %v1266
    %v1339 = vpop.f32.mrb[0].mxu0
    %v1340 = vadd.f32 %v1260, %v1339
    %v1341 = vpop.f32.mrb[0].mxu0
    %1342 = vdwg.mxu0
    %v1343 = vmul.f32 %v1335, 0.35355338
    %v1344 = vmul.f32 %v1340, 0.35355338
    %s1345 = scalar_lea.vmem %s4, 128
    %v1346 = vld [vmem:[%s1345] sm:$0xff]
    %v1347 = vld [vmem:[%s1345 + $0x8] sm:$0xff]
    %v1348 = vld [vmem:[%s1345 + $0x10] sm:$0xff]
    %v1349 = vld [vmem:[%s1345 + $0x18] sm:$0xff]
    %s1350 = scalar_lea.vmem %s5, 4
    %v1351 = vld [vmem:[%s1350] sm:$0x1]
    %v1353 = vlaneseq
    %v1354 = vshrl.u32 %v1353, 7
    %v1355 = vsub.s32 0, %v1354
    %v1356 = vrot.slane %v1351, %v1355
    %1358 = vmatprep.subr.mxu0 0.0
    %1359 = vmatpush1.msra.mxu0 %v1346
    %1360 = vmatprep.subr.mxu0 0.0
    %1361 = vmatpush1.msra.mxu0 %v1347
    %1362 = vmatprep.subr.mxu0 0.0
    %1363 = vmatpush1.msra.mxu0 %v1348
    %1364 = vmatprep.subr.mxu0 0.0
    %1365 = vmatpush1.msra.mxu0 %v1349
    %1366 = vmatprep.subr.mxu0 0.0
    %1367 = vmatpush1.msra.mxu0 0.0
    %1368 = vmatprep.subr.mxu0 0.0
    %1369 = vmatpush1.msra.mxu0 0.0
    %1370 = vmatprep.subr.mxu0 0.0
    %1371 = vmatpush1.msra.mxu0 0.0
    %1372 = vmatprep.subr.mxu0 0.0
    %1373 = vmatpush1.msra.mxu0 0.0
    %1374 = vmatprep.subr.mxu0 0.0
    %1375 = vmatpush1.msra.mxu0 0.0
    %1376 = vmatprep.subr.mxu0 0.0
    %1377 = vmatpush1.msra.mxu0 0.0
    %1378 = vmatprep.subr.mxu0 0.0
    %1379 = vmatpush1.msra.mxu0 0.0
    %1380 = vmatprep.subr.mxu0 0.0
    %1381 = vmatpush1.msra.mxu0 0.0
    %1382 = vmatprep.subr.mxu0 0.0
    %1383 = vmatpush1.msra.mxu0 0.0
    %1384 = vmatprep.subr.mxu0 0.0
    %1385 = vmatpush1.msra.mxu0 0.0
    %1386 = vmatprep.subr.mxu0 0.0
    %1387 = vmatpush1.msra.mxu0 0.0
    %1388 = vmatprep.subr.mxu0 0.0
    %1389 = vmatpush1.msra.mxu0 0.0
    %1390 = vmatprep.subr.mxu0 0.0
    %1391 = vmatpush1.msra.mxu0 0.0
    %1392 = vmatprep.subr.mxu0 0.0
    %1393 = vmatpush1.msra.mxu0 0.0
    %1394 = vmatprep.subr.mxu0 0.0
    %1395 = vmatpush1.msra.mxu0 0.0
    %1396 = vmatprep.subr.mxu0 0.0
    %1397 = vmatpush1.msra.mxu0 0.0
    %1398 = vmatprep.subr.mxu0 0.0
    %1399 = vmatpush1.msra.mxu0 0.0
    %1400 = vmatprep.subr.mxu0 0.0
    %1401 = vmatpush1.msra.mxu0 0.0
    %1402 = vmatprep.subr.mxu0 0.0
    %1403 = vmatpush1.msra.mxu0 0.0
    %1404 = vmatprep.subr.mxu0 0.0
    %1405 = vmatpush1.msra.mxu0 0.0
    %1406 = vmatprep.subr.mxu0 0.0
    %1407 = vmatpush1.msra.mxu0 0.0
    %1408 = vmatprep.subr.mxu0 0.0
    %1409 = vmatpush1.msra.mxu0 0.0
    %1410 = vmatprep.subr.mxu0 0.0
    %1411 = vmatpush1.msra.mxu0 0.0
    %1412 = vmatprep.subr.mxu0 0.0
    %1413 = vmatpush1.msra.mxu0 0.0
    %1414 = vmatprep.subr.mxu0 0.0
    %1415 = vmatpush1.msra.mxu0 0.0
    %1416 = vmatprep.subr.mxu0 0.0
    %1417 = vmatpush1.msra.mxu0 0.0
    %1418 = vmatprep.subr.mxu0 0.0
    %1419 = vmatpush1.msra.mxu0 0.0
    %1420 = vmatprep.subr.mxu0 0.0
    %1421 = vmatpush1.msra.mxu0 0.0
    %1422 = vmatprep.mubr.f32.mxu0 0.0
    %1423 = vmatmul.mubr.f32.gmra.mrb[0].mxu0 %v1263
    %v1424 = vpop.f32.mrb[0].mxu0
    %v1425 = vadd.f32 %v1356, %v1424
    %v1426 = vpop.f32.mrb[0].mxu0
    %1427 = vmatprep.mubr.f32.mxu0 0.0
    %1428 = vmatmul.mubr.f32.gmra.mrb[0].mxu0 %v1266
    %v1429 = vpop.f32.mrb[0].mxu0
    %v1430 = vadd.f32 %v1356, %v1429
    %v1431 = vpop.f32.mrb[0].mxu0
    %1432 = vdwg.mxu0
    %s1433 = scalar_lea.vmem %s4, 160
    %v1434 = vld [vmem:[%s1433] sm:$0xff]
    %v1435 = vld [vmem:[%s1433 + $0x8] sm:$0xff]
    %v1436 = vld [vmem:[%s1433 + $0x10] sm:$0xff]
    %v1437 = vld [vmem:[%s1433 + $0x18] sm:$0xff]
    %s1438 = scalar_lea.vmem %s5, 5
    %v1439 = vld [vmem:[%s1438] sm:$0x1]
    %v1441 = vlaneseq
    %v1442 = vshrl.u32 %v1441, 7
    %v1443 = vsub.s32 0, %v1442
    %v1444 = vrot.slane %v1439, %v1443
    %1446 = vmatprep.subr.mxu0 0.0
    %1447 = vmatpush1.msra.mxu0 %v1434
    %1448 = vmatprep.subr.mxu0 0.0
    %1449 = vmatpush1.msra.mxu0 %v1435
    %1450 = vmatprep.subr.mxu0 0.0
    %1451 = vmatpush1.msra.mxu0 %v1436
    %1452 = vmatprep.subr.mxu0 0.0
    %1453 = vmatpush1.msra.mxu0 %v1437
    %1454 = vmatprep.subr.mxu0 0.0
    %1455 = vmatpush1.msra.mxu0 0.0
    %1456 = vmatprep.subr.mxu0 0.0
    %1457 = vmatpush1.msra.mxu0 0.0
    %1458 = vmatprep.subr.mxu0 0.0
    %1459 = vmatpush1.msra.mxu0 0.0
    %1460 = vmatprep.subr.mxu0 0.0
    %1461 = vmatpush1.msra.mxu0 0.0
    %1462 = vmatprep.subr.mxu0 0.0
    %1463 = vmatpush1.msra.mxu0 0.0
    %1464 = vmatprep.subr.mxu0 0.0
    %1465 = vmatpush1.msra.mxu0 0.0
    %1466 = vmatprep.subr.mxu0 0.0
    %1467 = vmatpush1.msra.mxu0 0.0
    %1468 = vmatprep.subr.mxu0 0.0
    %1469 = vmatpush1.msra.mxu0 0.0
    %1470 = vmatprep.subr.mxu0 0.0
    %1471 = vmatpush1.msra.mxu0 0.0
    %1472 = vmatprep.subr.mxu0 0.0
    %1473 = vmatpush1.msra.mxu0 0.0
    %1474 = vmatprep.subr.mxu0 0.0
    %1475 = vmatpush1.msra.mxu0 0.0
    %1476 = vmatprep.subr.mxu0 0.0
    %1477 = vmatpush1.msra.mxu0 0.0
    %1478 = vmatprep.subr.mxu0 0.0
    %1479 = vmatpush1.msra.mxu0 0.0
    %1480 = vmatprep.subr.mxu0 0.0
    %1481 = vmatpush1.msra.mxu0 0.0
    %1482 = vmatprep.subr.mxu0 0.0
    %1483 = vmatpush1.msra.mxu0 0.0
    %1484 = vmatprep.subr.mxu0 0.0
    %1485 = vmatpush1.msra.mxu0 0.0
    %1486 = vmatprep.subr.mxu0 0.0
    %1487 = vmatpush1.msra.mxu0 0.0
    %1488 = vmatprep.subr.mxu0 0.0
    %1489 = vmatpush1.msra.mxu0 0.0
    %1490 = vmatprep.subr.mxu0 0.0
    %1491 = vmatpush1.msra.mxu0 0.0
    %1492 = vmatprep.subr.mxu0 0.0
    %1493 = vmatpush1.msra.mxu0 0.0
    %1494 = vmatprep.subr.mxu0 0.0
    %1495 = vmatpush1.msra.mxu0 0.0
    %1496 = vmatprep.subr.mxu0 0.0
    %1497 = vmatpush1.msra.mxu0 0.0
    %1498 = vmatprep.subr.mxu0 0.0
    %1499 = vmatpush1.msra.mxu0 0.0
    %1500 = vmatprep.subr.mxu0 0.0
    %1501 = vmatpush1.msra.mxu0 0.0
    %1502 = vmatprep.subr.mxu0 0.0
    %1503 = vmatpush1.msra.mxu0 0.0
    %1504 = vmatprep.subr.mxu0 0.0
    %1505 = vmatpush1.msra.mxu0 0.0
    %1506 = vmatprep.subr.mxu0 0.0
    %1507 = vmatpush1.msra.mxu0 0.0
    %1508 = vmatprep.subr.mxu0 0.0
    %1509 = vmatpush1.msra.mxu0 0.0
    %1510 = vmatprep.mubr.f32.mxu0 0.0
    %1511 = vmatmul.mubr.f32.gmra.mrb[0].mxu0 %v1263
    %v1512 = vpop.f32.mrb[0].mxu0
    %v1513 = vadd.f32 %v1444, %v1512
    %v1514 = vpop.f32.mrb[0].mxu0
    %1515 = vmatprep.mubr.f32.mxu0 0.0
    %1516 = vmatmul.mubr.f32.gmra.mrb[0].mxu0 %v1266
    %v1517 = vpop.f32.mrb[0].mxu0
    %v1518 = vadd.f32 %v1444, %v1517
    %v1519 = vpop.f32.mrb[0].mxu0
    %1520 = vdwg.mxu0
    %1523 = vrot.lane.b32.xlu0 %v1343, 120
    %v1524 = vpop.permute.xlu0 %1523
    %1525 = vrot.lane.b32.xlu0 %v1344, 120
    %v1526 = vpop.permute.xlu0 %1525
    %1527 = vrot.lane.b32.xlu0 %v1343, 112
    %v1528 = vpop.permute.xlu0 %1527
    %1529 = vrot.lane.b32.xlu0 %v1344, 112
    %v1530 = vpop.permute.xlu0 %1529
    %1531 = vrot.lane.b32.xlu0 %v1343, 104
    %v1532 = vpop.permute.xlu0 %1531
    %1533 = vrot.lane.b32.xlu0 %v1344, 104
    %v1534 = vpop.permute.xlu0 %1533
    %1537 = vrot.lane.b32.xlu0 %v1425, 120
    %v1538 = vpop.permute.xlu0 %1537
    %1539 = vrot.lane.b32.xlu0 %v1430, 120
    %v1540 = vpop.permute.xlu0 %1539
    %1541 = vrot.lane.b32.xlu0 %v1425, 112
    %v1542 = vpop.permute.xlu0 %1541
    %1543 = vrot.lane.b32.xlu0 %v1430, 112
    %v1544 = vpop.permute.xlu0 %1543
    %1545 = vrot.lane.b32.xlu0 %v1425, 104
    %v1546 = vpop.permute.xlu0 %1545
    %1547 = vrot.lane.b32.xlu0 %v1430, 104
    %v1548 = vpop.permute.xlu0 %1547
    %1551 = vrot.lane.b32.xlu0 %v1513, 120
    %v1552 = vpop.permute.xlu0 %1551
    %1553 = vrot.lane.b32.xlu0 %v1518, 120
    %v1554 = vpop.permute.xlu0 %1553
    %1557 = vrot.lane.b32.xlu0 %v1513, 112
    %v1558 = vpop.permute.xlu0 %1557
    %1559 = vrot.lane.b32.xlu0 %v1518, 112
    %v1560 = vpop.permute.xlu0 %1559
    %1563 = vrot.lane.b32.xlu0 %v1513, 104
    %v1564 = vpop.permute.xlu0 %1563
    %1565 = vrot.lane.b32.xlu0 %v1518, 104
    %v1566 = vpop.permute.xlu0 %1565
    %v1569 = vsel %vm431, %v1343, 0
    %v1571 = vsel %vm431, %v1344, 0
    %v1573 = vsel %vm431, %v1524, 0
    %v1575 = vsel %vm431, %v1526, 0
    %v1577 = vsel %vm431, %v1528, 0
    %v1579 = vsel %vm431, %v1530, 0
    %v1581 = vsel %vm431, %v1532, 0
    %v1583 = vsel %vm431, %v1534, 0
    %v1585 = vsel %vm431, %v1425, 0
    %v1587 = vsel %vm431, %v1430, 0
    %v1589 = vsel %vm431, %v1538, 0
    %v1591 = vsel %vm431, %v1540, 0
    %v1593 = vsel %vm431, %v1542, 0
    %v1595 = vsel %vm431, %v1544, 0
    %v1597 = vsel %vm431, %v1546, 0
    %v1599 = vsel %vm431, %v1548, 0
    %1601 = vmatprep.subr.mxu0 0.0
    %1602 = vmatpush1.xpose.msra.mxu0 %v1585
    %1603 = vmatprep.subr.mxu0 0.0
    %1604 = vmatpush1.xpose.msra.mxu0 %v1587
    %1605 = vmatprep.subr.mxu0 0.0
    %1606 = vmatpush1.xpose.msra.mxu0 %v1589
    %1607 = vmatprep.subr.mxu0 0.0
    %1608 = vmatpush1.xpose.msra.mxu0 %v1591
    %1609 = vmatprep.subr.mxu0 0.0
    %1610 = vmatpush1.xpose.msra.mxu0 %v1593
    %1611 = vmatprep.subr.mxu0 0.0
    %1612 = vmatpush1.xpose.msra.mxu0 %v1595
    %1613 = vmatprep.subr.mxu0 0.0
    %1614 = vmatpush1.xpose.msra.mxu0 %v1597
    %1615 = vmatprep.subr.mxu0 0.0
    %1616 = vmatpush1.xpose.msra.mxu0 %v1599
    %1617 = vmatprep.subr.mxu0 0.0
    %1618 = vmatpush1.xpose.msra.mxu0 0.0
    %1619 = vmatprep.subr.mxu0 0.0
    %1620 = vmatpush1.xpose.msra.mxu0 0.0
    %1621 = vmatprep.subr.mxu0 0.0
    %1622 = vmatpush1.xpose.msra.mxu0 0.0
    %1623 = vmatprep.subr.mxu0 0.0
    %1624 = vmatpush1.xpose.msra.mxu0 0.0
    %1625 = vmatprep.subr.mxu0 0.0
    %1626 = vmatpush1.xpose.msra.mxu0 0.0
    %1627 = vmatprep.subr.mxu0 0.0
    %1628 = vmatpush1.xpose.msra.mxu0 0.0
    %1629 = vmatprep.subr.mxu0 0.0
    %1630 = vmatpush1.xpose.msra.mxu0 0.0
    %1631 = vmatprep.subr.mxu0 0.0
    %1632 = vmatpush1.xpose.msra.mxu0 0.0
    %1633 = vmatprep.subr.mxu0 0.0
    %1634 = vmatpush1.xpose.msra.mxu0 0.0
    %1635 = vmatprep.subr.mxu0 0.0
    %1636 = vmatpush1.xpose.msra.mxu0 0.0
    %1637 = vmatprep.subr.mxu0 0.0
    %1638 = vmatpush1.xpose.msra.mxu0 0.0
    %1639 = vmatprep.subr.mxu0 0.0
    %1640 = vmatpush1.xpose.msra.mxu0 0.0
    %1641 = vmatprep.subr.mxu0 0.0
    %1642 = vmatpush1.xpose.msra.mxu0 0.0
    %1643 = vmatprep.subr.mxu0 0.0
    %1644 = vmatpush1.xpose.msra.mxu0 0.0
    %1645 = vmatprep.subr.mxu0 0.0
    %1646 = vmatpush1.xpose.msra.mxu0 0.0
    %1647 = vmatprep.subr.mxu0 0.0
    %1648 = vmatpush1.xpose.msra.mxu0 0.0
    %1649 = vmatprep.subr.mxu0 0.0
    %1650 = vmatpush1.xpose.msra.mxu0 0.0
    %1651 = vmatprep.subr.mxu0 0.0
    %1652 = vmatpush1.xpose.msra.mxu0 0.0
    %1653 = vmatprep.subr.mxu0 0.0
    %1654 = vmatpush1.xpose.msra.mxu0 0.0
    %1655 = vmatprep.subr.mxu0 0.0
    %1656 = vmatpush1.xpose.msra.mxu0 0.0
    %1657 = vmatprep.subr.mxu0 0.0
    %1658 = vmatpush1.xpose.msra.mxu0 0.0
    %1659 = vmatprep.subr.mxu0 0.0
    %1660 = vmatpush1.xpose.msra.mxu0 0.0
    %1661 = vmatprep.subr.mxu0 0.0
    %1662 = vmatpush1.xpose.msra.mxu0 0.0
    %1663 = vmatprep.subr.mxu0 0.0
    %1664 = vmatpush1.xpose.msra.mxu0 0.0
    %1665 = vmatprep.mubr.f32.mxu0 0.0
    %1666 = vmatmul.mubr.f32.gmra.mrb[0].mxu0 %v1569
    %v1667 = vpop.f32.mrb[0].mxu0
    %v1668 = vadd.f32 %v59, %v1667
    %v1669 = vpop.f32.mrb[0].mxu0
    %1670 = vmatprep.mubr.f32.mxu0 0.0
    %1671 = vmatmul.mubr.f32.gmra.mrb[0].mxu0 %v1571
    %v1672 = vpop.f32.mrb[0].mxu0
    %v1673 = vadd.f32 %v60, %v1672
    %v1674 = vpop.f32.mrb[0].mxu0
    %1675 = vmatprep.mubr.f32.mxu0 0.0
    %1676 = vmatmul.mubr.f32.gmra.mrb[0].mxu0 %v1573
    %v1677 = vpop.f32.mrb[0].mxu0
    %v1678 = vadd.f32 %v61, %v1677
    %v1679 = vpop.f32.mrb[0].mxu0
    %1680 = vmatprep.mubr.f32.mxu0 0.0
    %1681 = vmatmul.mubr.f32.gmra.mrb[0].mxu0 %v1575
    %v1682 = vpop.f32.mrb[0].mxu0
    %v1683 = vadd.f32 %v62, %v1682
    %v1684 = vpop.f32.mrb[0].mxu0
    %1685 = vmatprep.mubr.f32.mxu0 0.0
    %1686 = vmatmul.mubr.f32.gmra.mrb[0].mxu0 %v1577
    %v1687 = vpop.f32.mrb[0].mxu0
    %v1688 = vadd.f32 %v63, %v1687
    %v1689 = vpop.f32.mrb[0].mxu0
    %1690 = vmatprep.mubr.f32.mxu0 0.0
    %1691 = vmatmul.mubr.f32.gmra.mrb[0].mxu0 %v1579
    %v1692 = vpop.f32.mrb[0].mxu0
    %v1693 = vadd.f32 %v64, %v1692
    %v1694 = vpop.f32.mrb[0].mxu0
    %1695 = vmatprep.mubr.f32.mxu0 0.0
    %1696 = vmatmul.mubr.f32.gmra.mrb[0].mxu0 %v1581
    %v1697 = vpop.f32.mrb[0].mxu0
    %v1698 = vadd.f32 %v65, %v1697
    %v1699 = vpop.f32.mrb[0].mxu0
    %1700 = vmatprep.mubr.f32.mxu0 0.0
    %1701 = vmatmul.mubr.f32.gmra.mrb[0].mxu0 %v1583
    %v1702 = vpop.f32.mrb[0].mxu0
    %v1703 = vadd.f32 %v66, %v1702
    %v1704 = vpop.f32.mrb[0].mxu0
    %1705 = vdwg.mxu0
    %v1706 = vsel %vm569, %v1668, -inf
    %1707 = vmax.xlane.f32.xlu0 %v1706
    %v1708 = vpop.xlane.xlu0 %1707
    %v1709 = vsel %vm569, %v1673, -inf
    %1710 = vmax.xlane.f32.xlu0 %v1709
    %v1711 = vpop.xlane.xlu0 %1710
    %v1712 = vsel %vm569, %v1678, -inf
    %1713 = vmax.xlane.f32.xlu0 %v1712
    %v1714 = vpop.xlane.xlu0 %1713
    %v1715 = vsel %vm569, %v1683, -inf
    %1716 = vmax.xlane.f32.xlu0 %v1715
    %v1717 = vpop.xlane.xlu0 %1716
    %v1718 = vsel %vm569, %v1688, -inf
    %1719 = vmax.xlane.f32.xlu0 %v1718
    %v1720 = vpop.xlane.xlu0 %1719
    %v1721 = vsel %vm569, %v1693, -inf
    %1722 = vmax.xlane.f32.xlu0 %v1721
    %v1723 = vpop.xlane.xlu0 %1722
    %v1724 = vsel %vm569, %v1698, -inf
    %1725 = vmax.xlane.f32.xlu0 %v1724
    %v1726 = vpop.xlane.xlu0 %1725
    %v1727 = vsel %vm569, %v1703, -inf
    %1728 = vmax.xlane.f32.xlu0 %v1727
    %v1729 = vpop.xlane.xlu0 %1728
    %v1730 = vsub.f32 %v1668, %v1708
    %v1731 = vsub.f32 %v1673, %v1711
    %v1732 = vsub.f32 %v1678, %v1714
    %v1733 = vsub.f32 %v1683, %v1717
    %v1734 = vsub.f32 %v1688, %v1720
    %v1735 = vsub.f32 %v1693, %v1723
    %v1736 = vsub.f32 %v1698, %v1726
    %v1737 = vsub.f32 %v1703, %v1729
    %v1738 = vmul.f32 %v1730, 1.442695
    %v1739 = vpow.pop %v1738
    %v1740 = vmul.f32 %v1731, 1.442695
    %v1741 = vpow.pop %v1740
    %v1742 = vmul.f32 %v1732, 1.442695
    %v1743 = vpow.pop %v1742
    %v1744 = vmul.f32 %v1733, 1.442695
    %v1745 = vpow.pop %v1744
    %v1746 = vmul.f32 %v1734, 1.442695
    %v1747 = vpow.pop %v1746
    %v1748 = vmul.f32 %v1735, 1.442695
    %v1749 = vpow.pop %v1748
    %v1750 = vmul.f32 %v1736, 1.442695
    %v1751 = vpow.pop %v1750
    %v1752 = vmul.f32 %v1737, 1.442695
    %v1753 = vpow.pop %v1752
    %v1754 = vsel %vm569, %v1739, 0.0
    %1755 = vadd.xlane.f32.xlu0 %v1754
    %v1756 = vpop.xlane.xlu0 %1755
    %v1757 = vsel %vm569, %v1741, 0.0
    %1758 = vadd.xlane.f32.xlu0 %v1757
    %v1759 = vpop.xlane.xlu0 %1758
    %v1760 = vsel %vm569, %v1743, 0.0
    %1761 = vadd.xlane.f32.xlu0 %v1760
    %v1762 = vpop.xlane.xlu0 %1761
    %v1763 = vsel %vm569, %v1745, 0.0
    %1764 = vadd.xlane.f32.xlu0 %v1763
    %v1765 = vpop.xlane.xlu0 %1764
    %v1766 = vsel %vm569, %v1747, 0.0
    %1767 = vadd.xlane.f32.xlu0 %v1766
    %v1768 = vpop.xlane.xlu0 %1767
    %v1769 = vsel %vm569, %v1749, 0.0
    %1770 = vadd.xlane.f32.xlu0 %v1769
    %v1771 = vpop.xlane.xlu0 %1770
    %v1772 = vsel %vm569, %v1751, 0.0
    %1773 = vadd.xlane.f32.xlu0 %v1772
    %v1774 = vpop.xlane.xlu0 %1773
    %v1775 = vsel %vm569, %v1753, 0.0
    %1776 = vadd.xlane.f32.xlu0 %v1775
    %v1777 = vpop.xlane.xlu0 %1776
    %v1778 = vrcp.pop %v1756
    %v1779 = vmul.f32 %v1739, %v1778
    %v1780 = vrcp.pop %v1759
    %v1781 = vmul.f32 %v1741, %v1780
    %v1782 = vrcp.pop %v1762
    %v1783 = vmul.f32 %v1743, %v1782
    %v1784 = vrcp.pop %v1765
    %v1785 = vmul.f32 %v1745, %v1784
    %v1786 = vrcp.pop %v1768
    %v1787 = vmul.f32 %v1747, %v1786
    %v1788 = vrcp.pop %v1771
    %v1789 = vmul.f32 %v1749, %v1788
    %v1790 = vrcp.pop %v1774
    %v1791 = vmul.f32 %v1751, %v1790
    %v1792 = vrcp.pop %v1777
    %v1793 = vmul.f32 %v1753, %v1792
    %v1795 = vsel %vm569, %v1779, 0
    %v1798 = vsel %vm569, %v1781, 0
    %v1801 = vsel %vm569, %v1783, 0
    %v1804 = vsel %vm569, %v1785, 0
    %v1807 = vsel %vm569, %v1787, 0
    %v1810 = vsel %vm569, %v1789, 0
    %v1813 = vsel %vm569, %v1791, 0
    %v1816 = vsel %vm569, %v1793, 0
    %1818 = vmatprep.subr.mxu0 0.0
    %1819 = vmatpush1.msra.mxu0 %v1513
    %1820 = vmatprep.subr.mxu0 0.0
    %1821 = vmatpush1.msra.mxu0 %v1518
    %1822 = vmatprep.subr.mxu0 0.0
    %1823 = vmatpush1.msra.mxu0 %v1552
    %1824 = vmatprep.subr.mxu0 0.0
    %1825 = vmatpush1.msra.mxu0 %v1554
    %1826 = vmatprep.subr.mxu0 0.0
    %1827 = vmatpush1.msra.mxu0 %v1558
    %1828 = vmatprep.subr.mxu0 0.0
    %1829 = vmatpush1.msra.mxu0 %v1560
    %1830 = vmatprep.subr.mxu0 0.0
    %1831 = vmatpush1.msra.mxu0 %v1564
    %1832 = vmatprep.subr.mxu0 0.0
    %1833 = vmatpush1.msra.mxu0 %v1566
    %1834 = vmatprep.subr.mxu0 0.0
    %1835 = vmatpush1.msra.mxu0 0.0
    %1836 = vmatprep.subr.mxu0 0.0
    %1837 = vmatpush1.msra.mxu0 0.0
    %1838 = vmatprep.subr.mxu0 0.0
    %1839 = vmatpush1.msra.mxu0 0.0
    %1840 = vmatprep.subr.mxu0 0.0
    %1841 = vmatpush1.msra.mxu0 0.0
    %1842 = vmatprep.subr.mxu0 0.0
    %1843 = vmatpush1.msra.mxu0 0.0
    %1844 = vmatprep.subr.mxu0 0.0
    %1845 = vmatpush1.msra.mxu0 0.0
    %1846 = vmatprep.subr.mxu0 0.0
    %1847 = vmatpush1.msra.mxu0 0.0
    %1848 = vmatprep.subr.mxu0 0.0
    %1849 = vmatpush1.msra.mxu0 0.0
    %1850 = vmatprep.subr.mxu0 0.0
    %1851 = vmatpush1.msra.mxu0 0.0
    %1852 = vmatprep.subr.mxu0 0.0
    %1853 = vmatpush1.msra.mxu0 0.0
    %1854 = vmatprep.subr.mxu0 0.0
    %1855 = vmatpush1.msra.mxu0 0.0
    %1856 = vmatprep.subr.mxu0 0.0
    %1857 = vmatpush1.msra.mxu0 0.0
    %1858 = vmatprep.subr.mxu0 0.0
    %1859 = vmatpush1.msra.mxu0 0.0
    %1860 = vmatprep.subr.mxu0 0.0
    %1861 = vmatpush1.msra.mxu0 0.0
    %1862 = vmatprep.subr.mxu0 0.0
    %1863 = vmatpush1.msra.mxu0 0.0
    %1864 = vmatprep.subr.mxu0 0.0
    %1865 = vmatpush1.msra.mxu0 0.0
    %1866 = vmatprep.subr.mxu0 0.0
    %1867 = vmatpush1.msra.mxu0 0.0
    %1868 = vmatprep.subr.mxu0 0.0
    %1869 = vmatpush1.msra.mxu0 0.0
    %1870 = vmatprep.subr.mxu0 0.0
    %1871 = vmatpush1.msra.mxu0 0.0
    %1872 = vmatprep.subr.mxu0 0.0
    %1873 = vmatpush1.msra.mxu0 0.0
    %1874 = vmatprep.subr.mxu0 0.0
    %1875 = vmatpush1.msra.mxu0 0.0
    %1876 = vmatprep.subr.mxu0 0.0
    %1877 = vmatpush1.msra.mxu0 0.0
    %1878 = vmatprep.subr.mxu0 0.0
    %1879 = vmatpush1.msra.mxu0 0.0
    %1880 = vmatprep.subr.mxu0 0.0
    %1881 = vmatpush1.msra.mxu0 0.0
    %1882 = vmatprep.mubr.f32.mxu0 0.0
    %1883 = vmatmul.mubr.f32.gmra.mrb[0].mxu0 %v1795
    %v1884 = vpop.f32.mrb[0].mxu0
    %v1885 = vadd.f32 0.0, %v1884
    %v1886 = vpop.f32.mrb[0].mxu0
    %1887 = vmatprep.mubr.f32.mxu0 0.0
    %1888 = vmatmul.mubr.f32.gmra.mrb[0].mxu0 %v1798
    %v1889 = vpop.f32.mrb[0].mxu0
    %v1890 = vadd.f32 0.0, %v1889
    %v1891 = vpop.f32.mrb[0].mxu0
    %1892 = vmatprep.mubr.f32.mxu0 0.0
    %1893 = vmatmul.mubr.f32.gmra.mrb[0].mxu0 %v1801
    %v1894 = vpop.f32.mrb[0].mxu0
    %v1895 = vadd.f32 0.0, %v1894
    %v1896 = vpop.f32.mrb[0].mxu0
    %1897 = vmatprep.mubr.f32.mxu0 0.0
    %1898 = vmatmul.mubr.f32.gmra.mrb[0].mxu0 %v1804
    %v1899 = vpop.f32.mrb[0].mxu0
    %v1900 = vadd.f32 0.0, %v1899
    %v1901 = vpop.f32.mrb[0].mxu0
    %1902 = vmatprep.mubr.f32.mxu0 0.0
    %1903 = vmatmul.mubr.f32.gmra.mrb[0].mxu0 %v1807
    %v1904 = vpop.f32.mrb[0].mxu0
    %v1905 = vadd.f32 0.0, %v1904
    %v1906 = vpop.f32.mrb[0].mxu0
    %1907 = vmatprep.mubr.f32.mxu0 0.0
    %1908 = vmatmul.mubr.f32.gmra.mrb[0].mxu0 %v1810
    %v1909 = vpop.f32.mrb[0].mxu0
    %v1910 = vadd.f32 0.0, %v1909
    %v1911 = vpop.f32.mrb[0].mxu0
    %1912 = vmatprep.mubr.f32.mxu0 0.0
    %1913 = vmatmul.mubr.f32.gmra.mrb[0].mxu0 %v1813
    %v1914 = vpop.f32.mrb[0].mxu0
    %v1915 = vadd.f32 0.0, %v1914
    %v1916 = vpop.f32.mrb[0].mxu0
    %1917 = vmatprep.mubr.f32.mxu0 0.0
    %1918 = vmatmul.mubr.f32.gmra.mrb[0].mxu0 %v1816
    %v1919 = vpop.f32.mrb[0].mxu0
    %v1920 = vadd.f32 0.0, %v1919
    %v1921 = vpop.f32.mrb[0].mxu0
    %1922 = vdwg.mxu0
    %1925 = vrot.lane.b32.xlu0 %v1895, 8
    %v1926 = vpop.permute.xlu0 %1925
    %1927 = vrot.lane.b32.xlu0 %v1900, 8
    %v1928 = vpop.permute.xlu0 %1927
    %1933 = vrot.lane.b32.xlu0 %v1905, 16
    %v1934 = vpop.permute.xlu0 %1933
    %1935 = vrot.lane.b32.xlu0 %v1910, 16
    %v1936 = vpop.permute.xlu0 %1935
    %1941 = vrot.lane.b32.xlu0 %v1915, 24
    %v1942 = vpop.permute.xlu0 %1941
    %1943 = vrot.lane.b32.xlu0 %v1920, 24
    %v1944 = vpop.permute.xlu0 %1943
    %v1947 = vsel %vm431, %v1885, %v1926
    %v1948 = vsel %vm431, %v1890, %v1928
    %v1949 = vsel %vm813, %v1947, %v1934
    %v1950 = vsel %vm813, %v1948, %v1936
    %v1951 = vsel %vm816, %v1949, %v1942
    %v1952 = vsel %vm816, %v1950, %v1944
    %s1953 = scalar_lea.vmem %s6, 32
    %v1954 = vld [vmem:[%s1953] sm:$0xff]
    %v1955 = vld [vmem:[%s1953 + $0x8] sm:$0xff]
    %v1956 = vld [vmem:[%s1953 + $0x10] sm:$0xff]
    %v1957 = vld [vmem:[%s1953 + $0x18] sm:$0xff]
    %s1958 = scalar_lea.vmem %s7, 1
    %v1959 = vld [vmem:[%s1958] sm:$0x1]
    %v1961 = vlaneseq
    %v1962 = vshrl.u32 %v1961, 7
    %v1963 = vsub.s32 0, %v1962
    %v1964 = vrot.slane %v1959, %v1963
    %v1967 = vsel %vm69, %v1951, 0
    %v1970 = vsel %vm69, %v1952, 0
    %1972 = vmatprep.subr.mxu0 0.0
    %1973 = vmatpush1.msra.mxu0 %v1954
    %1974 = vmatprep.subr.mxu0 0.0
    %1975 = vmatpush1.msra.mxu0 %v1955
    %1976 = vmatprep.subr.mxu0 0.0
    %1977 = vmatpush1.msra.mxu0 %v1956
    %1978 = vmatprep.subr.mxu0 0.0
    %1979 = vmatpush1.msra.mxu0 %v1957
    %1980 = vmatprep.subr.mxu0 0.0
    %1981 = vmatpush1.msra.mxu0 0.0
    %1982 = vmatprep.subr.mxu0 0.0
    %1983 = vmatpush1.msra.mxu0 0.0
    %1984 = vmatprep.subr.mxu0 0.0
    %1985 = vmatpush1.msra.mxu0 0.0
    %1986 = vmatprep.subr.mxu0 0.0
    %1987 = vmatpush1.msra.mxu0 0.0
    %1988 = vmatprep.subr.mxu0 0.0
    %1989 = vmatpush1.msra.mxu0 0.0
    %1990 = vmatprep.subr.mxu0 0.0
    %1991 = vmatpush1.msra.mxu0 0.0
    %1992 = vmatprep.subr.mxu0 0.0
    %1993 = vmatpush1.msra.mxu0 0.0
    %1994 = vmatprep.subr.mxu0 0.0
    %1995 = vmatpush1.msra.mxu0 0.0
    %1996 = vmatprep.subr.mxu0 0.0
    %1997 = vmatpush1.msra.mxu0 0.0
    %1998 = vmatprep.subr.mxu0 0.0
    %1999 = vmatpush1.msra.mxu0 0.0
    %2000 = vmatprep.subr.mxu0 0.0
    %2001 = vmatpush1.msra.mxu0 0.0
    %2002 = vmatprep.subr.mxu0 0.0
    %2003 = vmatpush1.msra.mxu0 0.0
    %2004 = vmatprep.subr.mxu0 0.0
    %2005 = vmatpush1.msra.mxu0 0.0
    %2006 = vmatprep.subr.mxu0 0.0
    %2007 = vmatpush1.msra.mxu0 0.0
    %2008 = vmatprep.subr.mxu0 0.0
    %2009 = vmatpush1.msra.mxu0 0.0
    %2010 = vmatprep.subr.mxu0 0.0
    %2011 = vmatpush1.msra.mxu0 0.0
    %2012 = vmatprep.subr.mxu0 0.0
    %2013 = vmatpush1.msra.mxu0 0.0
    %2014 = vmatprep.subr.mxu0 0.0
    %2015 = vmatpush1.msra.mxu0 0.0
    %2016 = vmatprep.subr.mxu0 0.0
    %2017 = vmatpush1.msra.mxu0 0.0
    %2018 = vmatprep.subr.mxu0 0.0
    %2019 = vmatpush1.msra.mxu0 0.0
    %2020 = vmatprep.subr.mxu0 0.0
    %2021 = vmatpush1.msra.mxu0 0.0
    %2022 = vmatprep.subr.mxu0 0.0
    %2023 = vmatpush1.msra.mxu0 0.0
    %2024 = vmatprep.subr.mxu0 0.0
    %2025 = vmatpush1.msra.mxu0 0.0
    %2026 = vmatprep.subr.mxu0 0.0
    %2027 = vmatpush1.msra.mxu0 0.0
    %2028 = vmatprep.subr.mxu0 0.0
    %2029 = vmatpush1.msra.mxu0 0.0
    %2030 = vmatprep.subr.mxu0 0.0
    %2031 = vmatpush1.msra.mxu0 0.0
    %2032 = vmatprep.subr.mxu0 0.0
    %2033 = vmatpush1.msra.mxu0 0.0
    %2034 = vmatprep.subr.mxu0 0.0
    %2035 = vmatpush1.msra.mxu0 0.0
    %2036 = vmatprep.mubr.f32.mxu0 0.0
    %2037 = vmatmul.mubr.f32.gmra.mrb[0].mxu0 %v1967
    %v2038 = vpop.f32.mrb[0].mxu0
    %v2039 = vadd.f32 %v1964, %v2038
    %v2040 = vpop.f32.mrb[0].mxu0
    %2041 = vmatprep.mubr.f32.mxu0 0.0
    %2042 = vmatmul.mubr.f32.gmra.mrb[0].mxu0 %v1970
    %v2043 = vpop.f32.mrb[0].mxu0
    %v2044 = vadd.f32 %v1964, %v2043
    %v2045 = vpop.f32.mrb[0].mxu0
    %2046 = vdwg.mxu0
    %v2047 = vadd.f32 %v1201, %v2039
    %v2048 = vadd.f32 %v1202, %v2044
    %s2049 = scalar_lea.vmem %s8, 1
    %v2050 = vld [vmem:[%s2049] sm:$0x1]
    %s2051 = scalar_lea.vmem %s9, 1
    %v2052 = vld [vmem:[%s2051] sm:$0x1]
    %v2053 = vsel %vm69, %v2047, 0.0
    %2054 = vadd.xlane.f32.xlu0 %v2053
    %v2055 = vpop.xlane.xlu0 %2054
    %v2056 = vsel %vm69, %v2048, 0.0
    %2057 = vadd.xlane.f32.xlu0 %v2056
    %v2058 = vpop.xlane.xlu0 %2057
    %v2059 = vmul.f32 %v2055, %v76
    %v2060 = vmul.f32 %v2058, %v76
    %v2061 = vsub.f32 %v2047, %v2059
    %v2062 = vsub.f32 %v2048, %v2060
    %v2063 = vmul.f32 %v2061, %v2061
    %v2064 = vmul.f32 %v2062, %v2062
    %v2065 = vsel %vm69, %v2063, 0.0
    %2066 = vadd.xlane.f32.xlu0 %v2065
    %v2067 = vpop.xlane.xlu0 %2066
    %v2068 = vsel %vm69, %v2064, 0.0
    %2069 = vadd.xlane.f32.xlu0 %v2068
    %v2070 = vpop.xlane.xlu0 %2069
    %v2071 = vmul.f32 %v2067, %v76
    %v2072 = vmul.f32 %v2070, %v76
    %v2073 = vadd.f32 %v2071, 1e-05
    %v2074 = vadd.f32 %v2072, 1e-05
    %v2075 = vrsqrt.pop %v2073
    %v2076 = vrsqrt.pop %v2074
    %v2077 = vmul.f32 %v2061, %v2075
    %v2078 = vmul.f32 %v2062, %v2076
    %v2080 = vlaneseq
    %v2081 = vshrl.u32 %v2080, 7
    %v2082 = vsub.s32 0, %v2081
    %v2083 = vrot.slane %v2050, %v2082
    %v2085 = vmul.f32 %v2077, %v2083
    %v2086 = vmul.f32 %v2078, %v2083
    %v2088 = vlaneseq
    %v2089 = vshrl.u32 %v2088, 7
    %v2090 = vsub.s32 0, %v2089
    %v2091 = vrot.slane %v2052, %v2090
    %v2093 = vadd.f32 %v2085, %v2091
    %v2094 = vadd.f32 %v2086, %v2091
    %s2095 = scalar_lea.vmem %s10, 32
    %v2096 = vld [vmem:[%s2095] sm:$0xff]
    %v2097 = vld [vmem:[%s2095 + $0x8] sm:$0xff]
    %v2098 = vld [vmem:[%s2095 + $0x10] sm:$0xff]
    %v2099 = vld [vmem:[%s2095 + $0x18] sm:$0xff]
    %s2100 = scalar_lea.vmem %s11, 1
    %v2101 = vld [vmem:[%s2100] sm:$0x1]
    %v2103 = vlaneseq
    %v2104 = vshrl.u32 %v2103, 7
    %v2105 = vsub.s32 0, %v2104
    %v2106 = vrot.slane %v2101, %v2105
    %v2109 = vsel %vm69, %v2093, 0
    %v2112 = vsel %vm69, %v2094, 0
    %2114 = vmatprep.subr.mxu0 0.0
    %2115 = vmatpush1.msra.mxu0 %v2096
    %2116 = vmatprep.subr.mxu0 0.0
    %2117 = vmatpush1.msra.mxu0 %v2097
    %2118 = vmatprep.subr.mxu0 0.0
    %2119 = vmatpush1.msra.mxu0 %v2098
    %2120 = vmatprep.subr.mxu0 0.0
    %2121 = vmatpush1.msra.mxu0 %v2099
    %2122 = vmatprep.subr.mxu0 0.0
    %2123 = vmatpush1.msra.mxu0 0.0
    %2124 = vmatprep.subr.mxu0 0.0
    %2125 = vmatpush1.msra.mxu0 0.0
    %2126 = vmatprep.subr.mxu0 0.0
    %2127 = vmatpush1.msra.mxu0 0.0
    %2128 = vmatprep.subr.mxu0 0.0
    %2129 = vmatpush1.msra.mxu0 0.0
    %2130 = vmatprep.subr.mxu0 0.0
    %2131 = vmatpush1.msra.mxu0 0.0
    %2132 = vmatprep.subr.mxu0 0.0
    %2133 = vmatpush1.msra.mxu0 0.0
    %2134 = vmatprep.subr.mxu0 0.0
    %2135 = vmatpush1.msra.mxu0 0.0
    %2136 = vmatprep.subr.mxu0 0.0
    %2137 = vmatpush1.msra.mxu0 0.0
    %2138 = vmatprep.subr.mxu0 0.0
    %2139 = vmatpush1.msra.mxu0 0.0
    %2140 = vmatprep.subr.mxu0 0.0
    %2141 = vmatpush1.msra.mxu0 0.0
    %2142 = vmatprep.subr.mxu0 0.0
    %2143 = vmatpush1.msra.mxu0 0.0
    %2144 = vmatprep.subr.mxu0 0.0
    %2145 = vmatpush1.msra.mxu0 0.0
    %2146 = vmatprep.subr.mxu0 0.0
    %2147 = vmatpush1.msra.mxu0 0.0
    %2148 = vmatprep.subr.mxu0 0.0
    %2149 = vmatpush1.msra.mxu0 0.0
    %2150 = vmatprep.subr.mxu0 0.0
    %2151 = vmatpush1.msra.mxu0 0.0
    %2152 = vmatprep.subr.mxu0 0.0
    %2153 = vmatpush1.msra.mxu0 0.0
    %2154 = vmatprep.subr.mxu0 0.0
    %2155 = vmatpush1.msra.mxu0 0.0
    %2156 = vmatprep.subr.mxu0 0.0
    %2157 = vmatpush1.msra.mxu0 0.0
    %2158 = vmatprep.subr.mxu0 0.0
    %2159 = vmatpush1.msra.mxu0 0.0
    %2160 = vmatprep.subr.mxu0 0.0
    %2161 = vmatpush1.msra.mxu0 0.0
    %2162 = vmatprep.subr.mxu0 0.0
    %2163 = vmatpush1.msra.mxu0 0.0
    %2164 = vmatprep.subr.mxu0 0.0
    %2165 = vmatpush1.msra.mxu0 0.0
    %2166 = vmatprep.subr.mxu0 0.0
    %2167 = vmatpush1.msra.mxu0 0.0
    %2168 = vmatprep.subr.mxu0 0.0
    %2169 = vmatpush1.msra.mxu0 0.0
    %2170 = vmatprep.subr.mxu0 0.0
    %2171 = vmatpush1.msra.mxu0 0.0
    %2172 = vmatprep.subr.mxu0 0.0
    %2173 = vmatpush1.msra.mxu0 0.0
    %2174 = vmatprep.subr.mxu0 0.0
    %2175 = vmatpush1.msra.mxu0 0.0
    %2176 = vmatprep.subr.mxu0 0.0
    %2177 = vmatpush1.msra.mxu0 0.0
    %2178 = vmatprep.mubr.f32.mxu0 0.0
    %2179 = vmatmul.mubr.f32.gmra.mrb[0].mxu0 %v2109
    %v2180 = vpop.f32.mrb[0].mxu0
    %v2181 = vadd.f32 %v2106, %v2180
    %v2182 = vpop.f32.mrb[0].mxu0
    %2183 = vmatprep.mubr.f32.mxu0 0.0
    %2184 = vmatmul.mubr.f32.gmra.mrb[0].mxu0 %v2112
    %v2185 = vpop.f32.mrb[0].mxu0
    %v2186 = vadd.f32 %v2106, %v2185
    %v2187 = vpop.f32.mrb[0].mxu0
    %2188 = vdwg.mxu0
    %v2189 = vmul.f32 %v2181, 0.5
    %v2190 = vmul.f32 %v2186, 0.5
    %v2191 = vmul.f32 %v2181, 0.70710677
    %v2192 = vmul.f32 %v2186, 0.70710677
    %v2193 = vand.u32 2147483647, %v2191
    %v2194 = vand.u32 2147483647, %v2192
    %v2195 = vmul.f32 %v2193, 0.3275911
    %v2196 = vmul.f32 %v2194, 0.3275911
    %v2197 = vadd.f32 %v2195, 1.0
    %v2198 = vadd.f32 %v2196, 1.0
    %v2199 = vrcp.pop %v2197
    %v2200 = vmul.f32 1.0, %v2199
    %v2201 = vrcp.pop %v2198
    %v2202 = vmul.f32 1.0, %v2201
    %v2203 = vmul.f32 %v2200, 1.0614054
    %v2204 = vmul.f32 %v2202, 1.0614054
    %v2205 = vadd.f32 %v2203, -1.4531521
    %v2206 = vadd.f32 %v2204, -1.4531521
    %v2207 = vmul.f32 %v2205, %v2200
    %v2208 = vmul.f32 %v2206, %v2202
    %v2209 = vadd.f32 %v2207, 1.4214138
    %v2210 = vadd.f32 %v2208, 1.4214138
    %v2211 = vmul.f32 %v2209, %v2200
    %v2212 = vmul.f32 %v2210, %v2202
    %v2213 = vadd.f32 %v2211, -0.28449672
    %v2214 = vadd.f32 %v2212, -0.28449672
    %v2215 = vmul.f32 %v2213, %v2200
    %v2216 = vmul.f32 %v2214, %v2202
    %v2217 = vadd.f32 %v2215, 0.2548296
    %v2218 = vadd.f32 %v2216, 0.2548296
    %v2219 = vmul.f32 %v2217, %v2200
    %v2220 = vmul.f32 %v2218, %v2202
    %v2221 = vsub.f32 0.0, %v2193
    %v2222 = vsub.f32 0.0, %v2194
    %v2223 = vmul.f32 %v2221, %v2193
    %v2224 = vmul.f32 %v2222, %v2194
    %v2225 = vmul.f32 %v2223, 1.442695
    %v2226 = vpow.pop %v2225
    %v2227 = vmul.f32 %v2224, 1.442695
    %v2228 = vpow.pop %v2227
    %v2229 = vmul.f32 %v2219, %v2226
    %v2230 = vmul.f32 %v2220, %v2228
    %v2231 = vsub.f32 1.0, %v2229
    %v2232 = vsub.f32 1.0, %v2230
    %vm2233 = vcmp.ge.f32.partialorder %v2191, 0.0
    %vm2234 = vcmp.ge.f32.partialorder %v2192, 0.0
    %v2235 = vsub.f32 0.0, %v2231
    %v2236 = vsub.f32 0.0, %v2232
    %v2237 = vsel %vm2233, %v2231, %v2235
    %v2238 = vsel %vm2234, %v2232, %v2236
    %v2239 = vadd.f32 %v2237, 1.0
    %v2240 = vadd.f32 %v2238, 1.0
    %v2241 = vmul.f32 %v2189, %v2239
    %v2242 = vmul.f32 %v2190, %v2240
    %s2243 = scalar_lea.vmem %s12, 128
    %v2244 = vld [vmem:[%s2243] sm:$0xff]
    %v2245 = vld [vmem:[%s2243 + $0x8] sm:$0xff]
    %v2246 = vld [vmem:[%s2243 + $0x10] sm:$0xff]
    %v2247 = vld [vmem:[%s2243 + $0x18] sm:$0xff]
    %v2248 = vld [vmem:[%s2243 + $0x20] sm:$0xff]
    %v2249 = vld [vmem:[%s2243 + $0x28] sm:$0xff]
    %v2250 = vld [vmem:[%s2243 + $0x30] sm:$0xff]
    %v2251 = vld [vmem:[%s2243 + $0x38] sm:$0xff]
    %v2252 = vld [vmem:[%s2243 + $0x40] sm:$0xff]
    %v2253 = vld [vmem:[%s2243 + $0x48] sm:$0xff]
    %v2254 = vld [vmem:[%s2243 + $0x50] sm:$0xff]
    %v2255 = vld [vmem:[%s2243 + $0x58] sm:$0xff]
    %v2256 = vld [vmem:[%s2243 + $0x60] sm:$0xff]
    %v2257 = vld [vmem:[%s2243 + $0x68] sm:$0xff]
    %v2258 = vld [vmem:[%s2243 + $0x70] sm:$0xff]
    %v2259 = vld [vmem:[%s2243 + $0x78] sm:$0xff]
    %s2260 = scalar_lea.vmem %s13, 1
    %v2261 = vld [vmem:[%s2260] sm:$0x1]
    %v2263 = vlaneseq
    %v2264 = vshrl.u32 %v2263, 7
    %v2265 = vsub.s32 0, %v2264
    %v2266 = vrot.slane %v2261, %v2265
    %2268 = vmatprep.subr.mxu0 0.0
    %2269 = vmatpush1.msra.mxu0 %v2244
    %2270 = vmatprep.subr.mxu0 0.0
    %2271 = vmatpush1.msra.mxu0 %v2245
    %2272 = vmatprep.subr.mxu0 0.0
    %2273 = vmatpush1.msra.mxu0 %v2246
    %2274 = vmatprep.subr.mxu0 0.0
    %2275 = vmatpush1.msra.mxu0 %v2247
    %2276 = vmatprep.subr.mxu0 0.0
    %2277 = vmatpush1.msra.mxu0 %v2248
    %2278 = vmatprep.subr.mxu0 0.0
    %2279 = vmatpush1.msra.mxu0 %v2249
    %2280 = vmatprep.subr.mxu0 0.0
    %2281 = vmatpush1.msra.mxu0 %v2250
    %2282 = vmatprep.subr.mxu0 0.0
    %2283 = vmatpush1.msra.mxu0 %v2251
    %2284 = vmatprep.subr.mxu0 0.0
    %2285 = vmatpush1.msra.mxu0 %v2252
    %2286 = vmatprep.subr.mxu0 0.0
    %2287 = vmatpush1.msra.mxu0 %v2253
    %2288 = vmatprep.subr.mxu0 0.0
    %2289 = vmatpush1.msra.mxu0 %v2254
    %2290 = vmatprep.subr.mxu0 0.0
    %2291 = vmatpush1.msra.mxu0 %v2255
    %2292 = vmatprep.subr.mxu0 0.0
    %2293 = vmatpush1.msra.mxu0 %v2256
    %2294 = vmatprep.subr.mxu0 0.0
    %2295 = vmatpush1.msra.mxu0 %v2257
    %2296 = vmatprep.subr.mxu0 0.0
    %2297 = vmatpush1.msra.mxu0 %v2258
    %2298 = vmatprep.subr.mxu0 0.0
    %2299 = vmatpush1.msra.mxu0 %v2259
    %2300 = vmatprep.subr.mxu0 0.0
    %2301 = vmatpush1.msra.mxu0 0.0
    %2302 = vmatprep.subr.mxu0 0.0
    %2303 = vmatpush1.msra.mxu0 0.0
    %2304 = vmatprep.subr.mxu0 0.0
    %2305 = vmatpush1.msra.mxu0 0.0
    %2306 = vmatprep.subr.mxu0 0.0
    %2307 = vmatpush1.msra.mxu0 0.0
    %2308 = vmatprep.subr.mxu0 0.0
    %2309 = vmatpush1.msra.mxu0 0.0
    %2310 = vmatprep.subr.mxu0 0.0
    %2311 = vmatpush1.msra.mxu0 0.0
    %2312 = vmatprep.subr.mxu0 0.0
    %2313 = vmatpush1.msra.mxu0 0.0
    %2314 = vmatprep.subr.mxu0 0.0
    %2315 = vmatpush1.msra.mxu0 0.0
    %2316 = vmatprep.subr.mxu0 0.0
    %2317 = vmatpush1.msra.mxu0 0.0
    %2318 = vmatprep.subr.mxu0 0.0
    %2319 = vmatpush1.msra.mxu0 0.0
    %2320 = vmatprep.subr.mxu0 0.0
    %2321 = vmatpush1.msra.mxu0 0.0
    %2322 = vmatprep.subr.mxu0 0.0
    %2323 = vmatpush1.msra.mxu0 0.0
    %2324 = vmatprep.subr.mxu0 0.0
    %2325 = vmatpush1.msra.mxu0 0.0
    %2326 = vmatprep.subr.mxu0 0.0
    %2327 = vmatpush1.msra.mxu0 0.0
    %2328 = vmatprep.subr.mxu0 0.0
    %2329 = vmatpush1.msra.mxu0 0.0
    %2330 = vmatprep.subr.mxu0 0.0
    %2331 = vmatpush1.msra.mxu0 0.0
    %2332 = vmatprep.mubr.f32.mxu0 0.0
    %2333 = vmatmul.mubr.f32.gmra.mrb[0].mxu0 %v2241
    %v2334 = vpop.f32.mrb[0].mxu0
    %v2335 = vadd.f32 %v2266, %v2334
    %v2336 = vpop.f32.mrb[0].mxu0
    %2337 = vmatprep.mubr.f32.mxu0 0.0
    %2338 = vmatmul.mubr.f32.gmra.mrb[0].mxu0 %v2242
    %v2339 = vpop.f32.mrb[0].mxu0
    %v2340 = vadd.f32 %v2266, %v2339
    %v2341 = vpop.f32.mrb[0].mxu0
    %2342 = vdwg.mxu0
    %v2343 = vadd.f32 %v2047, %v2335
    %v2344 = vadd.f32 %v2048, %v2340
    %v2345 = vld [vmem:[%s14] sm:$0x1]
    %v2346 = vld [vmem:[%s15] sm:$0x1]
    %v2347 = vsel %vm69, %v2343, 0.0
    %2348 = vadd.xlane.f32.xlu0 %v2347
    %v2349 = vpop.xlane.xlu0 %2348
    %v2350 = vsel %vm69, %v2344, 0.0
    %2351 = vadd.xlane.f32.xlu0 %v2350
    %v2352 = vpop.xlane.xlu0 %2351
    %v2353 = vmul.f32 %v2349, %v76
    %v2354 = vmul.f32 %v2352, %v76
    %v2355 = vsub.f32 %v2343, %v2353
    %v2356 = vsub.f32 %v2344, %v2354
    %v2357 = vmul.f32 %v2355, %v2355
    %v2358 = vmul.f32 %v2356, %v2356
    %v2359 = vsel %vm69, %v2357, 0.0
    %2360 = vadd.xlane.f32.xlu0 %v2359
    %v2361 = vpop.xlane.xlu0 %2360
    %v2362 = vsel %vm69, %v2358, 0.0
    %2363 = vadd.xlane.f32.xlu0 %v2362
    %v2364 = vpop.xlane.xlu0 %2363
    %v2365 = vmul.f32 %v2361, %v76
    %v2366 = vmul.f32 %v2364, %v76
    %v2367 = vadd.f32 %v2365, 1e-05
    %v2368 = vadd.f32 %v2366, 1e-05
    %v2369 = vrsqrt.pop %v2367
    %v2370 = vrsqrt.pop %v2368
    %v2371 = vmul.f32 %v2355, %v2369
    %v2372 = vmul.f32 %v2356, %v2370
    %v2374 = vlaneseq
    %v2375 = vshrl.u32 %v2374, 7
    %v2376 = vsub.s32 0, %v2375
    %v2377 = vrot.slane %v2345, %v2376
    %v2379 = vmul.f32 %v2371, %v2377
    %v2380 = vmul.f32 %v2372, %v2377
    %v2382 = vlaneseq
    %v2383 = vshrl.u32 %v2382, 7
    %v2384 = vsub.s32 0, %v2383
    %v2385 = vrot.slane %v2346, %v2384
    %v2387 = vadd.f32 %v2379, %v2385
    %v2388 = vadd.f32 %v2380, %v2385
    %v2389 = vld [vmem:[%s16] sm:$0xff]
    %v2390 = vld [vmem:[%s16 + $0x8] sm:$0xff]
    %v2391 = vld [vmem:[%s16 + $0x10] sm:$0xff]
    %v2392 = vld [vmem:[%s16 + $0x18] sm:$0xff]
    %v2394 = vsel %vm69, %v2387, 0
    %v2397 = vsel %vm69, %v2388, 0
    %2399 = vmatprep.subr.mxu0 0.0
    %2400 = vmatpush1.msra.mxu0 %v2389
    %2401 = vmatprep.subr.mxu0 0.0
    %2402 = vmatpush1.msra.mxu0 %v2390
    %2403 = vmatprep.subr.mxu0 0.0
    %2404 = vmatpush1.msra.mxu0 %v2391
    %2405 = vmatprep.subr.mxu0 0.0
    %2406 = vmatpush1.msra.mxu0 %v2392
    %2407 = vmatprep.subr.mxu0 0.0
    %2408 = vmatpush1.msra.mxu0 0.0
    %2409 = vmatprep.subr.mxu0 0.0
    %2410 = vmatpush1.msra.mxu0 0.0
    %2411 = vmatprep.subr.mxu0 0.0
    %2412 = vmatpush1.msra.mxu0 0.0
    %2413 = vmatprep.subr.mxu0 0.0
    %2414 = vmatpush1.msra.mxu0 0.0
    %2415 = vmatprep.subr.mxu0 0.0
    %2416 = vmatpush1.msra.mxu0 0.0
    %2417 = vmatprep.subr.mxu0 0.0
    %2418 = vmatpush1.msra.mxu0 0.0
    %2419 = vmatprep.subr.mxu0 0.0
    %2420 = vmatpush1.msra.mxu0 0.0
    %2421 = vmatprep.subr.mxu0 0.0
    %2422 = vmatpush1.msra.mxu0 0.0
    %2423 = vmatprep.subr.mxu0 0.0
    %2424 = vmatpush1.msra.mxu0 0.0
    %2425 = vmatprep.subr.mxu0 0.0
    %2426 = vmatpush1.msra.mxu0 0.0
    %2427 = vmatprep.subr.mxu0 0.0
    %2428 = vmatpush1.msra.mxu0 0.0
    %2429 = vmatprep.subr.mxu0 0.0
    %2430 = vmatpush1.msra.mxu0 0.0
    %2431 = vmatprep.subr.mxu0 0.0
    %2432 = vmatpush1.msra.mxu0 0.0
    %2433 = vmatprep.subr.mxu0 0.0
    %2434 = vmatpush1.msra.mxu0 0.0
    %2435 = vmatprep.subr.mxu0 0.0
    %2436 = vmatpush1.msra.mxu0 0.0
    %2437 = vmatprep.subr.mxu0 0.0
    %2438 = vmatpush1.msra.mxu0 0.0
    %2439 = vmatprep.subr.mxu0 0.0
    %2440 = vmatpush1.msra.mxu0 0.0
    %2441 = vmatprep.subr.mxu0 0.0
    %2442 = vmatpush1.msra.mxu0 0.0
    %2443 = vmatprep.subr.mxu0 0.0
    %2444 = vmatpush1.msra.mxu0 0.0
    %2445 = vmatprep.subr.mxu0 0.0
    %2446 = vmatpush1.msra.mxu0 0.0
    %2447 = vmatprep.subr.mxu0 0.0
    %2448 = vmatpush1.msra.mxu0 0.0
    %2449 = vmatprep.subr.mxu0 0.0
    %2450 = vmatpush1.msra.mxu0 0.0
    %2451 = vmatprep.subr.mxu0 0.0
    %2452 = vmatpush1.msra.mxu0 0.0
    %2453 = vmatprep.subr.mxu0 0.0
    %2454 = vmatpush1.msra.mxu0 0.0
    %2455 = vmatprep.subr.mxu0 0.0
    %2456 = vmatpush1.msra.mxu0 0.0
    %2457 = vmatprep.subr.mxu0 0.0
    %2458 = vmatpush1.msra.mxu0 0.0
    %2459 = vmatprep.subr.mxu0 0.0
    %2460 = vmatpush1.msra.mxu0 0.0
    %2461 = vmatprep.subr.mxu0 0.0
    %2462 = vmatpush1.msra.mxu0 0.0
    %2463 = vmatprep.mubr.f32.mxu0 0.0
    %2464 = vmatmul.mubr.f32.gmra.mrb[0].mxu0 %v2394
    %v2465 = vpop.f32.mrb[0].mxu0
    %v2466 = vadd.f32 0.0, %v2465
    %v2467 = vpop.f32.mrb[0].mxu0
    %2468 = vmatprep.mubr.f32.mxu0 0.0
    %2469 = vmatmul.mubr.f32.gmra.mrb[0].mxu0 %v2397
    %v2470 = vpop.f32.mrb[0].mxu0
    %v2471 = vadd.f32 0.0, %v2470
    %v2472 = vpop.f32.mrb[0].mxu0
    %2473 = vdwg.mxu0
    %2474 = vst [vmem:[#allocation2] sm:$0xff] %v2466
    %2475 = vst [vmem:[#allocation2 + $0x8] sm:$0xff] %v2471
    // Predicated region
    $region70: #{gpt_forward.1} parent=1 // pred_check
      _
    $region71: #{gpt_forward.1} parent=1 // pred_check_branch
      %2477 = sbr.rel (0) target = $region73
    $region72: #{gpt_forward.1} parent=1 // pred_region
      %s2479 = ssub.s32 256, 256
      %2480 = vsyncadd [#allocation3], %s2479
      %s2481 = sshll.u32 [#allocation2], 4
      %s2482 = int_to_ptr.vmem [resolvable:$true] %s2481
      %2487 = dma.vmem_to_hbm [thread:$0]  %s2482, 256, %s17, [#allocation3], 128, 128, 8
    $region73: #{gpt_forward.1} parent=1 // pred_fallthru
      _
    // Predicated region
    $region74: #{gpt_forward.1} parent=1 // pred_check
      _
    $region75: #{gpt_forward.1} parent=1 // pred_check_branch
      %2489 = sbr.rel (0) target = $region77
    $region76: #{gpt_forward.1} parent=1 // pred_region
      %2490 = dma.done [#allocation3], 256
    $region77: #{gpt_forward.1} parent=1 // pred_fallthru
      _
    %2491 = vsyncpa [#allocation3], 1

</llo_original>
